<compile_context>
chip_gen: v7x
topology: tpu7x:2x2x1
jax: 0.10.0
libtpu: 0.0.40
codegen_flags: <defaults>
</compile_context>

<pallas_src>
import math
from functools import partial

import jax
import jax.numpy as jnp
from jax import lax
from jax.experimental import pallas as pl
from jax.experimental.pallas import tpu as pltpu


_SQRT_2_OVER_PI = math.sqrt(2.0 / math.pi)
_LN_EPS = 1e-6


def _gelu_tanh(x):
    return 0.5 * x * (1.0 + jnp.tanh(_SQRT_2_OVER_PI * (x + 0.044715 * x * x * x)))


def _layernorm(x, gamma, beta):
    mu = jnp.mean(x, axis=-1, keepdims=True)
    xc = x - mu
    var = jnp.mean(xc * xc, axis=-1, keepdims=True)
    return xc * lax.rsqrt(var + _LN_EPS) * gamma + beta


# ---------------------------------------------------------------------------
# Fused Block kernel: one grid step == (batch_block * S, H) rows
# ---------------------------------------------------------------------------

def _block_kernel(num_heads, seq_len,
                  x_ref,
                  ln1_g_ref, ln1_b_ref,
                  wqkv_ref, bqkv_ref,
                  wo_ref, bo_ref,
                  ln2_g_ref, ln2_b_ref,
                  w1_ref, b1_ref, w2_ref, b2_ref,
                  o_ref,
                  qkv_scr, ctx_scr):
    rows, H = x_ref.shape                 # rows = batch_block * seq_len
    S = seq_len
    bb = rows // S
    dh = H // num_heads
    mm = wqkv_ref.dtype                   # MXU operand dtype (f32 or bf16)

    x = x_ref[...].astype(jnp.float32)

    # ---- LN1 + fused QKV projection (1/sqrt(dh) already folded into Wq/bq) ----
    h1 = _layernorm(x, ln1_g_ref[...], ln1_b_ref[...])
    qkv_scr[...] = jnp.dot(h1.astype(mm), wqkv_ref[...],
                           preferred_element_type=jnp.float32) + bqkv_ref[...]

    # ---- per-(batch, head) softmax attention (attn/proj dropout == identity) ----
    # Static unrolled loops; bb and num_heads are small.
    # TODO(synk): for large S (real ViT), tile the sequence with a flash-style
    #             online softmax instead of S x S score tiles per head.
    for b in range(bb):
        r0 = b * S
        for h in range(num_heads):
            c0 = h * dh
            qh = qkv_scr[r0:r0 + S, c0:c0 + dh]
            kh = qkv_scr[r0:r0 + S, H + c0:H + c0 + dh]
            vh = qkv_scr[r0:r0 + S, 2 * H + c0:2 * H + c0 + dh]
            s = lax.dot_general(qh.astype(mm), kh.astype(mm),
                                (((1,), (1,)), ((), ())),
                                preferred_element_type=jnp.float32)
            s = s - jnp.max(s, axis=-1, keepdims=True)
            p = jnp.exp(s)
            p = p * pl.reciprocal(jnp.sum(p, axis=-1, keepdims=True), approx=True)
            ctx_scr[r0:r0 + S, c0:c0 + dh] = jnp.dot(
                p.astype(mm), vh.astype(mm), preferred_element_type=jnp.float32)

    # ---- single K=H output projection + residual 1 ----
    attn = jnp.dot(ctx_scr[...].astype(mm), wo_ref[...],
                   preferred_element_type=jnp.float32) + bo_ref[...]
    x1 = x + attn

    # ---- LN2 + MLP (GELU) + residual 2 ----
    h2 = _layernorm(x1, ln2_g_ref[...], ln2_b_ref[...])
    g = _gelu_tanh(jnp.dot(h2.astype(mm), w1_ref[...],
                           preferred_element_type=jnp.float32) + b1_ref[...])
    y = jnp.dot(g.astype(mm), w2_ref[...],
                preferred_element_type=jnp.float32) + b2_ref[...]
    o_ref[...] = (x1 + y).astype(o_ref.dtype)


# ---------------------------------------------------------------------------
# Wrapper
# ---------------------------------------------------------------------------

def block_forward(x, params, *, num_heads, batch_block=None,
                  matmul_dtype=jnp.float32):
    B, S, H = x.shape
    mlp_dim = params["w1"].shape[1]
    dh = H // num_heads

    # Default: fold the whole batch into one grid step (M = B*S rows) — best for
    # single-TensorCore chips (v5e/v6e).  Use batch_block=1 on v7x so its two
    # TensorCores each pick up a batch element via the "parallel" grid axis.
    if batch_block is None:
        batch_block = B
    assert B % batch_block == 0
    rows = batch_block * S
    n_blocks = B // batch_block

    # Host-side param packing: fused QKV + attention scale folded into Wq/bq.
    scale = 1.0 / math.sqrt(dh)
    wqkv = jnp.concatenate(
        [params["wq"] * scale, params["wk"], params["wv"]], axis=1).astype(matmul_dtype)
    bqkv = jnp.concatenate(
        [params["bq"] * scale, params["bk"], params["bv"]], axis=1)          # f32
    wo = params["wo"].astype(matmul_dtype)
    w1 = params["w1"].astype(matmul_dtype)
    w2 = params["w2"].astype(matmul_dtype)

    x2 = x.reshape(B * S, H)

    def const_spec(shape):
        # grid-invariant block: stays resident in VMEM across grid steps
        return pl.BlockSpec(shape, lambda g, _s=len(shape): (0,) * _s)

    in_specs = [
        pl.BlockSpec((rows, H), lambda g: (g, 0)),            # x rows
        const_spec((1, H)), const_spec((1, H)),               # LN1 gamma / beta
        const_spec((H, 3 * H)), const_spec((1, 3 * H)),       # fused Wqkv / bqkv
        const_spec((H, H)), const_spec((1, H)),               # Wo, bo
        const_spec((1, H)), const_spec((1, H)),               # LN2 gamma / beta
        const_spec((H, mlp_dim)), const_spec((1, mlp_dim)),   # fc1
        const_spec((mlp_dim, H)), const_spec((1, H)),         # fc2
    ]
    out_specs = pl.BlockSpec((rows, H), lambda g: (g, 0))

    # Cost hint for XLA's scheduler.
    w_itemsize = jnp.dtype(matmul_dtype).itemsize
    flops = B * (8 * S * H * H + 4 * S * S * H + 4 * S * H * mlp_dim)
    transcendentals = B * S * (num_heads * S + mlp_dim)
    weight_bytes = (3 * H * H + H * H + 2 * H * mlp_dim) * w_itemsize
    bias_ln_bytes = (3 * H + 2 * H + mlp_dim + 4 * H) * 4
    bytes_accessed = 2 * B * S * H * 4 + weight_bytes + bias_ln_bytes

    # VMEM budget: weights (+ pipeline buffering) + activation blocks + scratch,
    # with headroom; clamped so it stays inside v7x's 64 MiB physical VMEM.
    scratch_bytes = rows * (3 * H + H) * 4
    act_bytes = 2 * rows * H * 4
    vmem_limit = int(min(56 * 2**20,
                         max(32 * 2**20,
                             4 * (weight_bytes + bias_ln_bytes
                                  + act_bytes + scratch_bytes))))

    out2 = pl.pallas_call(
        partial(_block_kernel, num_heads, S),
        out_shape=jax.ShapeDtypeStruct((B * S, H), x.dtype),
        grid_spec=pltpu.PrefetchScalarGridSpec(
            num_scalar_prefetch=0,
            grid=(n_blocks,),
            in_specs=in_specs,
            out_specs=out_specs,
            scratch_shapes=[
                pltpu.VMEM((rows, 3 * H), jnp.float32),       # qkv
                pltpu.VMEM((rows, H), jnp.float32),           # per-head ctx
            ]),
        compiler_params=pltpu.CompilerParams(
            dimension_semantics=("parallel",),
            vmem_limit_bytes=vmem_limit),
        cost_estimate=pl.CostEstimate(
            flops=flops,
            transcendentals=transcendentals,
            bytes_accessed=bytes_accessed),
    )(x2,
      params["ln1_g"], params["ln1_b"],
      wqkv, bqkv,
      wo, params["bo"],
      params["ln2_g"], params["ln2_b"],
      w1, params["b1"], w2, params["b2"])

    return out2.reshape(B, S, H)


# ---------------------------------------------------------------------------
# Parameter init (deterministic; weights stored as (in, out))
# ---------------------------------------------------------------------------

def init_block_params(key, hidden, mlp_dim):
    keys = jax.random.split(key, 6)

    def linear(k, fin, fout):
        kw, kb = jax.random.split(k)
        bound = 1.0 / math.sqrt(fin)
        w = jax.random.uniform(kw, (fin, fout), jnp.float32, -bound, bound)
        b = jax.random.uniform(kb, (1, fout), jnp.float32, -bound, bound)
        return w, b

    wq, bq = linear(keys[0], hidden, hidden)
    wk, bk = linear(keys[1], hidden, hidden)
    wv, bv = linear(keys[2], hidden, hidden)
    wo, bo = linear(keys[3], hidden, hidden)
    w1, b1 = linear(keys[4], hidden, mlp_dim)
    w2, b2 = linear(keys[5], mlp_dim, hidden)

    return {
        "ln1_g": jnp.ones((1, hidden), jnp.float32),
        "ln1_b": jnp.zeros((1, hidden), jnp.float32),
        "ln2_g": jnp.ones((1, hidden), jnp.float32),
        "ln2_b": jnp.zeros((1, hidden), jnp.float32),
        "wq": wq, "bq": bq, "wk": wk, "bk": bk, "wv": wv, "bv": bv,
        "wo": wo, "bo": bo,
        "w1": w1, "b1": b1, "w2": w2, "b2": b2,
    }


# ---------------------------------------------------------------------------
# Pure-JAX reference (for validation only)
# ---------------------------------------------------------------------------

def _ref_block(x, params, num_heads):
    B, S, H = x.shape
    dh = H // num_heads

    def ln(t, g, b):
        mu = t.mean(-1, keepdims=True)
        var = ((t - mu) ** 2).mean(-1, keepdims=True)
        return (t - mu) / jnp.sqrt(var + _LN_EPS) * g + b

    h1 = ln(x, params["ln1_g"], params["ln1_b"])
    q = h1 @ params["wq"] + params["bq"]
    k = h1 @ params["wk"] + params["bk"]
    v = h1 @ params["wv"] + params["bv"]

    def split(t):
        return t.reshape(B, S, num_heads, dh).transpose(0, 2, 1, 3)

    qh, kh, vh = split(q), split(k), split(v)
    s = jnp.einsum("bhqd,bhkd->bhqk", qh, kh) / math.sqrt(dh)
    p = jax.nn.softmax(s, axis=-1)
    ctx = jnp.einsum("bhqk,bhkd->bhqd", p, vh)
    ctx = ctx.transpose(0, 2, 1, 3).reshape(B, S, H)
    x1 = x + ctx @ params["wo"] + params["bo"]

    h2 = ln(x1, params["ln2_g"], params["ln2_b"])
    g = _gelu_tanh(h2 @ params["w1"] + params["b1"])
    return x1 + g @ params["w2"] + params["b2"]


# ---------------------------------------------------------------------------
# Main
# ---------------------------------------------------------------------------

if __name__ == "__main__":
    key = jax.random.PRNGKey(0)
    k_param, k_x = jax.random.split(key)

    # Small but TPU-friendly shapes: hidden = 128 keeps the last dim lane-dense.
    B, S, H = 2, 64, 128
    mlp_dim, num_heads = 256, 4

    params = init_block_params(k_param, H, mlp_dim)
    x = jax.random.normal(k_x, (B, S, H), jnp.float32)
    ref = _ref_block(x, params, num_heads)

    # 1) f32 MXU operands, whole batch folded into one grid step (v5e/v6e layout).
    fwd_f32 = jax.jit(partial(block_forward, num_heads=num_heads))
    out_f32 = fwd_f32(x, params)
    jax.block_until_ready(out_f32)
    assert out_f32.shape == ref.shape
    err_f32 = float(jnp.max(jnp.abs(out_f32 - ref)))
    assert jnp.allclose(out_f32, ref, atol=2e-3, rtol=2e-3), f"f32 max_err={err_f32}"

    # 2) bf16 MXU operands (native full-rate path on v6e/v7x), f32 accumulation.
    fwd_bf16 = jax.jit(partial(block_forward, num_heads=num_heads,
                               matmul_dtype=jnp.bfloat16))
    out_bf16 = fwd_bf16(x, params)
    jax.block_until_ready(out_bf16)
    err_bf16 = float(jnp.max(jnp.abs(out_bf16 - ref)))
    assert jnp.allclose(out_bf16, ref, atol=6e-2, rtol=6e-2), f"bf16 max_err={err_bf16}"

    # 3) v7x-style layout: one batch element per grid step ("parallel" -> 2 TCs).
    fwd_split = jax.jit(partial(block_forward, num_heads=num_heads, batch_block=1))
    out_split = fwd_split(x, params)
    jax.block_until_ready(out_split)
    err_split = float(jnp.max(jnp.abs(out_split - ref)))
    assert jnp.allclose(out_split, ref, atol=2e-3, rtol=2e-3), f"split max_err={err_split}"

    print("KERNEL_OK")
</pallas_src>

<mosaic_0001>
module attributes {stable_mosaic.version = 11 : i64} {
  func.func @_block_kernel(%arg0: i32, %arg1: memref<128x128xf32, #tpu.memory_space<vmem>>, %arg2: memref<1x128xf32, #tpu.memory_space<vmem>>, %arg3: memref<1x128xf32, #tpu.memory_space<vmem>>, %arg4: memref<128x384xf32, #tpu.memory_space<vmem>>, %arg5: memref<1x384xf32, #tpu.memory_space<vmem>>, %arg6: memref<128x128xf32, #tpu.memory_space<vmem>>, %arg7: memref<1x128xf32, #tpu.memory_space<vmem>>, %arg8: memref<1x128xf32, #tpu.memory_space<vmem>>, %arg9: memref<1x128xf32, #tpu.memory_space<vmem>>, %arg10: memref<128x256xf32, #tpu.memory_space<vmem>>, %arg11: memref<1x256xf32, #tpu.memory_space<vmem>>, %arg12: memref<256x128xf32, #tpu.memory_space<vmem>>, %arg13: memref<1x128xf32, #tpu.memory_space<vmem>>, %arg14: memref<128x128xf32, #tpu.memory_space<vmem>>, %arg15: memref<128x384xf32, #tpu.memory_space<vmem>>, %arg16: memref<128x128xf32, #tpu.memory_space<vmem>>) attributes {dimension_semantics = [#tpu.dimension_semantics<parallel>], iteration_bounds = array<i64: 1>, scalar_prefetch = 0 : i64, scratch_operands = 2 : i64, tpu.core_type = #tpu.core_type<tc>, window_params = [{transform_indices = @transform_0, window_bounds = array<i64: 128, 128>}, {pipeline_mode = #tpu.pipeline_mode<synchronous>, transform_indices = @transform_1, window_bounds = array<i64: 1, 128>}, {pipeline_mode = #tpu.pipeline_mode<synchronous>, transform_indices = @transform_2, window_bounds = array<i64: 1, 128>}, {pipeline_mode = #tpu.pipeline_mode<synchronous>, transform_indices = @transform_3, window_bounds = array<i64: 128, 384>}, {pipeline_mode = #tpu.pipeline_mode<synchronous>, transform_indices = @transform_4, window_bounds = array<i64: 1, 384>}, {pipeline_mode = #tpu.pipeline_mode<synchronous>, transform_indices = @transform_5, window_bounds = array<i64: 128, 128>}, {pipeline_mode = #tpu.pipeline_mode<synchronous>, transform_indices = @transform_6, window_bounds = array<i64: 1, 128>}, {pipeline_mode = #tpu.pipeline_mode<synchronous>, transform_indices = @transform_7, window_bounds = array<i64: 1, 128>}, {pipeline_mode = #tpu.pipeline_mode<synchronous>, transform_indices = @transform_8, window_bounds = array<i64: 1, 128>}, {pipeline_mode = #tpu.pipeline_mode<synchronous>, transform_indices = @transform_9, window_bounds = array<i64: 128, 256>}, {pipeline_mode = #tpu.pipeline_mode<synchronous>, transform_indices = @transform_10, window_bounds = array<i64: 1, 256>}, {pipeline_mode = #tpu.pipeline_mode<synchronous>, transform_indices = @transform_11, window_bounds = array<i64: 256, 128>}, {pipeline_mode = #tpu.pipeline_mode<synchronous>, transform_indices = @transform_12, window_bounds = array<i64: 1, 128>}, {transform_indices = @transform_13, window_bounds = array<i64: 128, 128>}]} {
    %c0 = arith.constant 0 : index
    %c0_0 = arith.constant 0 : index
    %0 = vector.load %arg1[%c0, %c0_0] : memref<128x128xf32, #tpu.memory_space<vmem>>, vector<128x128xf32>
    %c0_1 = arith.constant 0 : index
    %c0_2 = arith.constant 0 : index
    %1 = vector.load %arg2[%c0_1, %c0_2] : memref<1x128xf32, #tpu.memory_space<vmem>>, vector<1x128xf32>
    %c0_3 = arith.constant 0 : index
    %c0_4 = arith.constant 0 : index
    %2 = vector.load %arg3[%c0_3, %c0_4] : memref<1x128xf32, #tpu.memory_space<vmem>>, vector<1x128xf32>
    %cst = arith.constant dense<0.000000e+00> : vector<128xf32>
    %3 = vector.multi_reduction <add>, %0, %cst [1] : vector<128x128xf32> to vector<128xf32>
    %4 = vector.shape_cast %3 : vector<128xf32> to vector<128x1xf32>
    %cst_5 = arith.constant 1.280000e+02 : f32
    %5 = vector.broadcast %cst_5 : f32 to vector<128x1xf32>
    %6 = arith.divf %4, %5 : vector<128x1xf32>
    %7 = vector.broadcast %6 : vector<128x1xf32> to vector<128x128xf32>
    %8 = arith.subf %0, %7 : vector<128x128xf32>
    %9 = arith.mulf %8, %8 : vector<128x128xf32>
    %cst_6 = arith.constant dense<0.000000e+00> : vector<128xf32>
    %10 = vector.multi_reduction <add>, %9, %cst_6 [1] : vector<128x128xf32> to vector<128xf32>
    %11 = vector.shape_cast %10 : vector<128xf32> to vector<128x1xf32>
    %cst_7 = arith.constant 1.280000e+02 : f32
    %12 = vector.broadcast %cst_7 : f32 to vector<128x1xf32>
    %13 = arith.divf %11, %12 : vector<128x1xf32>
    %cst_8 = arith.constant 9.99999997E-7 : f32
    %14 = vector.broadcast %cst_8 : f32 to vector<128x1xf32>
    %15 = arith.addf %13, %14 : vector<128x1xf32>
    %16 = math.rsqrt %15 : vector<128x1xf32>
    %17 = vector.broadcast %16 : vector<128x1xf32> to vector<128x128xf32>
    %18 = arith.mulf %8, %17 : vector<128x128xf32>
    %19 = vector.broadcast %1 : vector<1x128xf32> to vector<128x128xf32>
    %20 = arith.mulf %18, %19 : vector<128x128xf32>
    %21 = vector.broadcast %2 : vector<1x128xf32> to vector<128x128xf32>
    %22 = arith.addf %20, %21 : vector<128x128xf32>
    %c0_9 = arith.constant 0 : index
    %c0_10 = arith.constant 0 : index
    %23 = vector.load %arg4[%c0_9, %c0_10] : memref<128x384xf32, #tpu.memory_space<vmem>>, vector<128x384xf32>
    %cst_11 = arith.constant dense<0.000000e+00> : vector<128x384xf32>
    %24 = tpu.matmul %22, %23, %cst_11 {dimension_numbers = #tpu.dot_dimension_numbers<[1], [0], [0], [1], [0, 0, 1, 1], [], []>} : vector<128x128xf32>, vector<128x384xf32>, vector<128x384xf32> -> vector<128x384xf32>
    %c0_12 = arith.constant 0 : index
    %c0_13 = arith.constant 0 : index
    %25 = vector.load %arg5[%c0_12, %c0_13] : memref<1x384xf32, #tpu.memory_space<vmem>>, vector<1x384xf32>
    %26 = vector.broadcast %25 : vector<1x384xf32> to vector<128x384xf32>
    %27 = arith.addf %24, %26 : vector<128x384xf32>
    %c0_14 = arith.constant 0 : index
    %c0_15 = arith.constant 0 : index
    %28 = vector.load %arg15[%c0_14, %c0_15] : memref<128x384xf32, #tpu.memory_space<vmem>>, vector<128x384xf32>
    tpu.vector_store %arg15[%c0_14, %c0_15], %27 {strides = array<i32>} : memref<128x384xf32, #tpu.memory_space<vmem>>, vector<128x384xf32>,
    %c0_16 = arith.constant 0 : index
    %c0_17 = arith.constant 0 : index
    %29 = vector.load %arg15[%c0_16, %c0_17] : memref<128x384xf32, #tpu.memory_space<vmem>>, vector<64x32xf32>
    %c0_18 = arith.constant 0 : index
    %c128 = arith.constant 128 : index
    %30 = vector.load %arg15[%c0_18, %c128] : memref<128x384xf32, #tpu.memory_space<vmem>>, vector<64x32xf32>
    %c0_19 = arith.constant 0 : index
    %c256 = arith.constant 256 : index
    %31 = vector.load %arg15[%c0_19, %c256] : memref<128x384xf32, #tpu.memory_space<vmem>>, vector<64x32xf32>
    %cst_20 = arith.constant dense<0.000000e+00> : vector<64x64xf32>
    %32 = tpu.matmul %29, %30, %cst_20 {dimension_numbers = #tpu.dot_dimension_numbers<[1], [1], [0], [0], [0, 0, 1, 0], [], []>} : vector<64x32xf32>, vector<64x32xf32>, vector<64x64xf32> -> vector<64x64xf32>
    %cst_21 = arith.constant dense<0xFF800000> : vector<64xf32>
    %33 = vector.multi_reduction <maximumf>, %32, %cst_21 [1] : vector<64x64xf32> to vector<64xf32>
    %34 = vector.shape_cast %33 : vector<64xf32> to vector<64x1xf32>
    %35 = vector.broadcast %34 : vector<64x1xf32> to vector<64x64xf32>
    %36 = arith.subf %32, %35 : vector<64x64xf32>
    %37 = math.exp %36 : vector<64x64xf32>
    %cst_22 = arith.constant dense<0.000000e+00> : vector<64xf32>
    %38 = vector.multi_reduction <add>, %37, %cst_22 [1] : vector<64x64xf32> to vector<64xf32>
    %39 = vector.shape_cast %38 : vector<64xf32> to vector<64x1xf32>
    %40 = tpu.reciprocal %39 {approx = true} : vector<64x1xf32> -> vector<64x1xf32>
    %41 = vector.broadcast %40 : vector<64x1xf32> to vector<64x64xf32>
    %42 = arith.mulf %37, %41 : vector<64x64xf32>
    %cst_23 = arith.constant dense<0.000000e+00> : vector<64x32xf32>
    %43 = tpu.matmul %42, %31, %cst_23 {dimension_numbers = #tpu.dot_dimension_numbers<[1], [0], [0], [1], [0, 0, 1, 1], [], []>} : vector<64x64xf32>, vector<64x32xf32>, vector<64x32xf32> -> vector<64x32xf32>
    %c0_24 = arith.constant 0 : index
    %c0_25 = arith.constant 0 : index
    %44 = vector.load %arg16[%c0_24, %c0_25] : memref<128x128xf32, #tpu.memory_space<vmem>>, vector<64x32xf32>
    tpu.vector_store %arg16[%c0_24, %c0_25], %43 {strides = array<i32>} : memref<128x128xf32, #tpu.memory_space<vmem>>, vector<64x32xf32>,
    %c0_26 = arith.constant 0 : index
    %c32 = arith.constant 32 : index
    %45 = vector.load %arg15[%c0_26, %c32] : memref<128x384xf32, #tpu.memory_space<vmem>>, vector<64x32xf32>
    %c0_27 = arith.constant 0 : index
    %c160 = arith.constant 160 : index
    %46 = vector.load %arg15[%c0_27, %c160] : memref<128x384xf32, #tpu.memory_space<vmem>>, vector<64x32xf32>
    %c0_28 = arith.constant 0 : index
    %c288 = arith.constant 288 : index
    %47 = vector.load %arg15[%c0_28, %c288] : memref<128x384xf32, #tpu.memory_space<vmem>>, vector<64x32xf32>
    %cst_29 = arith.constant dense<0.000000e+00> : vector<64x64xf32>
    %48 = tpu.matmul %45, %46, %cst_29 {dimension_numbers = #tpu.dot_dimension_numbers<[1], [1], [0], [0], [0, 0, 1, 0], [], []>} : vector<64x32xf32>, vector<64x32xf32>, vector<64x64xf32> -> vector<64x64xf32>
    %cst_30 = arith.constant dense<0xFF800000> : vector<64xf32>
    %49 = vector.multi_reduction <maximumf>, %48, %cst_30 [1] : vector<64x64xf32> to vector<64xf32>
    %50 = vector.shape_cast %49 : vector<64xf32> to vector<64x1xf32>
    %51 = vector.broadcast %50 : vector<64x1xf32> to vector<64x64xf32>
    %52 = arith.subf %48, %51 : vector<64x64xf32>
    %53 = math.exp %52 : vector<64x64xf32>
    %cst_31 = arith.constant dense<0.000000e+00> : vector<64xf32>
    %54 = vector.multi_reduction <add>, %53, %cst_31 [1] : vector<64x64xf32> to vector<64xf32>
    %55 = vector.shape_cast %54 : vector<64xf32> to vector<64x1xf32>
    %56 = tpu.reciprocal %55 {approx = true} : vector<64x1xf32> -> vector<64x1xf32>
    %57 = vector.broadcast %56 : vector<64x1xf32> to vector<64x64xf32>
    %58 = arith.mulf %53, %57 : vector<64x64xf32>
    %cst_32 = arith.constant dense<0.000000e+00> : vector<64x32xf32>
    %59 = tpu.matmul %58, %47, %cst_32 {dimension_numbers = #tpu.dot_dimension_numbers<[1], [0], [0], [1], [0, 0, 1, 1], [], []>} : vector<64x64xf32>, vector<64x32xf32>, vector<64x32xf32> -> vector<64x32xf32>
    %c0_33 = arith.constant 0 : index
    %c32_34 = arith.constant 32 : index
    %60 = vector.load %arg16[%c0_33, %c32_34] : memref<128x128xf32, #tpu.memory_space<vmem>>, vector<64x32xf32>
    tpu.vector_store %arg16[%c0_33, %c32_34], %59 {strides = array<i32>} : memref<128x128xf32, #tpu.memory_space<vmem>>, vector<64x32xf32>,
    %c0_35 = arith.constant 0 : index
    %c64 = arith.constant 64 : index
    %61 = vector.load %arg15[%c0_35, %c64] : memref<128x384xf32, #tpu.memory_space<vmem>>, vector<64x32xf32>
    %c0_36 = arith.constant 0 : index
    %c192 = arith.constant 192 : index
    %62 = vector.load %arg15[%c0_36, %c192] : memref<128x384xf32, #tpu.memory_space<vmem>>, vector<64x32xf32>
    %c0_37 = arith.constant 0 : index
    %c320 = arith.constant 320 : index
    %63 = vector.load %arg15[%c0_37, %c320] : memref<128x384xf32, #tpu.memory_space<vmem>>, vector<64x32xf32>
    %cst_38 = arith.constant dense<0.000000e+00> : vector<64x64xf32>
    %64 = tpu.matmul %61, %62, %cst_38 {dimension_numbers = #tpu.dot_dimension_numbers<[1], [1], [0], [0], [0, 0, 1, 0], [], []>} : vector<64x32xf32>, vector<64x32xf32>, vector<64x64xf32> -> vector<64x64xf32>
    %cst_39 = arith.constant dense<0xFF800000> : vector<64xf32>
    %65 = vector.multi_reduction <maximumf>, %64, %cst_39 [1] : vector<64x64xf32> to vector<64xf32>
    %66 = vector.shape_cast %65 : vector<64xf32> to vector<64x1xf32>
    %67 = vector.broadcast %66 : vector<64x1xf32> to vector<64x64xf32>
    %68 = arith.subf %64, %67 : vector<64x64xf32>
    %69 = math.exp %68 : vector<64x64xf32>
    %cst_40 = arith.constant dense<0.000000e+00> : vector<64xf32>
    %70 = vector.multi_reduction <add>, %69, %cst_40 [1] : vector<64x64xf32> to vector<64xf32>
    %71 = vector.shape_cast %70 : vector<64xf32> to vector<64x1xf32>
    %72 = tpu.reciprocal %71 {approx = true} : vector<64x1xf32> -> vector<64x1xf32>
    %73 = vector.broadcast %72 : vector<64x1xf32> to vector<64x64xf32>
    %74 = arith.mulf %69, %73 : vector<64x64xf32>
    %cst_41 = arith.constant dense<0.000000e+00> : vector<64x32xf32>
    %75 = tpu.matmul %74, %63, %cst_41 {dimension_numbers = #tpu.dot_dimension_numbers<[1], [0], [0], [1], [0, 0, 1, 1], [], []>} : vector<64x64xf32>, vector<64x32xf32>, vector<64x32xf32> -> vector<64x32xf32>
    %c0_42 = arith.constant 0 : index
    %c64_43 = arith.constant 64 : index
    %76 = vector.load %arg16[%c0_42, %c64_43] : memref<128x128xf32, #tpu.memory_space<vmem>>, vector<64x32xf32>
    tpu.vector_store %arg16[%c0_42, %c64_43], %75 {strides = array<i32>} : memref<128x128xf32, #tpu.memory_space<vmem>>, vector<64x32xf32>,
    %c0_44 = arith.constant 0 : index
    %c96 = arith.constant 96 : index
    %77 = vector.load %arg15[%c0_44, %c96] : memref<128x384xf32, #tpu.memory_space<vmem>>, vector<64x32xf32>
    %c0_45 = arith.constant 0 : index
    %c224 = arith.constant 224 : index
    %78 = vector.load %arg15[%c0_45, %c224] : memref<128x384xf32, #tpu.memory_space<vmem>>, vector<64x32xf32>
    %c0_46 = arith.constant 0 : index
    %c352 = arith.constant 352 : index
    %79 = vector.load %arg15[%c0_46, %c352] : memref<128x384xf32, #tpu.memory_space<vmem>>, vector<64x32xf32>
    %cst_47 = arith.constant dense<0.000000e+00> : vector<64x64xf32>
    %80 = tpu.matmul %77, %78, %cst_47 {dimension_numbers = #tpu.dot_dimension_numbers<[1], [1], [0], [0], [0, 0, 1, 0], [], []>} : vector<64x32xf32>, vector<64x32xf32>, vector<64x64xf32> -> vector<64x64xf32>
    %cst_48 = arith.constant dense<0xFF800000> : vector<64xf32>
    %81 = vector.multi_reduction <maximumf>, %80, %cst_48 [1] : vector<64x64xf32> to vector<64xf32>
    %82 = vector.shape_cast %81 : vector<64xf32> to vector<64x1xf32>
    %83 = vector.broadcast %82 : vector<64x1xf32> to vector<64x64xf32>
    %84 = arith.subf %80, %83 : vector<64x64xf32>
    %85 = math.exp %84 : vector<64x64xf32>
    %cst_49 = arith.constant dense<0.000000e+00> : vector<64xf32>
    %86 = vector.multi_reduction <add>, %85, %cst_49 [1] : vector<64x64xf32> to vector<64xf32>
    %87 = vector.shape_cast %86 : vector<64xf32> to vector<64x1xf32>
    %88 = tpu.reciprocal %87 {approx = true} : vector<64x1xf32> -> vector<64x1xf32>
    %89 = vector.broadcast %88 : vector<64x1xf32> to vector<64x64xf32>
    %90 = arith.mulf %85, %89 : vector<64x64xf32>
    %cst_50 = arith.constant dense<0.000000e+00> : vector<64x32xf32>
    %91 = tpu.matmul %90, %79, %cst_50 {dimension_numbers = #tpu.dot_dimension_numbers<[1], [0], [0], [1], [0, 0, 1, 1], [], []>} : vector<64x64xf32>, vector<64x32xf32>, vector<64x32xf32> -> vector<64x32xf32>
    %c0_51 = arith.constant 0 : index
    %c96_52 = arith.constant 96 : index
    %92 = vector.load %arg16[%c0_51, %c96_52] : memref<128x128xf32, #tpu.memory_space<vmem>>, vector<64x32xf32>
    tpu.vector_store %arg16[%c0_51, %c96_52], %91 {strides = array<i32>} : memref<128x128xf32, #tpu.memory_space<vmem>>, vector<64x32xf32>,
    %c64_53 = arith.constant 64 : index
    %c0_54 = arith.constant 0 : index
    %93 = vector.load %arg15[%c64_53, %c0_54] : memref<128x384xf32, #tpu.memory_space<vmem>>, vector<64x32xf32>
    %c64_55 = arith.constant 64 : index
    %c128_56 = arith.constant 128 : index
    %94 = vector.load %arg15[%c64_55, %c128_56] : memref<128x384xf32, #tpu.memory_space<vmem>>, vector<64x32xf32>
    %c64_57 = arith.constant 64 : index
    %c256_58 = arith.constant 256 : index
    %95 = vector.load %arg15[%c64_57, %c256_58] : memref<128x384xf32, #tpu.memory_space<vmem>>, vector<64x32xf32>
    %cst_59 = arith.constant dense<0.000000e+00> : vector<64x64xf32>
    %96 = tpu.matmul %93, %94, %cst_59 {dimension_numbers = #tpu.dot_dimension_numbers<[1], [1], [0], [0], [0, 0, 1, 0], [], []>} : vector<64x32xf32>, vector<64x32xf32>, vector<64x64xf32> -> vector<64x64xf32>
    %cst_60 = arith.constant dense<0xFF800000> : vector<64xf32>
    %97 = vector.multi_reduction <maximumf>, %96, %cst_60 [1] : vector<64x64xf32> to vector<64xf32>
    %98 = vector.shape_cast %97 : vector<64xf32> to vector<64x1xf32>
    %99 = vector.broadcast %98 : vector<64x1xf32> to vector<64x64xf32>
    %100 = arith.subf %96, %99 : vector<64x64xf32>
    %101 = math.exp %100 : vector<64x64xf32>
    %cst_61 = arith.constant dense<0.000000e+00> : vector<64xf32>
    %102 = vector.multi_reduction <add>, %101, %cst_61 [1] : vector<64x64xf32> to vector<64xf32>
    %103 = vector.shape_cast %102 : vector<64xf32> to vector<64x1xf32>
    %104 = tpu.reciprocal %103 {approx = true} : vector<64x1xf32> -> vector<64x1xf32>
    %105 = vector.broadcast %104 : vector<64x1xf32> to vector<64x64xf32>
    %106 = arith.mulf %101, %105 : vector<64x64xf32>
    %cst_62 = arith.constant dense<0.000000e+00> : vector<64x32xf32>
    %107 = tpu.matmul %106, %95, %cst_62 {dimension_numbers = #tpu.dot_dimension_numbers<[1], [0], [0], [1], [0, 0, 1, 1], [], []>} : vector<64x64xf32>, vector<64x32xf32>, vector<64x32xf32> -> vector<64x32xf32>
    %c64_63 = arith.constant 64 : index
    %c0_64 = arith.constant 0 : index
    %108 = vector.load %arg16[%c64_63, %c0_64] : memref<128x128xf32, #tpu.memory_space<vmem>>, vector<64x32xf32>
    tpu.vector_store %arg16[%c64_63, %c0_64], %107 {strides = array<i32>} : memref<128x128xf32, #tpu.memory_space<vmem>>, vector<64x32xf32>,
    %c64_65 = arith.constant 64 : index
    %c32_66 = arith.constant 32 : index
    %109 = vector.load %arg15[%c64_65, %c32_66] : memref<128x384xf32, #tpu.memory_space<vmem>>, vector<64x32xf32>
    %c64_67 = arith.constant 64 : index
    %c160_68 = arith.constant 160 : index
    %110 = vector.load %arg15[%c64_67, %c160_68] : memref<128x384xf32, #tpu.memory_space<vmem>>, vector<64x32xf32>
    %c64_69 = arith.constant 64 : index
    %c288_70 = arith.constant 288 : index
    %111 = vector.load %arg15[%c64_69, %c288_70] : memref<128x384xf32, #tpu.memory_space<vmem>>, vector<64x32xf32>
    %cst_71 = arith.constant dense<0.000000e+00> : vector<64x64xf32>
    %112 = tpu.matmul %109, %110, %cst_71 {dimension_numbers = #tpu.dot_dimension_numbers<[1], [1], [0], [0], [0, 0, 1, 0], [], []>} : vector<64x32xf32>, vector<64x32xf32>, vector<64x64xf32> -> vector<64x64xf32>
    %cst_72 = arith.constant dense<0xFF800000> : vector<64xf32>
    %113 = vector.multi_reduction <maximumf>, %112, %cst_72 [1] : vector<64x64xf32> to vector<64xf32>
    %114 = vector.shape_cast %113 : vector<64xf32> to vector<64x1xf32>
    %115 = vector.broadcast %114 : vector<64x1xf32> to vector<64x64xf32>
    %116 = arith.subf %112, %115 : vector<64x64xf32>
    %117 = math.exp %116 : vector<64x64xf32>
    %cst_73 = arith.constant dense<0.000000e+00> : vector<64xf32>
    %118 = vector.multi_reduction <add>, %117, %cst_73 [1] : vector<64x64xf32> to vector<64xf32>
    %119 = vector.shape_cast %118 : vector<64xf32> to vector<64x1xf32>
    %120 = tpu.reciprocal %119 {approx = true} : vector<64x1xf32> -> vector<64x1xf32>
    %121 = vector.broadcast %120 : vector<64x1xf32> to vector<64x64xf32>
    %122 = arith.mulf %117, %121 : vector<64x64xf32>
    %cst_74 = arith.constant dense<0.000000e+00> : vector<64x32xf32>
    %123 = tpu.matmul %122, %111, %cst_74 {dimension_numbers = #tpu.dot_dimension_numbers<[1], [0], [0], [1], [0, 0, 1, 1], [], []>} : vector<64x64xf32>, vector<64x32xf32>, vector<64x32xf32> -> vector<64x32xf32>
    %c64_75 = arith.constant 64 : index
    %c32_76 = arith.constant 32 : index
    %124 = vector.load %arg16[%c64_75, %c32_76] : memref<128x128xf32, #tpu.memory_space<vmem>>, vector<64x32xf32>
    tpu.vector_store %arg16[%c64_75, %c32_76], %123 {strides = array<i32>} : memref<128x128xf32, #tpu.memory_space<vmem>>, vector<64x32xf32>,
    %c64_77 = arith.constant 64 : index
    %c64_78 = arith.constant 64 : index
    %125 = vector.load %arg15[%c64_77, %c64_78] : memref<128x384xf32, #tpu.memory_space<vmem>>, vector<64x32xf32>
    %c64_79 = arith.constant 64 : index
    %c192_80 = arith.constant 192 : index
    %126 = vector.load %arg15[%c64_79, %c192_80] : memref<128x384xf32, #tpu.memory_space<vmem>>, vector<64x32xf32>
    %c64_81 = arith.constant 64 : index
    %c320_82 = arith.constant 320 : index
    %127 = vector.load %arg15[%c64_81, %c320_82] : memref<128x384xf32, #tpu.memory_space<vmem>>, vector<64x32xf32>
    %cst_83 = arith.constant dense<0.000000e+00> : vector<64x64xf32>
    %128 = tpu.matmul %125, %126, %cst_83 {dimension_numbers = #tpu.dot_dimension_numbers<[1], [1], [0], [0], [0, 0, 1, 0], [], []>} : vector<64x32xf32>, vector<64x32xf32>, vector<64x64xf32> -> vector<64x64xf32>
    %cst_84 = arith.constant dense<0xFF800000> : vector<64xf32>
    %129 = vector.multi_reduction <maximumf>, %128, %cst_84 [1] : vector<64x64xf32> to vector<64xf32>
    %130 = vector.shape_cast %129 : vector<64xf32> to vector<64x1xf32>
    %131 = vector.broadcast %130 : vector<64x1xf32> to vector<64x64xf32>
    %132 = arith.subf %128, %131 : vector<64x64xf32>
    %133 = math.exp %132 : vector<64x64xf32>
    %cst_85 = arith.constant dense<0.000000e+00> : vector<64xf32>
    %134 = vector.multi_reduction <add>, %133, %cst_85 [1] : vector<64x64xf32> to vector<64xf32>
    %135 = vector.shape_cast %134 : vector<64xf32> to vector<64x1xf32>
    %136 = tpu.reciprocal %135 {approx = true} : vector<64x1xf32> -> vector<64x1xf32>
    %137 = vector.broadcast %136 : vector<64x1xf32> to vector<64x64xf32>
    %138 = arith.mulf %133, %137 : vector<64x64xf32>
    %cst_86 = arith.constant dense<0.000000e+00> : vector<64x32xf32>
    %139 = tpu.matmul %138, %127, %cst_86 {dimension_numbers = #tpu.dot_dimension_numbers<[1], [0], [0], [1], [0, 0, 1, 1], [], []>} : vector<64x64xf32>, vector<64x32xf32>, vector<64x32xf32> -> vector<64x32xf32>
    %c64_87 = arith.constant 64 : index
    %c64_88 = arith.constant 64 : index
    %140 = vector.load %arg16[%c64_87, %c64_88] : memref<128x128xf32, #tpu.memory_space<vmem>>, vector<64x32xf32>
    tpu.vector_store %arg16[%c64_87, %c64_88], %139 {strides = array<i32>} : memref<128x128xf32, #tpu.memory_space<vmem>>, vector<64x32xf32>,
    %c64_89 = arith.constant 64 : index
    %c96_90 = arith.constant 96 : index
    %141 = vector.load %arg15[%c64_89, %c96_90] : memref<128x384xf32, #tpu.memory_space<vmem>>, vector<64x32xf32>
    %c64_91 = arith.constant 64 : index
    %c224_92 = arith.constant 224 : index
    %142 = vector.load %arg15[%c64_91, %c224_92] : memref<128x384xf32, #tpu.memory_space<vmem>>, vector<64x32xf32>
    %c64_93 = arith.constant 64 : index
    %c352_94 = arith.constant 352 : index
    %143 = vector.load %arg15[%c64_93, %c352_94] : memref<128x384xf32, #tpu.memory_space<vmem>>, vector<64x32xf32>
    %cst_95 = arith.constant dense<0.000000e+00> : vector<64x64xf32>
    %144 = tpu.matmul %141, %142, %cst_95 {dimension_numbers = #tpu.dot_dimension_numbers<[1], [1], [0], [0], [0, 0, 1, 0], [], []>} : vector<64x32xf32>, vector<64x32xf32>, vector<64x64xf32> -> vector<64x64xf32>
    %cst_96 = arith.constant dense<0xFF800000> : vector<64xf32>
    %145 = vector.multi_reduction <maximumf>, %144, %cst_96 [1] : vector<64x64xf32> to vector<64xf32>
    %146 = vector.shape_cast %145 : vector<64xf32> to vector<64x1xf32>
    %147 = vector.broadcast %146 : vector<64x1xf32> to vector<64x64xf32>
    %148 = arith.subf %144, %147 : vector<64x64xf32>
    %149 = math.exp %148 : vector<64x64xf32>
    %cst_97 = arith.constant dense<0.000000e+00> : vector<64xf32>
    %150 = vector.multi_reduction <add>, %149, %cst_97 [1] : vector<64x64xf32> to vector<64xf32>
    %151 = vector.shape_cast %150 : vector<64xf32> to vector<64x1xf32>
    %152 = tpu.reciprocal %151 {approx = true} : vector<64x1xf32> -> vector<64x1xf32>
    %153 = vector.broadcast %152 : vector<64x1xf32> to vector<64x64xf32>
    %154 = arith.mulf %149, %153 : vector<64x64xf32>
    %cst_98 = arith.constant dense<0.000000e+00> : vector<64x32xf32>
    %155 = tpu.matmul %154, %143, %cst_98 {dimension_numbers = #tpu.dot_dimension_numbers<[1], [0], [0], [1], [0, 0, 1, 1], [], []>} : vector<64x64xf32>, vector<64x32xf32>, vector<64x32xf32> -> vector<64x32xf32>
    %c64_99 = arith.constant 64 : index
    %c96_100 = arith.constant 96 : index
    %156 = vector.load %arg16[%c64_99, %c96_100] : memref<128x128xf32, #tpu.memory_space<vmem>>, vector<64x32xf32>
    tpu.vector_store %arg16[%c64_99, %c96_100], %155 {strides = array<i32>} : memref<128x128xf32, #tpu.memory_space<vmem>>, vector<64x32xf32>,
    %c0_101 = arith.constant 0 : index
    %c0_102 = arith.constant 0 : index
    %157 = vector.load %arg16[%c0_101, %c0_102] : memref<128x128xf32, #tpu.memory_space<vmem>>, vector<128x128xf32>
    %c0_103 = arith.constant 0 : index
    %c0_104 = arith.constant 0 : index
    %158 = vector.load %arg6[%c0_103, %c0_104] : memref<128x128xf32, #tpu.memory_space<vmem>>, vector<128x128xf32>
    %cst_105 = arith.constant dense<0.000000e+00> : vector<128x128xf32>
    %159 = tpu.matmul %157, %158, %cst_105 {dimension_numbers = #tpu.dot_dimension_numbers<[1], [0], [0], [1], [0, 0, 1, 1], [], []>} : vector<128x128xf32>, vector<128x128xf32>, vector<128x128xf32> -> vector<128x128xf32>
    %c0_106 = arith.constant 0 : index
    %c0_107 = arith.constant 0 : index
    %160 = vector.load %arg7[%c0_106, %c0_107] : memref<1x128xf32, #tpu.memory_space<vmem>>, vector<1x128xf32>
    %161 = vector.broadcast %160 : vector<1x128xf32> to vector<128x128xf32>
    %162 = arith.addf %159, %161 : vector<128x128xf32>
    %163 = arith.addf %0, %162 : vector<128x128xf32>
    %c0_108 = arith.constant 0 : index
    %c0_109 = arith.constant 0 : index
    %164 = vector.load %arg8[%c0_108, %c0_109] : memref<1x128xf32, #tpu.memory_space<vmem>>, vector<1x128xf32>
    %c0_110 = arith.constant 0 : index
    %c0_111 = arith.constant 0 : index
    %165 = vector.load %arg9[%c0_110, %c0_111] : memref<1x128xf32, #tpu.memory_space<vmem>>, vector<1x128xf32>
    %cst_112 = arith.constant dense<0.000000e+00> : vector<128xf32>
    %166 = vector.multi_reduction <add>, %163, %cst_112 [1] : vector<128x128xf32> to vector<128xf32>
    %167 = vector.shape_cast %166 : vector<128xf32> to vector<128x1xf32>
    %cst_113 = arith.constant 1.280000e+02 : f32
    %168 = vector.broadcast %cst_113 : f32 to vector<128x1xf32>
    %169 = arith.divf %167, %168 : vector<128x1xf32>
    %170 = vector.broadcast %169 : vector<128x1xf32> to vector<128x128xf32>
    %171 = arith.subf %163, %170 : vector<128x128xf32>
    %172 = arith.mulf %171, %171 : vector<128x128xf32>
    %cst_114 = arith.constant dense<0.000000e+00> : vector<128xf32>
    %173 = vector.multi_reduction <add>, %172, %cst_114 [1] : vector<128x128xf32> to vector<128xf32>
    %174 = vector.shape_cast %173 : vector<128xf32> to vector<128x1xf32>
    %cst_115 = arith.constant 1.280000e+02 : f32
    %175 = vector.broadcast %cst_115 : f32 to vector<128x1xf32>
    %176 = arith.divf %174, %175 : vector<128x1xf32>
    %cst_116 = arith.constant 9.99999997E-7 : f32
    %177 = vector.broadcast %cst_116 : f32 to vector<128x1xf32>
    %178 = arith.addf %176, %177 : vector<128x1xf32>
    %179 = math.rsqrt %178 : vector<128x1xf32>
    %180 = vector.broadcast %179 : vector<128x1xf32> to vector<128x128xf32>
    %181 = arith.mulf %171, %180 : vector<128x128xf32>
    %182 = vector.broadcast %164 : vector<1x128xf32> to vector<128x128xf32>
    %183 = arith.mulf %181, %182 : vector<128x128xf32>
    %184 = vector.broadcast %165 : vector<1x128xf32> to vector<128x128xf32>
    %185 = arith.addf %183, %184 : vector<128x128xf32>
    %c0_117 = arith.constant 0 : index
    %c0_118 = arith.constant 0 : index
    %186 = vector.load %arg10[%c0_117, %c0_118] : memref<128x256xf32, #tpu.memory_space<vmem>>, vector<128x256xf32>
    %cst_119 = arith.constant dense<0.000000e+00> : vector<128x256xf32>
    %187 = tpu.matmul %185, %186, %cst_119 {dimension_numbers = #tpu.dot_dimension_numbers<[1], [0], [0], [1], [0, 0, 1, 1], [], []>} : vector<128x128xf32>, vector<128x256xf32>, vector<128x256xf32> -> vector<128x256xf32>
    %c0_120 = arith.constant 0 : index
    %c0_121 = arith.constant 0 : index
    %188 = vector.load %arg11[%c0_120, %c0_121] : memref<1x256xf32, #tpu.memory_space<vmem>>, vector<1x256xf32>
    %189 = vector.broadcast %188 : vector<1x256xf32> to vector<128x256xf32>
    %190 = arith.addf %187, %189 : vector<128x256xf32>
    %cst_122 = arith.constant 5.000000e-01 : f32
    %191 = vector.broadcast %cst_122 : f32 to vector<128x256xf32>
    %192 = arith.mulf %191, %190 : vector<128x256xf32>
    %cst_123 = arith.constant 4.471500e-02 : f32
    %193 = vector.broadcast %cst_123 : f32 to vector<128x256xf32>
    %194 = arith.mulf %193, %190 : vector<128x256xf32>
    %195 = arith.mulf %194, %190 : vector<128x256xf32>
    %196 = arith.mulf %195, %190 : vector<128x256xf32>
    %197 = arith.addf %190, %196 : vector<128x256xf32>
    %cst_124 = arith.constant 0.797884583 : f32
    %198 = vector.broadcast %cst_124 : f32 to vector<128x256xf32>
    %199 = arith.mulf %198, %197 : vector<128x256xf32>
    %200 = math.tanh %199 : vector<128x256xf32>
    %cst_125 = arith.constant 1.000000e+00 : f32
    %201 = vector.broadcast %cst_125 : f32 to vector<128x256xf32>
    %202 = arith.addf %201, %200 : vector<128x256xf32>
    %203 = arith.mulf %192, %202 : vector<128x256xf32>
    %c0_126 = arith.constant 0 : index
    %c0_127 = arith.constant 0 : index
    %204 = vector.load %arg12[%c0_126, %c0_127] : memref<256x128xf32, #tpu.memory_space<vmem>>, vector<256x128xf32>
    %cst_128 = arith.constant dense<0.000000e+00> : vector<128x128xf32>
    %205 = tpu.matmul %203, %204, %cst_128 {dimension_numbers = #tpu.dot_dimension_numbers<[1], [0], [0], [1], [0, 0, 1, 1], [], []>} : vector<128x256xf32>, vector<256x128xf32>, vector<128x128xf32> -> vector<128x128xf32>
    %c0_129 = arith.constant 0 : index
    %c0_130 = arith.constant 0 : index
    %206 = vector.load %arg13[%c0_129, %c0_130] : memref<1x128xf32, #tpu.memory_space<vmem>>, vector<1x128xf32>
    %207 = vector.broadcast %206 : vector<1x128xf32> to vector<128x128xf32>
    %208 = arith.addf %205, %207 : vector<128x128xf32>
    %209 = arith.addf %163, %208 : vector<128x128xf32>
    %c0_131 = arith.constant 0 : index
    %c0_132 = arith.constant 0 : index
    %210 = vector.load %arg14[%c0_131, %c0_132] : memref<128x128xf32, #tpu.memory_space<vmem>>, vector<128x128xf32>
    tpu.vector_store %arg14[%c0_131, %c0_132], %209 {strides = array<i32>} : memref<128x128xf32, #tpu.memory_space<vmem>>, vector<128x128xf32>,
    return
  }
  func.func @transform_0(%arg0: i32) -> (i32, i32) {
    %c0_i32 = arith.constant 0 : i32
    %c0_i32_0 = arith.constant 0 : i32
    return %arg0, %c0_i32 : i32, i32
  }
  func.func @transform_1(%arg0: i32) -> (i32, i32) {
    %c0_i32 = arith.constant 0 : i32
    %c0_i32_0 = arith.constant 0 : i32
    %c0_i32_1 = arith.constant 0 : i32
    return %c0_i32, %c0_i32_0 : i32, i32
  }
  func.func @transform_2(%arg0: i32) -> (i32, i32) {
    %c0_i32 = arith.constant 0 : i32
    %c0_i32_0 = arith.constant 0 : i32
    %c0_i32_1 = arith.constant 0 : i32
    return %c0_i32, %c0_i32_0 : i32, i32
  }
  func.func @transform_3(%arg0: i32) -> (i32, i32) {
    %c0_i32 = arith.constant 0 : i32
    %c0_i32_0 = arith.constant 0 : i32
    %c0_i32_1 = arith.constant 0 : i32
    return %c0_i32, %c0_i32_0 : i32, i32
  }
  func.func @transform_4(%arg0: i32) -> (i32, i32) {
    %c0_i32 = arith.constant 0 : i32
    %c0_i32_0 = arith.constant 0 : i32
    %c0_i32_1 = arith.constant 0 : i32
    return %c0_i32, %c0_i32_0 : i32, i32
  }
  func.func @transform_5(%arg0: i32) -> (i32, i32) {
    %c0_i32 = arith.constant 0 : i32
    %c0_i32_0 = arith.constant 0 : i32
    %c0_i32_1 = arith.constant 0 : i32
    return %c0_i32, %c0_i32_0 : i32, i32
  }
  func.func @transform_6(%arg0: i32) -> (i32, i32) {
    %c0_i32 = arith.constant 0 : i32
    %c0_i32_0 = arith.constant 0 : i32
    %c0_i32_1 = arith.constant 0 : i32
    return %c0_i32, %c0_i32_0 : i32, i32
  }
  func.func @transform_7(%arg0: i32) -> (i32, i32) {
    %c0_i32 = arith.constant 0 : i32
    %c0_i32_0 = arith.constant 0 : i32
    %c0_i32_1 = arith.constant 0 : i32
    return %c0_i32, %c0_i32_0 : i32, i32
  }
  func.func @transform_8(%arg0: i32) -> (i32, i32) {
    %c0_i32 = arith.constant 0 : i32
    %c0_i32_0 = arith.constant 0 : i32
    %c0_i32_1 = arith.constant 0 : i32
    return %c0_i32, %c0_i32_0 : i32, i32
  }
  func.func @transform_9(%arg0: i32) -> (i32, i32) {
    %c0_i32 = arith.constant 0 : i32
    %c0_i32_0 = arith.constant 0 : i32
    %c0_i32_1 = arith.constant 0 : i32
    return %c0_i32, %c0_i32_0 : i32, i32
  }
  func.func @transform_10(%arg0: i32) -> (i32, i32) {
    %c0_i32 = arith.constant 0 : i32
    %c0_i32_0 = arith.constant 0 : i32
    %c0_i32_1 = arith.constant 0 : i32
    return %c0_i32, %c0_i32_0 : i32, i32
  }
  func.func @transform_11(%arg0: i32) -> (i32, i32) {
    %c0_i32 = arith.constant 0 : i32
    %c0_i32_0 = arith.constant 0 : i32
    %c0_i32_1 = arith.constant 0 : i32
    return %c0_i32, %c0_i32_0 : i32, i32
  }
  func.func @transform_12(%arg0: i32) -> (i32, i32) {
    %c0_i32 = arith.constant 0 : i32
    %c0_i32_0 = arith.constant 0 : i32
    %c0_i32_1 = arith.constant 0 : i32
    return %c0_i32, %c0_i32_0 : i32, i32
  }
  func.func @transform_13(%arg0: i32) -> (i32, i32) {
    %c0_i32 = arith.constant 0 : i32
    %c0_i32_0 = arith.constant 0 : i32
    return %arg0, %c0_i32 : i32, i32
  }
}

</mosaic_0001>

<llo_original>
// kernel: block_forward.1
$region0: #{block_forward.1}
  #allocation0 [shape = 'u32[]', space=smem, size = 0x4, offset = 0x4, fixed_abs, tag = 'smem constant byte address 0x4 - core index']
  #allocation1 [shape = 'u32[144,128]{1,0:T(1,128)}', space=vmem, size = 0x12000, scoped, tag = 'internal scratch']
  #allocation2 [shape = 'f32[128,384]{1,0:T(8,128)}', space=vmem, size = 0x30000, scoped, tag = 'scratch operand']
  #allocation3 [shape = 'f32[128,128]{1,0:T(8,128)}', space=vmem, size = 0x10000, scoped, tag = 'scratch operand']
  %s0 = inlined_call_operand.vmem [shape: f32[128,128], index: 0, kind: input, shape index: {}]
  %s1 = inlined_call_operand.vmem [shape: f32[1,128], index: 1, kind: input, shape index: {}]
  %s2 = inlined_call_operand.vmem [shape: f32[1,128], index: 2, kind: input, shape index: {}]
  %s3 = inlined_call_operand.vmem [shape: f32[128,384], index: 3, kind: input, shape index: {}]
  %s4 = inlined_call_operand.vmem [shape: f32[1,384], index: 4, kind: input, shape index: {}]
  %s5 = inlined_call_operand.vmem [shape: f32[128,128], index: 5, kind: input, shape index: {}]
  %s6 = inlined_call_operand.vmem [shape: f32[1,128], index: 6, kind: input, shape index: {}]
  %s7 = inlined_call_operand.vmem [shape: f32[1,128], index: 7, kind: input, shape index: {}]
  %s8 = inlined_call_operand.vmem [shape: f32[1,128], index: 8, kind: input, shape index: {}]
  %s9 = inlined_call_operand.vmem [shape: f32[128,256], index: 9, kind: input, shape index: {}]
  %s10 = inlined_call_operand.vmem [shape: f32[1,256], index: 10, kind: input, shape index: {}]
  %s11 = inlined_call_operand.vmem [shape: f32[256,128], index: 11, kind: input, shape index: {}]
  %s12 = inlined_call_operand.hbm [shape: f32[1,128], index: 12, kind: input, shape index: {}]
  %s13 = inlined_call_operand.hbm [shape: f32[128,128], index: 13, kind: output, shape index: {}]
  %s14 = sld [smem:[#allocation0]]
  $region66: #{block_forward.1} parent=0
    _
  %s16 = ssub.s32 1, %s14
  %s17 = scalar_select 0, %s16, %s14
  $region1: #{block_forward.1} parent=0
    #allocation4 [shape = 'u8[512]{0}', space=vmem, size = 0x400, scoped, tag = 'input window, operand 12, single buffered']
    #allocation5 [shape = 's32[1]{0}', space=sflag, size = 0x4, scoped, tag = 'scoped memory for block_forward.1']
    #allocation6 [shape = 's32[1]{0}', space=sflag, size = 0x4, scoped, tag = 'scoped memory for block_forward.1']
    #allocation7 [shape = 'u8[65536]{0}', space=vmem, size = 0x10000, scoped, tag = 'output window, operand 0, single buffered']
    %18 = vsyncpa [#allocation5], 0
    %19 = vsyncpa [#allocation6], 0
    // Predicated region
    $region2: #{block_forward.1} parent=1 // pred_check
      _
    $region3: #{block_forward.1} parent=1 // pred_check_branch
      %21 = sbr.rel (0) target = $region5
    $region4: #{block_forward.1} parent=1 // pred_region
      _
    $region5: #{block_forward.1} parent=1 // pred_fallthru
      _
    // Predicated region
    $region6: #{block_forward.1} parent=1 // pred_check
      _
    $region7: #{block_forward.1} parent=1 // pred_check_branch
      %23 = sbr.rel (0) target = $region9
    $region8: #{block_forward.1} parent=1 // pred_region
      _
    $region9: #{block_forward.1} parent=1 // pred_fallthru
      _
    // Predicated region
    $region10: #{block_forward.1} parent=1 // pred_check
      _
    $region11: #{block_forward.1} parent=1 // pred_check_branch
      %25 = sbr.rel (0) target = $region13
    $region12: #{block_forward.1} parent=1 // pred_region
      _
    $region13: #{block_forward.1} parent=1 // pred_fallthru
      _
    // Predicated region
    $region14: #{block_forward.1} parent=1 // pred_check
      _
    $region15: #{block_forward.1} parent=1 // pred_check_branch
      %27 = sbr.rel (0) target = $region17
    $region16: #{block_forward.1} parent=1 // pred_region
      _
    $region17: #{block_forward.1} parent=1 // pred_fallthru
      _
    // Predicated region
    $region18: #{block_forward.1} parent=1 // pred_check
      _
    $region19: #{block_forward.1} parent=1 // pred_check_branch
      %29 = sbr.rel (0) target = $region21
    $region20: #{block_forward.1} parent=1 // pred_region
      _
    $region21: #{block_forward.1} parent=1 // pred_fallthru
      _
    // Predicated region
    $region22: #{block_forward.1} parent=1 // pred_check
      _
    $region23: #{block_forward.1} parent=1 // pred_check_branch
      %31 = sbr.rel (0) target = $region25
    $region24: #{block_forward.1} parent=1 // pred_region
      _
    $region25: #{block_forward.1} parent=1 // pred_fallthru
      _
    // Predicated region
    $region26: #{block_forward.1} parent=1 // pred_check
      _
    $region27: #{block_forward.1} parent=1 // pred_check_branch
      %33 = sbr.rel (0) target = $region29
    $region28: #{block_forward.1} parent=1 // pred_region
      _
    $region29: #{block_forward.1} parent=1 // pred_fallthru
      _
    // Predicated region
    $region30: #{block_forward.1} parent=1 // pred_check
      _
    $region31: #{block_forward.1} parent=1 // pred_check_branch
      %35 = sbr.rel (0) target = $region33
    $region32: #{block_forward.1} parent=1 // pred_region
      _
    $region33: #{block_forward.1} parent=1 // pred_fallthru
      _
    // Predicated region
    $region34: #{block_forward.1} parent=1 // pred_check
      _
    $region35: #{block_forward.1} parent=1 // pred_check_branch
      %37 = sbr.rel (0) target = $region37
    $region36: #{block_forward.1} parent=1 // pred_region
      _
    $region37: #{block_forward.1} parent=1 // pred_fallthru
      _
    // Predicated region
    $region38: #{block_forward.1} parent=1 // pred_check
      _
    $region39: #{block_forward.1} parent=1 // pred_check_branch
      %39 = sbr.rel (0) target = $region41
    $region40: #{block_forward.1} parent=1 // pred_region
      _
    $region41: #{block_forward.1} parent=1 // pred_fallthru
      _
    // Predicated region
    $region42: #{block_forward.1} parent=1 // pred_check
      _
    $region43: #{block_forward.1} parent=1 // pred_check_branch
      %41 = sbr.rel (0) target = $region45
    $region44: #{block_forward.1} parent=1 // pred_region
      _
    $region45: #{block_forward.1} parent=1 // pred_fallthru
      _
    // Predicated region
    $region46: #{block_forward.1} parent=1 // pred_check
      _
    $region47: #{block_forward.1} parent=1 // pred_check_branch
      %43 = sbr.rel (0) target = $region49
    $region48: #{block_forward.1} parent=1 // pred_region
      _
    $region49: #{block_forward.1} parent=1 // pred_fallthru
      _
    // Predicated region
    $region50: #{block_forward.1} parent=1 // pred_check
      _
    $region51: #{block_forward.1} parent=1 // pred_check_branch
      %45 = sbr.rel (0) target = $region53
    $region52: #{block_forward.1} parent=1 // pred_region
      %s47 = ssub.s32 16, 16
      %48 = vsyncadd [#allocation5], %s47
      %s50 = sshll.u32 [#allocation4], 4
      %s51 = int_to_ptr.vmem [resolvable:$true] %s50
      %53 = dma.hbm_to_vmem [thread:$0]  %s12, 16, %s51, [#allocation5]
    $region53: #{block_forward.1} parent=1 // pred_fallthru
      _
    // Predicated region
    $region54: #{block_forward.1} parent=1 // pred_check
      _
    $region55: #{block_forward.1} parent=1 // pred_check_branch
      %55 = sbr.rel (0) target = $region57
    $region56: #{block_forward.1} parent=1 // pred_region
      %56 = dma.done [#allocation5], 16
    $region57: #{block_forward.1} parent=1 // pred_fallthru
      _
    %v57 = vld [vmem:[%s0] sm:$0xff]
    %v58 = vld [vmem:[%s0 + $0x8] sm:$0xff]
    %v59 = vld [vmem:[%s0 + $0x10] sm:$0xff]
    %v60 = vld [vmem:[%s0 + $0x18] sm:$0xff]
    %v61 = vld [vmem:[%s0 + $0x20] sm:$0xff]
    %v62 = vld [vmem:[%s0 + $0x28] sm:$0xff]
    %v63 = vld [vmem:[%s0 + $0x30] sm:$0xff]
    %v64 = vld [vmem:[%s0 + $0x38] sm:$0xff]
    %v65 = vld [vmem:[%s0 + $0x40] sm:$0xff]
    %v66 = vld [vmem:[%s0 + $0x48] sm:$0xff]
    %v67 = vld [vmem:[%s0 + $0x50] sm:$0xff]
    %v68 = vld [vmem:[%s0 + $0x58] sm:$0xff]
    %v69 = vld [vmem:[%s0 + $0x60] sm:$0xff]
    %v70 = vld [vmem:[%s0 + $0x68] sm:$0xff]
    %v71 = vld [vmem:[%s0 + $0x70] sm:$0xff]
    %v72 = vld [vmem:[%s0 + $0x78] sm:$0xff]
    %v73 = vld [vmem:[%s1] sm:$0x1]
    %v74 = vld [vmem:[%s2] sm:$0x1]
    %75 = vadd.xlane.f32.xlu0 %v57
    %v76 = vpop.xlane.xlu0 %75
    %77 = vadd.xlane.f32.xlu0 %v58
    %v78 = vpop.xlane.xlu0 %77
    %79 = vadd.xlane.f32.xlu0 %v59
    %v80 = vpop.xlane.xlu0 %79
    %81 = vadd.xlane.f32.xlu0 %v60
    %v82 = vpop.xlane.xlu0 %81
    %83 = vadd.xlane.f32.xlu0 %v61
    %v84 = vpop.xlane.xlu0 %83
    %85 = vadd.xlane.f32.xlu0 %v62
    %v86 = vpop.xlane.xlu0 %85
    %87 = vadd.xlane.f32.xlu0 %v63
    %v88 = vpop.xlane.xlu0 %87
    %89 = vadd.xlane.f32.xlu0 %v64
    %v90 = vpop.xlane.xlu0 %89
    %91 = vadd.xlane.f32.xlu0 %v65
    %v92 = vpop.xlane.xlu0 %91
    %93 = vadd.xlane.f32.xlu0 %v66
    %v94 = vpop.xlane.xlu0 %93
    %95 = vadd.xlane.f32.xlu0 %v67
    %v96 = vpop.xlane.xlu0 %95
    %97 = vadd.xlane.f32.xlu0 %v68
    %v98 = vpop.xlane.xlu0 %97
    %99 = vadd.xlane.f32.xlu0 %v69
    %v100 = vpop.xlane.xlu0 %99
    %101 = vadd.xlane.f32.xlu0 %v70
    %v102 = vpop.xlane.xlu0 %101
    %103 = vadd.xlane.f32.xlu0 %v71
    %v104 = vpop.xlane.xlu0 %103
    %105 = vadd.xlane.f32.xlu0 %v72
    %v106 = vpop.xlane.xlu0 %105
    %v107 = vrcp.pop 128.0
    %v108 = vmul.f32 %v76, %v107
    %v109 = vmul.f32 %v78, %v107
    %v110 = vmul.f32 %v80, %v107
    %v111 = vmul.f32 %v82, %v107
    %v112 = vmul.f32 %v84, %v107
    %v113 = vmul.f32 %v86, %v107
    %v114 = vmul.f32 %v88, %v107
    %v115 = vmul.f32 %v90, %v107
    %v116 = vmul.f32 %v92, %v107
    %v117 = vmul.f32 %v94, %v107
    %v118 = vmul.f32 %v96, %v107
    %v119 = vmul.f32 %v98, %v107
    %v120 = vmul.f32 %v100, %v107
    %v121 = vmul.f32 %v102, %v107
    %v122 = vmul.f32 %v104, %v107
    %v123 = vmul.f32 %v106, %v107
    %v124 = vsub.f32 %v57, %v108
    %v125 = vsub.f32 %v58, %v109
    %v126 = vsub.f32 %v59, %v110
    %v127 = vsub.f32 %v60, %v111
    %v128 = vsub.f32 %v61, %v112
    %v129 = vsub.f32 %v62, %v113
    %v130 = vsub.f32 %v63, %v114
    %v131 = vsub.f32 %v64, %v115
    %v132 = vsub.f32 %v65, %v116
    %v133 = vsub.f32 %v66, %v117
    %v134 = vsub.f32 %v67, %v118
    %v135 = vsub.f32 %v68, %v119
    %v136 = vsub.f32 %v69, %v120
    %v137 = vsub.f32 %v70, %v121
    %v138 = vsub.f32 %v71, %v122
    %v139 = vsub.f32 %v72, %v123
    %v140 = vmul.f32 %v124, %v124
    %v141 = vmul.f32 %v125, %v125
    %v142 = vmul.f32 %v126, %v126
    %v143 = vmul.f32 %v127, %v127
    %v144 = vmul.f32 %v128, %v128
    %v145 = vmul.f32 %v129, %v129
    %v146 = vmul.f32 %v130, %v130
    %v147 = vmul.f32 %v131, %v131
    %v148 = vmul.f32 %v132, %v132
    %v149 = vmul.f32 %v133, %v133
    %v150 = vmul.f32 %v134, %v134
    %v151 = vmul.f32 %v135, %v135
    %v152 = vmul.f32 %v136, %v136
    %v153 = vmul.f32 %v137, %v137
    %v154 = vmul.f32 %v138, %v138
    %v155 = vmul.f32 %v139, %v139
    %156 = vadd.xlane.f32.xlu0 %v140
    %v157 = vpop.xlane.xlu0 %156
    %158 = vadd.xlane.f32.xlu0 %v141
    %v159 = vpop.xlane.xlu0 %158
    %160 = vadd.xlane.f32.xlu0 %v142
    %v161 = vpop.xlane.xlu0 %160
    %162 = vadd.xlane.f32.xlu0 %v143
    %v163 = vpop.xlane.xlu0 %162
    %164 = vadd.xlane.f32.xlu0 %v144
    %v165 = vpop.xlane.xlu0 %164
    %166 = vadd.xlane.f32.xlu0 %v145
    %v167 = vpop.xlane.xlu0 %166
    %168 = vadd.xlane.f32.xlu0 %v146
    %v169 = vpop.xlane.xlu0 %168
    %170 = vadd.xlane.f32.xlu0 %v147
    %v171 = vpop.xlane.xlu0 %170
    %172 = vadd.xlane.f32.xlu0 %v148
    %v173 = vpop.xlane.xlu0 %172
    %174 = vadd.xlane.f32.xlu0 %v149
    %v175 = vpop.xlane.xlu0 %174
    %176 = vadd.xlane.f32.xlu0 %v150
    %v177 = vpop.xlane.xlu0 %176
    %178 = vadd.xlane.f32.xlu0 %v151
    %v179 = vpop.xlane.xlu0 %178
    %180 = vadd.xlane.f32.xlu0 %v152
    %v181 = vpop.xlane.xlu0 %180
    %182 = vadd.xlane.f32.xlu0 %v153
    %v183 = vpop.xlane.xlu0 %182
    %184 = vadd.xlane.f32.xlu0 %v154
    %v185 = vpop.xlane.xlu0 %184
    %186 = vadd.xlane.f32.xlu0 %v155
    %v187 = vpop.xlane.xlu0 %186
    %v188 = vmul.f32 %v157, %v107
    %v189 = vmul.f32 %v159, %v107
    %v190 = vmul.f32 %v161, %v107
    %v191 = vmul.f32 %v163, %v107
    %v192 = vmul.f32 %v165, %v107
    %v193 = vmul.f32 %v167, %v107
    %v194 = vmul.f32 %v169, %v107
    %v195 = vmul.f32 %v171, %v107
    %v196 = vmul.f32 %v173, %v107
    %v197 = vmul.f32 %v175, %v107
    %v198 = vmul.f32 %v177, %v107
    %v199 = vmul.f32 %v179, %v107
    %v200 = vmul.f32 %v181, %v107
    %v201 = vmul.f32 %v183, %v107
    %v202 = vmul.f32 %v185, %v107
    %v203 = vmul.f32 %v187, %v107
    %v204 = vadd.f32 %v188, 1e-06
    %v205 = vadd.f32 %v189, 1e-06
    %v206 = vadd.f32 %v190, 1e-06
    %v207 = vadd.f32 %v191, 1e-06
    %v208 = vadd.f32 %v192, 1e-06
    %v209 = vadd.f32 %v193, 1e-06
    %v210 = vadd.f32 %v194, 1e-06
    %v211 = vadd.f32 %v195, 1e-06
    %v212 = vadd.f32 %v196, 1e-06
    %v213 = vadd.f32 %v197, 1e-06
    %v214 = vadd.f32 %v198, 1e-06
    %v215 = vadd.f32 %v199, 1e-06
    %v216 = vadd.f32 %v200, 1e-06
    %v217 = vadd.f32 %v201, 1e-06
    %v218 = vadd.f32 %v202, 1e-06
    %v219 = vadd.f32 %v203, 1e-06
    %v220 = vrsqrt.pop %v204
    %v221 = vrsqrt.pop %v205
    %v222 = vrsqrt.pop %v206
    %v223 = vrsqrt.pop %v207
    %v224 = vrsqrt.pop %v208
    %v225 = vrsqrt.pop %v209
    %v226 = vrsqrt.pop %v210
    %v227 = vrsqrt.pop %v211
    %v228 = vrsqrt.pop %v212
    %v229 = vrsqrt.pop %v213
    %v230 = vrsqrt.pop %v214
    %v231 = vrsqrt.pop %v215
    %v232 = vrsqrt.pop %v216
    %v233 = vrsqrt.pop %v217
    %v234 = vrsqrt.pop %v218
    %v235 = vrsqrt.pop %v219
    %v236 = vmul.f32 %v124, %v220
    %v237 = vmul.f32 %v125, %v221
    %v238 = vmul.f32 %v126, %v222
    %v239 = vmul.f32 %v127, %v223
    %v240 = vmul.f32 %v128, %v224
    %v241 = vmul.f32 %v129, %v225
    %v242 = vmul.f32 %v130, %v226
    %v243 = vmul.f32 %v131, %v227
    %v244 = vmul.f32 %v132, %v228
    %v245 = vmul.f32 %v133, %v229
    %v246 = vmul.f32 %v134, %v230
    %v247 = vmul.f32 %v135, %v231
    %v248 = vmul.f32 %v136, %v232
    %v249 = vmul.f32 %v137, %v233
    %v250 = vmul.f32 %v138, %v234
    %v251 = vmul.f32 %v139, %v235
    %v253 = vlaneseq
    %v254 = vshrl.u32 %v253, 7
    %v255 = vsub.s32 0, %v254
    %v256 = vrot.slane %v73, %v255
    %v258 = vmul.f32 %v236, %v256
    %v259 = vmul.f32 %v237, %v256
    %v260 = vmul.f32 %v238, %v256
    %v261 = vmul.f32 %v239, %v256
    %v262 = vmul.f32 %v240, %v256
    %v263 = vmul.f32 %v241, %v256
    %v264 = vmul.f32 %v242, %v256
    %v265 = vmul.f32 %v243, %v256
    %v266 = vmul.f32 %v244, %v256
    %v267 = vmul.f32 %v245, %v256
    %v268 = vmul.f32 %v246, %v256
    %v269 = vmul.f32 %v247, %v256
    %v270 = vmul.f32 %v248, %v256
    %v271 = vmul.f32 %v249, %v256
    %v272 = vmul.f32 %v250, %v256
    %v273 = vmul.f32 %v251, %v256
    %v275 = vlaneseq
    %v276 = vshrl.u32 %v275, 7
    %v277 = vsub.s32 0, %v276
    %v278 = vrot.slane %v74, %v277
    %v280 = vadd.f32 %v258, %v278
    %v281 = vadd.f32 %v259, %v278
    %v282 = vadd.f32 %v260, %v278
    %v283 = vadd.f32 %v261, %v278
    %v284 = vadd.f32 %v262, %v278
    %v285 = vadd.f32 %v263, %v278
    %v286 = vadd.f32 %v264, %v278
    %v287 = vadd.f32 %v265, %v278
    %v288 = vadd.f32 %v266, %v278
    %v289 = vadd.f32 %v267, %v278
    %v290 = vadd.f32 %v268, %v278
    %v291 = vadd.f32 %v269, %v278
    %v292 = vadd.f32 %v270, %v278
    %v293 = vadd.f32 %v271, %v278
    %v294 = vadd.f32 %v272, %v278
    %v295 = vadd.f32 %v273, %v278
    %v296 = vld [vmem:[%s3] sm:$0xff]
    %v297 = vld [vmem:[%s3 + $0x8] sm:$0xff]
    %v298 = vld [vmem:[%s3 + $0x10] sm:$0xff]
    %v299 = vld [vmem:[%s3 + $0x18] sm:$0xff]
    %v300 = vld [vmem:[%s3 + $0x20] sm:$0xff]
    %v301 = vld [vmem:[%s3 + $0x28] sm:$0xff]
    %v302 = vld [vmem:[%s3 + $0x30] sm:$0xff]
    %v303 = vld [vmem:[%s3 + $0x38] sm:$0xff]
    %v304 = vld [vmem:[%s3 + $0x40] sm:$0xff]
    %v305 = vld [vmem:[%s3 + $0x48] sm:$0xff]
    %v306 = vld [vmem:[%s3 + $0x50] sm:$0xff]
    %v307 = vld [vmem:[%s3 + $0x58] sm:$0xff]
    %v308 = vld [vmem:[%s3 + $0x60] sm:$0xff]
    %v309 = vld [vmem:[%s3 + $0x68] sm:$0xff]
    %v310 = vld [vmem:[%s3 + $0x70] sm:$0xff]
    %v311 = vld [vmem:[%s3 + $0x78] sm:$0xff]
    %v312 = vld [vmem:[%s3 + $0x80] sm:$0xff]
    %v313 = vld [vmem:[%s3 + $0x88] sm:$0xff]
    %v314 = vld [vmem:[%s3 + $0x90] sm:$0xff]
    %v315 = vld [vmem:[%s3 + $0x98] sm:$0xff]
    %v316 = vld [vmem:[%s3 + $0xa0] sm:$0xff]
    %v317 = vld [vmem:[%s3 + $0xa8] sm:$0xff]
    %v318 = vld [vmem:[%s3 + $0xb0] sm:$0xff]
    %v319 = vld [vmem:[%s3 + $0xb8] sm:$0xff]
    %v320 = vld [vmem:[%s3 + $0xc0] sm:$0xff]
    %v321 = vld [vmem:[%s3 + $0xc8] sm:$0xff]
    %v322 = vld [vmem:[%s3 + $0xd0] sm:$0xff]
    %v323 = vld [vmem:[%s3 + $0xd8] sm:$0xff]
    %v324 = vld [vmem:[%s3 + $0xe0] sm:$0xff]
    %v325 = vld [vmem:[%s3 + $0xe8] sm:$0xff]
    %v326 = vld [vmem:[%s3 + $0xf0] sm:$0xff]
    %v327 = vld [vmem:[%s3 + $0xf8] sm:$0xff]
    %v328 = vld [vmem:[%s3 + $0x100] sm:$0xff]
    %v329 = vld [vmem:[%s3 + $0x108] sm:$0xff]
    %v330 = vld [vmem:[%s3 + $0x110] sm:$0xff]
    %v331 = vld [vmem:[%s3 + $0x118] sm:$0xff]
    %v332 = vld [vmem:[%s3 + $0x120] sm:$0xff]
    %v333 = vld [vmem:[%s3 + $0x128] sm:$0xff]
    %v334 = vld [vmem:[%s3 + $0x130] sm:$0xff]
    %v335 = vld [vmem:[%s3 + $0x138] sm:$0xff]
    %v336 = vld [vmem:[%s3 + $0x140] sm:$0xff]
    %v337 = vld [vmem:[%s3 + $0x148] sm:$0xff]
    %v338 = vld [vmem:[%s3 + $0x150] sm:$0xff]
    %v339 = vld [vmem:[%s3 + $0x158] sm:$0xff]
    %v340 = vld [vmem:[%s3 + $0x160] sm:$0xff]
    %v341 = vld [vmem:[%s3 + $0x168] sm:$0xff]
    %v342 = vld [vmem:[%s3 + $0x170] sm:$0xff]
    %v343 = vld [vmem:[%s3 + $0x178] sm:$0xff]
    %v344 = vld [vmem:[%s4] sm:$0x7]
    %v346 = vlaneseq
    %v347 = vshrl.u32 %v346, 7
    %v348 = vsub.s32 0, %v347
    %v349 = vrot.slane %v344, %v348
    %v350 = vlaneseq
    %v351 = vshrl.u32 %v350, 7
    %v352 = vsub.s32 1, %v351
    %v353 = vrot.slane %v344, %v352
    %v354 = vlaneseq
    %v355 = vshrl.u32 %v354, 7
    %v356 = vsub.s32 2, %v355
    %v357 = vrot.slane %v344, %v356
    %361 = vmatprep.subr.mxu0 %v297
    %362 = vmatpush1.msra.mxu0 %v296
    %363 = vmatprep.subr.mxu0 %v300
    %364 = vmatpush1.msra.mxu0 %v299
    %365 = vmatprep.subr.mxu0 %v303
    %366 = vmatpush1.msra.mxu0 %v302
    %367 = vmatprep.subr.mxu0 %v306
    %368 = vmatpush1.msra.mxu0 %v305
    %369 = vmatprep.subr.mxu0 %v309
    %370 = vmatpush1.msra.mxu0 %v308
    %371 = vmatprep.subr.mxu0 %v312
    %372 = vmatpush1.msra.mxu0 %v311
    %373 = vmatprep.subr.mxu0 %v315
    %374 = vmatpush1.msra.mxu0 %v314
    %375 = vmatprep.subr.mxu0 %v318
    %376 = vmatpush1.msra.mxu0 %v317
    %377 = vmatprep.subr.mxu0 %v321
    %378 = vmatpush1.msra.mxu0 %v320
    %379 = vmatprep.subr.mxu0 %v324
    %380 = vmatpush1.msra.mxu0 %v323
    %381 = vmatprep.subr.mxu0 %v327
    %382 = vmatpush1.msra.mxu0 %v326
    %383 = vmatprep.subr.mxu0 %v330
    %384 = vmatpush1.msra.mxu0 %v329
    %385 = vmatprep.subr.mxu0 %v333
    %386 = vmatpush1.msra.mxu0 %v332
    %387 = vmatprep.subr.mxu0 %v336
    %388 = vmatpush1.msra.mxu0 %v335
    %389 = vmatprep.subr.mxu0 %v339
    %390 = vmatpush1.msra.mxu0 %v338
    %391 = vmatprep.subr.mxu0 %v342
    %392 = vmatpush1.msra.mxu0 %v341
    %393 = vmatprep.subr.mxu0 0.0
    %394 = vmatpush1.msra.mxu0 0.0
    %395 = vmatprep.subr.mxu0 0.0
    %396 = vmatpush1.msra.mxu0 0.0
    %397 = vmatprep.subr.mxu0 0.0
    %398 = vmatpush1.msra.mxu0 0.0
    %399 = vmatprep.subr.mxu0 0.0
    %400 = vmatpush1.msra.mxu0 0.0
    %401 = vmatprep.subr.mxu0 0.0
    %402 = vmatpush1.msra.mxu0 0.0
    %403 = vmatprep.subr.mxu0 0.0
    %404 = vmatpush1.msra.mxu0 0.0
    %405 = vmatprep.subr.mxu0 0.0
    %406 = vmatpush1.msra.mxu0 0.0
    %407 = vmatprep.subr.mxu0 0.0
    %408 = vmatpush1.msra.mxu0 0.0
    %409 = vmatprep.subr.mxu0 0.0
    %410 = vmatpush1.msra.mxu0 0.0
    %411 = vmatprep.subr.mxu0 0.0
    %412 = vmatpush1.msra.mxu0 0.0
    %413 = vmatprep.subr.mxu0 0.0
    %414 = vmatpush1.msra.mxu0 0.0
    %415 = vmatprep.subr.mxu0 0.0
    %416 = vmatpush1.msra.mxu0 0.0
    %417 = vmatprep.subr.mxu0 0.0
    %418 = vmatpush1.msra.mxu0 0.0
    %419 = vmatprep.subr.mxu0 0.0
    %420 = vmatpush1.msra.mxu0 0.0
    %421 = vmatprep.subr.mxu0 0.0
    %422 = vmatpush1.msra.mxu0 0.0
    %423 = vmatprep.subr.mxu0 0.0
    %424 = vmatpush1.msra.mxu0 0.0
    %425 = vmatprep.mubr.f32.mxu0 0.0
    %426 = vmatmul.mubr.f32.gmra.mrb[0].mxu0 %v280
    %v427 = vpop.f32.mrb[0].mxu0
    %v428 = vadd.f32 %v349, %v427
    %v429 = vpop.f32.mrb[0].mxu0
    %v430 = vadd.f32 %v353, %v429
    %431 = vmatprep.mubr.f32.mxu0 0.0
    %432 = vmatmul.mubr.f32.gmra.mrb[0].mxu0 %v281
    %v433 = vpop.f32.mrb[0].mxu0
    %v434 = vadd.f32 %v349, %v433
    %v435 = vpop.f32.mrb[0].mxu0
    %v436 = vadd.f32 %v353, %v435
    %437 = vmatprep.mubr.f32.mxu0 0.0
    %438 = vmatmul.mubr.f32.gmra.mrb[0].mxu0 %v282
    %v439 = vpop.f32.mrb[0].mxu0
    %v440 = vadd.f32 %v349, %v439
    %v441 = vpop.f32.mrb[0].mxu0
    %v442 = vadd.f32 %v353, %v441
    %443 = vmatprep.mubr.f32.mxu0 0.0
    %444 = vmatmul.mubr.f32.gmra.mrb[0].mxu0 %v283
    %v445 = vpop.f32.mrb[0].mxu0
    %v446 = vadd.f32 %v349, %v445
    %v447 = vpop.f32.mrb[0].mxu0
    %v448 = vadd.f32 %v353, %v447
    %449 = vmatprep.mubr.f32.mxu0 0.0
    %450 = vmatmul.mubr.f32.gmra.mrb[0].mxu0 %v284
    %v451 = vpop.f32.mrb[0].mxu0
    %v452 = vadd.f32 %v349, %v451
    %v453 = vpop.f32.mrb[0].mxu0
    %v454 = vadd.f32 %v353, %v453
    %455 = vmatprep.mubr.f32.mxu0 0.0
    %456 = vmatmul.mubr.f32.gmra.mrb[0].mxu0 %v285
    %v457 = vpop.f32.mrb[0].mxu0
    %v458 = vadd.f32 %v349, %v457
    %v459 = vpop.f32.mrb[0].mxu0
    %v460 = vadd.f32 %v353, %v459
    %461 = vmatprep.mubr.f32.mxu0 0.0
    %462 = vmatmul.mubr.f32.gmra.mrb[0].mxu0 %v286
    %v463 = vpop.f32.mrb[0].mxu0
    %v464 = vadd.f32 %v349, %v463
    %v465 = vpop.f32.mrb[0].mxu0
    %v466 = vadd.f32 %v353, %v465
    %467 = vmatprep.mubr.f32.mxu0 0.0
    %468 = vmatmul.mubr.f32.gmra.mrb[0].mxu0 %v287
    %v469 = vpop.f32.mrb[0].mxu0
    %v470 = vadd.f32 %v349, %v469
    %v471 = vpop.f32.mrb[0].mxu0
    %v472 = vadd.f32 %v353, %v471
    %473 = vmatprep.mubr.f32.mxu0 0.0
    %474 = vmatmul.mubr.f32.gmra.mrb[0].mxu0 %v288
    %v475 = vpop.f32.mrb[0].mxu0
    %v476 = vadd.f32 %v349, %v475
    %v477 = vpop.f32.mrb[0].mxu0
    %v478 = vadd.f32 %v353, %v477
    %479 = vmatprep.mubr.f32.mxu0 0.0
    %480 = vmatmul.mubr.f32.gmra.mrb[0].mxu0 %v289
    %v481 = vpop.f32.mrb[0].mxu0
    %v482 = vadd.f32 %v349, %v481
    %v483 = vpop.f32.mrb[0].mxu0
    %v484 = vadd.f32 %v353, %v483
    %485 = vmatprep.mubr.f32.mxu0 0.0
    %486 = vmatmul.mubr.f32.gmra.mrb[0].mxu0 %v290
    %v487 = vpop.f32.mrb[0].mxu0
    %v488 = vadd.f32 %v349, %v487
    %v489 = vpop.f32.mrb[0].mxu0
    %v490 = vadd.f32 %v353, %v489
    %491 = vmatprep.mubr.f32.mxu0 0.0
    %492 = vmatmul.mubr.f32.gmra.mrb[0].mxu0 %v291
    %v493 = vpop.f32.mrb[0].mxu0
    %v494 = vadd.f32 %v349, %v493
    %v495 = vpop.f32.mrb[0].mxu0
    %v496 = vadd.f32 %v353, %v495
    %497 = vmatprep.mubr.f32.mxu0 0.0
    %498 = vmatmul.mubr.f32.gmra.mrb[0].mxu0 %v292
    %v499 = vpop.f32.mrb[0].mxu0
    %v500 = vadd.f32 %v349, %v499
    %v501 = vpop.f32.mrb[0].mxu0
    %v502 = vadd.f32 %v353, %v501
    %503 = vmatprep.mubr.f32.mxu0 0.0
    %504 = vmatmul.mubr.f32.gmra.mrb[0].mxu0 %v293
    %v505 = vpop.f32.mrb[0].mxu0
    %v506 = vadd.f32 %v349, %v505
    %v507 = vpop.f32.mrb[0].mxu0
    %v508 = vadd.f32 %v353, %v507
    %509 = vmatprep.mubr.f32.mxu0 0.0
    %510 = vmatmul.mubr.f32.gmra.mrb[0].mxu0 %v294
    %v511 = vpop.f32.mrb[0].mxu0
    %v512 = vadd.f32 %v349, %v511
    %v513 = vpop.f32.mrb[0].mxu0
    %v514 = vadd.f32 %v353, %v513
    %515 = vmatprep.mubr.f32.mxu0 0.0
    %516 = vmatmul.mubr.f32.gmra.mrb[0].mxu0 %v295
    %v517 = vpop.f32.mrb[0].mxu0
    %v518 = vadd.f32 %v349, %v517
    %v519 = vpop.f32.mrb[0].mxu0
    %v520 = vadd.f32 %v353, %v519
    %521 = vdwg.mxu0
    %522 = vmatprep.subr.mxu0 0.0
    %523 = vmatpush1.msra.mxu0 %v298
    %524 = vmatprep.subr.mxu0 0.0
    %525 = vmatpush1.msra.mxu0 %v301
    %526 = vmatprep.subr.mxu0 0.0
    %527 = vmatpush1.msra.mxu0 %v304
    %528 = vmatprep.subr.mxu0 0.0
    %529 = vmatpush1.msra.mxu0 %v307
    %530 = vmatprep.subr.mxu0 0.0
    %531 = vmatpush1.msra.mxu0 %v310
    %532 = vmatprep.subr.mxu0 0.0
    %533 = vmatpush1.msra.mxu0 %v313
    %534 = vmatprep.subr.mxu0 0.0
    %535 = vmatpush1.msra.mxu0 %v316
    %536 = vmatprep.subr.mxu0 0.0
    %537 = vmatpush1.msra.mxu0 %v319
    %538 = vmatprep.subr.mxu0 0.0
    %539 = vmatpush1.msra.mxu0 %v322
    %540 = vmatprep.subr.mxu0 0.0
    %541 = vmatpush1.msra.mxu0 %v325
    %542 = vmatprep.subr.mxu0 0.0
    %543 = vmatpush1.msra.mxu0 %v328
    %544 = vmatprep.subr.mxu0 0.0
    %545 = vmatpush1.msra.mxu0 %v331
    %546 = vmatprep.subr.mxu0 0.0
    %547 = vmatpush1.msra.mxu0 %v334
    %548 = vmatprep.subr.mxu0 0.0
    %549 = vmatpush1.msra.mxu0 %v337
    %550 = vmatprep.subr.mxu0 0.0
    %551 = vmatpush1.msra.mxu0 %v340
    %552 = vmatprep.subr.mxu0 0.0
    %553 = vmatpush1.msra.mxu0 %v343
    %554 = vmatprep.subr.mxu0 0.0
    %555 = vmatpush1.msra.mxu0 0.0
    %556 = vmatprep.subr.mxu0 0.0
    %557 = vmatpush1.msra.mxu0 0.0
    %558 = vmatprep.subr.mxu0 0.0
    %559 = vmatpush1.msra.mxu0 0.0
    %560 = vmatprep.subr.mxu0 0.0
    %561 = vmatpush1.msra.mxu0 0.0
    %562 = vmatprep.subr.mxu0 0.0
    %563 = vmatpush1.msra.mxu0 0.0
    %564 = vmatprep.subr.mxu0 0.0
    %565 = vmatpush1.msra.mxu0 0.0
    %566 = vmatprep.subr.mxu0 0.0
    %567 = vmatpush1.msra.mxu0 0.0
    %568 = vmatprep.subr.mxu0 0.0
    %569 = vmatpush1.msra.mxu0 0.0
    %570 = vmatprep.subr.mxu0 0.0
    %571 = vmatpush1.msra.mxu0 0.0
    %572 = vmatprep.subr.mxu0 0.0
    %573 = vmatpush1.msra.mxu0 0.0
    %574 = vmatprep.subr.mxu0 0.0
    %575 = vmatpush1.msra.mxu0 0.0
    %576 = vmatprep.subr.mxu0 0.0
    %577 = vmatpush1.msra.mxu0 0.0
    %578 = vmatprep.subr.mxu0 0.0
    %579 = vmatpush1.msra.mxu0 0.0
    %580 = vmatprep.subr.mxu0 0.0
    %581 = vmatpush1.msra.mxu0 0.0
    %582 = vmatprep.subr.mxu0 0.0
    %583 = vmatpush1.msra.mxu0 0.0
    %584 = vmatprep.subr.mxu0 0.0
    %585 = vmatpush1.msra.mxu0 0.0
    %586 = vmatprep.mubr.f32.mxu0 0.0
    %587 = vmatmul.mubr.f32.gmra.mrb[0].mxu0 %v280
    %v588 = vpop.f32.mrb[0].mxu0
    %v589 = vadd.f32 %v357, %v588
    %v590 = vpop.f32.mrb[0].mxu0
    %591 = vmatprep.mubr.f32.mxu0 0.0
    %592 = vmatmul.mubr.f32.gmra.mrb[0].mxu0 %v281
    %v593 = vpop.f32.mrb[0].mxu0
    %v594 = vadd.f32 %v357, %v593
    %v595 = vpop.f32.mrb[0].mxu0
    %596 = vmatprep.mubr.f32.mxu0 0.0
    %597 = vmatmul.mubr.f32.gmra.mrb[0].mxu0 %v282
    %v598 = vpop.f32.mrb[0].mxu0
    %v599 = vadd.f32 %v357, %v598
    %v600 = vpop.f32.mrb[0].mxu0
    %601 = vmatprep.mubr.f32.mxu0 0.0
    %602 = vmatmul.mubr.f32.gmra.mrb[0].mxu0 %v283
    %v603 = vpop.f32.mrb[0].mxu0
    %v604 = vadd.f32 %v357, %v603
    %v605 = vpop.f32.mrb[0].mxu0
    %606 = vmatprep.mubr.f32.mxu0 0.0
    %607 = vmatmul.mubr.f32.gmra.mrb[0].mxu0 %v284
    %v608 = vpop.f32.mrb[0].mxu0
    %v609 = vadd.f32 %v357, %v608
    %v610 = vpop.f32.mrb[0].mxu0
    %611 = vmatprep.mubr.f32.mxu0 0.0
    %612 = vmatmul.mubr.f32.gmra.mrb[0].mxu0 %v285
    %v613 = vpop.f32.mrb[0].mxu0
    %v614 = vadd.f32 %v357, %v613
    %v615 = vpop.f32.mrb[0].mxu0
    %616 = vmatprep.mubr.f32.mxu0 0.0
    %617 = vmatmul.mubr.f32.gmra.mrb[0].mxu0 %v286
    %v618 = vpop.f32.mrb[0].mxu0
    %v619 = vadd.f32 %v357, %v618
    %v620 = vpop.f32.mrb[0].mxu0
    %621 = vmatprep.mubr.f32.mxu0 0.0
    %622 = vmatmul.mubr.f32.gmra.mrb[0].mxu0 %v287
    %v623 = vpop.f32.mrb[0].mxu0
    %v624 = vadd.f32 %v357, %v623
    %v625 = vpop.f32.mrb[0].mxu0
    %626 = vmatprep.mubr.f32.mxu0 0.0
    %627 = vmatmul.mubr.f32.gmra.mrb[0].mxu0 %v288
    %v628 = vpop.f32.mrb[0].mxu0
    %v629 = vadd.f32 %v357, %v628
    %v630 = vpop.f32.mrb[0].mxu0
    %631 = vmatprep.mubr.f32.mxu0 0.0
    %632 = vmatmul.mubr.f32.gmra.mrb[0].mxu0 %v289
    %v633 = vpop.f32.mrb[0].mxu0
    %v634 = vadd.f32 %v357, %v633
    %v635 = vpop.f32.mrb[0].mxu0
    %636 = vmatprep.mubr.f32.mxu0 0.0
    %637 = vmatmul.mubr.f32.gmra.mrb[0].mxu0 %v290
    %v638 = vpop.f32.mrb[0].mxu0
    %v639 = vadd.f32 %v357, %v638
    %v640 = vpop.f32.mrb[0].mxu0
    %641 = vmatprep.mubr.f32.mxu0 0.0
    %642 = vmatmul.mubr.f32.gmra.mrb[0].mxu0 %v291
    %v643 = vpop.f32.mrb[0].mxu0
    %v644 = vadd.f32 %v357, %v643
    %v645 = vpop.f32.mrb[0].mxu0
    %646 = vmatprep.mubr.f32.mxu0 0.0
    %647 = vmatmul.mubr.f32.gmra.mrb[0].mxu0 %v292
    %v648 = vpop.f32.mrb[0].mxu0
    %v649 = vadd.f32 %v357, %v648
    %v650 = vpop.f32.mrb[0].mxu0
    %651 = vmatprep.mubr.f32.mxu0 0.0
    %652 = vmatmul.mubr.f32.gmra.mrb[0].mxu0 %v293
    %v653 = vpop.f32.mrb[0].mxu0
    %v654 = vadd.f32 %v357, %v653
    %v655 = vpop.f32.mrb[0].mxu0
    %656 = vmatprep.mubr.f32.mxu0 0.0
    %657 = vmatmul.mubr.f32.gmra.mrb[0].mxu0 %v294
    %v658 = vpop.f32.mrb[0].mxu0
    %v659 = vadd.f32 %v357, %v658
    %v660 = vpop.f32.mrb[0].mxu0
    %661 = vmatprep.mubr.f32.mxu0 0.0
    %662 = vmatmul.mubr.f32.gmra.mrb[0].mxu0 %v295
    %v663 = vpop.f32.mrb[0].mxu0
    %v664 = vadd.f32 %v357, %v663
    %v665 = vpop.f32.mrb[0].mxu0
    %666 = vdwg.mxu0
    %667 = vst [vmem:[#allocation2] sm:$0xff] %v428
    %668 = vst [vmem:[#allocation2 + $0x8] sm:$0xff] %v430
    %669 = vst [vmem:[#allocation2 + $0x10] sm:$0xff] %v589
    %670 = vst [vmem:[#allocation2 + $0x18] sm:$0xff] %v434
    %671 = vst [vmem:[#allocation2 + $0x20] sm:$0xff] %v436
    %672 = vst [vmem:[#allocation2 + $0x28] sm:$0xff] %v594
    %673 = vst [vmem:[#allocation2 + $0x30] sm:$0xff] %v440
    %674 = vst [vmem:[#allocation2 + $0x38] sm:$0xff] %v442
    %675 = vst [vmem:[#allocation2 + $0x40] sm:$0xff] %v599
    %676 = vst [vmem:[#allocation2 + $0x48] sm:$0xff] %v446
    %677 = vst [vmem:[#allocation2 + $0x50] sm:$0xff] %v448
    %678 = vst [vmem:[#allocation2 + $0x58] sm:$0xff] %v604
    %679 = vst [vmem:[#allocation2 + $0x60] sm:$0xff] %v452
    %680 = vst [vmem:[#allocation2 + $0x68] sm:$0xff] %v454
    %681 = vst [vmem:[#allocation2 + $0x70] sm:$0xff] %v609
    %682 = vst [vmem:[#allocation2 + $0x78] sm:$0xff] %v458
    %683 = vst [vmem:[#allocation2 + $0x80] sm:$0xff] %v460
    %684 = vst [vmem:[#allocation2 + $0x88] sm:$0xff] %v614
    %685 = vst [vmem:[#allocation2 + $0x90] sm:$0xff] %v464
    %686 = vst [vmem:[#allocation2 + $0x98] sm:$0xff] %v466
    %687 = vst [vmem:[#allocation2 + $0xa0] sm:$0xff] %v619
    %688 = vst [vmem:[#allocation2 + $0xa8] sm:$0xff] %v470
    %689 = vst [vmem:[#allocation2 + $0xb0] sm:$0xff] %v472
    %690 = vst [vmem:[#allocation2 + $0xb8] sm:$0xff] %v624
    %691 = vst [vmem:[#allocation2 + $0xc0] sm:$0xff] %v476
    %692 = vst [vmem:[#allocation2 + $0xc8] sm:$0xff] %v478
    %693 = vst [vmem:[#allocation2 + $0xd0] sm:$0xff] %v629
    %694 = vst [vmem:[#allocation2 + $0xd8] sm:$0xff] %v482
    %695 = vst [vmem:[#allocation2 + $0xe0] sm:$0xff] %v484
    %696 = vst [vmem:[#allocation2 + $0xe8] sm:$0xff] %v634
    %697 = vst [vmem:[#allocation2 + $0xf0] sm:$0xff] %v488
    %698 = vst [vmem:[#allocation2 + $0xf8] sm:$0xff] %v490
    %699 = vst [vmem:[#allocation2 + $0x100] sm:$0xff] %v639
    %700 = vst [vmem:[#allocation2 + $0x108] sm:$0xff] %v494
    %701 = vst [vmem:[#allocation2 + $0x110] sm:$0xff] %v496
    %702 = vst [vmem:[#allocation2 + $0x118] sm:$0xff] %v644
    %703 = vst [vmem:[#allocation2 + $0x120] sm:$0xff] %v500
    %704 = vst [vmem:[#allocation2 + $0x128] sm:$0xff] %v502
    %705 = vst [vmem:[#allocation2 + $0x130] sm:$0xff] %v649
    %706 = vst [vmem:[#allocation2 + $0x138] sm:$0xff] %v506
    %707 = vst [vmem:[#allocation2 + $0x140] sm:$0xff] %v508
    %708 = vst [vmem:[#allocation2 + $0x148] sm:$0xff] %v654
    %709 = vst [vmem:[#allocation2 + $0x150] sm:$0xff] %v512
    %710 = vst [vmem:[#allocation2 + $0x158] sm:$0xff] %v514
    %711 = vst [vmem:[#allocation2 + $0x160] sm:$0xff] %v659
    %712 = vst [vmem:[#allocation2 + $0x168] sm:$0xff] %v518
    %713 = vst [vmem:[#allocation2 + $0x170] sm:$0xff] %v520
    %714 = vst [vmem:[#allocation2 + $0x178] sm:$0xff] %v664
    %v715 = vld [vmem:[#allocation2] sm:$0xff]
    %v716 = vld [vmem:[#allocation2 + $0x18] sm:$0xff]
    %v717 = vld [vmem:[#allocation2 + $0x30] sm:$0xff]
    %v718 = vld [vmem:[#allocation2 + $0x48] sm:$0xff]
    %v719 = vld [vmem:[#allocation2 + $0x60] sm:$0xff]
    %v720 = vld [vmem:[#allocation2 + $0x78] sm:$0xff]
    %v721 = vld [vmem:[#allocation2 + $0x90] sm:$0xff]
    %v722 = vld [vmem:[#allocation2 + $0xa8] sm:$0xff]
    %v723 = vld [vmem:[#allocation2 + $0x8] sm:$0xff]
    %v724 = vld [vmem:[#allocation2 + $0x20] sm:$0xff]
    %v725 = vld [vmem:[#allocation2 + $0x38] sm:$0xff]
    %v726 = vld [vmem:[#allocation2 + $0x50] sm:$0xff]
    %v727 = vld [vmem:[#allocation2 + $0x68] sm:$0xff]
    %v728 = vld [vmem:[#allocation2 + $0x80] sm:$0xff]
    %v729 = vld [vmem:[#allocation2 + $0x98] sm:$0xff]
    %v730 = vld [vmem:[#allocation2 + $0xb0] sm:$0xff]
    %v731 = vld [vmem:[#allocation2 + $0x10] sm:$0xff]
    %v732 = vld [vmem:[#allocation2 + $0x28] sm:$0xff]
    %v733 = vld [vmem:[#allocation2 + $0x40] sm:$0xff]
    %v734 = vld [vmem:[#allocation2 + $0x58] sm:$0xff]
    %v735 = vld [vmem:[#allocation2 + $0x70] sm:$0xff]
    %v736 = vld [vmem:[#allocation2 + $0x88] sm:$0xff]
    %v737 = vld [vmem:[#allocation2 + $0xa0] sm:$0xff]
    %v738 = vld [vmem:[#allocation2 + $0xb8] sm:$0xff]
    %vm739 = vcmask 261120
    %v741 = vsel %vm739, %v715, 0
    %v744 = vsel %vm739, %v716, 0
    %v747 = vsel %vm739, %v717, 0
    %v750 = vsel %vm739, %v718, 0
    %v753 = vsel %vm739, %v719, 0
    %v756 = vsel %vm739, %v720, 0
    %v759 = vsel %vm739, %v721, 0
    %v762 = vsel %vm739, %v722, 0
    %v765 = vsel %vm739, %v723, 0
    %v768 = vsel %vm739, %v724, 0
    %v771 = vsel %vm739, %v725, 0
    %v774 = vsel %vm739, %v726, 0
    %v777 = vsel %vm739, %v727, 0
    %v780 = vsel %vm739, %v728, 0
    %v783 = vsel %vm739, %v729, 0
    %v786 = vsel %vm739, %v730, 0
    %788 = vmatprep.subr.mxu0 0.0
    %789 = vmatpush1.xpose.msra.mxu0 %v765
    %790 = vmatprep.subr.mxu0 0.0
    %791 = vmatpush1.xpose.msra.mxu0 %v768
    %792 = vmatprep.subr.mxu0 0.0
    %793 = vmatpush1.xpose.msra.mxu0 %v771
    %794 = vmatprep.subr.mxu0 0.0
    %795 = vmatpush1.xpose.msra.mxu0 %v774
    %796 = vmatprep.subr.mxu0 0.0
    %797 = vmatpush1.xpose.msra.mxu0 %v777
    %798 = vmatprep.subr.mxu0 0.0
    %799 = vmatpush1.xpose.msra.mxu0 %v780
    %800 = vmatprep.subr.mxu0 0.0
    %801 = vmatpush1.xpose.msra.mxu0 %v783
    %802 = vmatprep.subr.mxu0 0.0
    %803 = vmatpush1.xpose.msra.mxu0 %v786
    %804 = vmatprep.subr.mxu0 0.0
    %805 = vmatpush1.xpose.msra.mxu0 0.0
    %806 = vmatprep.subr.mxu0 0.0
    %807 = vmatpush1.xpose.msra.mxu0 0.0
    %808 = vmatprep.subr.mxu0 0.0
    %809 = vmatpush1.xpose.msra.mxu0 0.0
    %810 = vmatprep.subr.mxu0 0.0
    %811 = vmatpush1.xpose.msra.mxu0 0.0
    %812 = vmatprep.subr.mxu0 0.0
    %813 = vmatpush1.xpose.msra.mxu0 0.0
    %814 = vmatprep.subr.mxu0 0.0
    %815 = vmatpush1.xpose.msra.mxu0 0.0
    %816 = vmatprep.subr.mxu0 0.0
    %817 = vmatpush1.xpose.msra.mxu0 0.0
    %818 = vmatprep.subr.mxu0 0.0
    %819 = vmatpush1.xpose.msra.mxu0 0.0
    %820 = vmatprep.subr.mxu0 0.0
    %821 = vmatpush1.xpose.msra.mxu0 0.0
    %822 = vmatprep.subr.mxu0 0.0
    %823 = vmatpush1.xpose.msra.mxu0 0.0
    %824 = vmatprep.subr.mxu0 0.0
    %825 = vmatpush1.xpose.msra.mxu0 0.0
    %826 = vmatprep.subr.mxu0 0.0
    %827 = vmatpush1.xpose.msra.mxu0 0.0
    %828 = vmatprep.subr.mxu0 0.0
    %829 = vmatpush1.xpose.msra.mxu0 0.0
    %830 = vmatprep.subr.mxu0 0.0
    %831 = vmatpush1.xpose.msra.mxu0 0.0
    %832 = vmatprep.subr.mxu0 0.0
    %833 = vmatpush1.xpose.msra.mxu0 0.0
    %834 = vmatprep.subr.mxu0 0.0
    %835 = vmatpush1.xpose.msra.mxu0 0.0
    %836 = vmatprep.subr.mxu0 0.0
    %837 = vmatpush1.xpose.msra.mxu0 0.0
    %838 = vmatprep.subr.mxu0 0.0
    %839 = vmatpush1.xpose.msra.mxu0 0.0
    %840 = vmatprep.subr.mxu0 0.0
    %841 = vmatpush1.xpose.msra.mxu0 0.0
    %842 = vmatprep.subr.mxu0 0.0
    %843 = vmatpush1.xpose.msra.mxu0 0.0
    %844 = vmatprep.subr.mxu0 0.0
    %845 = vmatpush1.xpose.msra.mxu0 0.0
    %846 = vmatprep.subr.mxu0 0.0
    %847 = vmatpush1.xpose.msra.mxu0 0.0
    %848 = vmatprep.subr.mxu0 0.0
    %849 = vmatpush1.xpose.msra.mxu0 0.0
    %850 = vmatprep.subr.mxu0 0.0
    %851 = vmatpush1.xpose.msra.mxu0 0.0
    %852 = vmatprep.mubr.f32.mxu0 0.0
    %853 = vmatmul.mubr.f32.gmra.mrb[0].mxu0 %v741
    %v854 = vpop.f32.mrb[0].mxu0
    %v855 = vadd.f32 0.0, %v854
    %v856 = vpop.f32.mrb[0].mxu0
    %857 = vmatprep.mubr.f32.mxu0 0.0
    %858 = vmatmul.mubr.f32.gmra.mrb[0].mxu0 %v744
    %v859 = vpop.f32.mrb[0].mxu0
    %v860 = vadd.f32 0.0, %v859
    %v861 = vpop.f32.mrb[0].mxu0
    %862 = vmatprep.mubr.f32.mxu0 0.0
    %863 = vmatmul.mubr.f32.gmra.mrb[0].mxu0 %v747
    %v864 = vpop.f32.mrb[0].mxu0
    %v865 = vadd.f32 0.0, %v864
    %v866 = vpop.f32.mrb[0].mxu0
    %867 = vmatprep.mubr.f32.mxu0 0.0
    %868 = vmatmul.mubr.f32.gmra.mrb[0].mxu0 %v750
    %v869 = vpop.f32.mrb[0].mxu0
    %v870 = vadd.f32 0.0, %v869
    %v871 = vpop.f32.mrb[0].mxu0
    %872 = vmatprep.mubr.f32.mxu0 0.0
    %873 = vmatmul.mubr.f32.gmra.mrb[0].mxu0 %v753
    %v874 = vpop.f32.mrb[0].mxu0
    %v875 = vadd.f32 0.0, %v874
    %v876 = vpop.f32.mrb[0].mxu0
    %877 = vmatprep.mubr.f32.mxu0 0.0
    %878 = vmatmul.mubr.f32.gmra.mrb[0].mxu0 %v756
    %v879 = vpop.f32.mrb[0].mxu0
    %v880 = vadd.f32 0.0, %v879
    %v881 = vpop.f32.mrb[0].mxu0
    %882 = vmatprep.mubr.f32.mxu0 0.0
    %883 = vmatmul.mubr.f32.gmra.mrb[0].mxu0 %v759
    %v884 = vpop.f32.mrb[0].mxu0
    %v885 = vadd.f32 0.0, %v884
    %v886 = vpop.f32.mrb[0].mxu0
    %887 = vmatprep.mubr.f32.mxu0 0.0
    %888 = vmatmul.mubr.f32.gmra.mrb[0].mxu0 %v762
    %v889 = vpop.f32.mrb[0].mxu0
    %v890 = vadd.f32 0.0, %v889
    %v891 = vpop.f32.mrb[0].mxu0
    %892 = vdwg.mxu0
    %vm893 = vcmask 523264
    %v894 = vsel %vm893, %v855, -inf
    %895 = vmax.xlane.f32.xlu0 %v894
    %v896 = vpop.xlane.xlu0 %895
    %v897 = vsel %vm893, %v860, -inf
    %898 = vmax.xlane.f32.xlu0 %v897
    %v899 = vpop.xlane.xlu0 %898
    %v900 = vsel %vm893, %v865, -inf
    %901 = vmax.xlane.f32.xlu0 %v900
    %v902 = vpop.xlane.xlu0 %901
    %v903 = vsel %vm893, %v870, -inf
    %904 = vmax.xlane.f32.xlu0 %v903
    %v905 = vpop.xlane.xlu0 %904
    %v906 = vsel %vm893, %v875, -inf
    %907 = vmax.xlane.f32.xlu0 %v906
    %v908 = vpop.xlane.xlu0 %907
    %v909 = vsel %vm893, %v880, -inf
    %910 = vmax.xlane.f32.xlu0 %v909
    %v911 = vpop.xlane.xlu0 %910
    %v912 = vsel %vm893, %v885, -inf
    %913 = vmax.xlane.f32.xlu0 %v912
    %v914 = vpop.xlane.xlu0 %913
    %v915 = vsel %vm893, %v890, -inf
    %916 = vmax.xlane.f32.xlu0 %v915
    %v917 = vpop.xlane.xlu0 %916
    %v918 = vsub.f32 %v855, %v896
    %v919 = vsub.f32 %v860, %v899
    %v920 = vsub.f32 %v865, %v902
    %v921 = vsub.f32 %v870, %v905
    %v922 = vsub.f32 %v875, %v908
    %v923 = vsub.f32 %v880, %v911
    %v924 = vsub.f32 %v885, %v914
    %v925 = vsub.f32 %v890, %v917
    %v926 = vmul.f32 %v918, 1.442695
    %v927 = vpow.pop %v926
    %v928 = vmul.f32 %v919, 1.442695
    %v929 = vpow.pop %v928
    %v930 = vmul.f32 %v920, 1.442695
    %v931 = vpow.pop %v930
    %v932 = vmul.f32 %v921, 1.442695
    %v933 = vpow.pop %v932
    %v934 = vmul.f32 %v922, 1.442695
    %v935 = vpow.pop %v934
    %v936 = vmul.f32 %v923, 1.442695
    %v937 = vpow.pop %v936
    %v938 = vmul.f32 %v924, 1.442695
    %v939 = vpow.pop %v938
    %v940 = vmul.f32 %v925, 1.442695
    %v941 = vpow.pop %v940
    %v942 = vsel %vm893, %v927, 0.0
    %943 = vadd.xlane.f32.xlu0 %v942
    %v944 = vpop.xlane.xlu0 %943
    %v945 = vsel %vm893, %v929, 0.0
    %946 = vadd.xlane.f32.xlu0 %v945
    %v947 = vpop.xlane.xlu0 %946
    %v948 = vsel %vm893, %v931, 0.0
    %949 = vadd.xlane.f32.xlu0 %v948
    %v950 = vpop.xlane.xlu0 %949
    %v951 = vsel %vm893, %v933, 0.0
    %952 = vadd.xlane.f32.xlu0 %v951
    %v953 = vpop.xlane.xlu0 %952
    %v954 = vsel %vm893, %v935, 0.0
    %955 = vadd.xlane.f32.xlu0 %v954
    %v956 = vpop.xlane.xlu0 %955
    %v957 = vsel %vm893, %v937, 0.0
    %958 = vadd.xlane.f32.xlu0 %v957
    %v959 = vpop.xlane.xlu0 %958
    %v960 = vsel %vm893, %v939, 0.0
    %961 = vadd.xlane.f32.xlu0 %v960
    %v962 = vpop.xlane.xlu0 %961
    %v963 = vsel %vm893, %v941, 0.0
    %964 = vadd.xlane.f32.xlu0 %v963
    %v965 = vpop.xlane.xlu0 %964
    %v966 = vrcp.pop %v944
    %v967 = vrcp.pop %v947
    %v968 = vrcp.pop %v950
    %v969 = vrcp.pop %v953
    %v970 = vrcp.pop %v956
    %v971 = vrcp.pop %v959
    %v972 = vrcp.pop %v962
    %v973 = vrcp.pop %v965
    %v974 = vmul.f32 %v927, %v966
    %v975 = vmul.f32 %v929, %v967
    %v976 = vmul.f32 %v931, %v968
    %v977 = vmul.f32 %v933, %v969
    %v978 = vmul.f32 %v935, %v970
    %v979 = vmul.f32 %v937, %v971
    %v980 = vmul.f32 %v939, %v972
    %v981 = vmul.f32 %v941, %v973
    %v983 = vsel %vm893, %v974, 0
    %v986 = vsel %vm893, %v975, 0
    %v989 = vsel %vm893, %v976, 0
    %v992 = vsel %vm893, %v977, 0
    %v995 = vsel %vm893, %v978, 0
    %v998 = vsel %vm893, %v979, 0
    %v1001 = vsel %vm893, %v980, 0
    %v1004 = vsel %vm893, %v981, 0
    %1006 = vmatprep.subr.mxu0 0.0
    %1007 = vmatpush1.msra.mxu0 %v731
    %1008 = vmatprep.subr.mxu0 0.0
    %1009 = vmatpush1.msra.mxu0 %v732
    %1010 = vmatprep.subr.mxu0 0.0
    %1011 = vmatpush1.msra.mxu0 %v733
    %1012 = vmatprep.subr.mxu0 0.0
    %1013 = vmatpush1.msra.mxu0 %v734
    %1014 = vmatprep.subr.mxu0 0.0
    %1015 = vmatpush1.msra.mxu0 %v735
    %1016 = vmatprep.subr.mxu0 0.0
    %1017 = vmatpush1.msra.mxu0 %v736
    %1018 = vmatprep.subr.mxu0 0.0
    %1019 = vmatpush1.msra.mxu0 %v737
    %1020 = vmatprep.subr.mxu0 0.0
    %1021 = vmatpush1.msra.mxu0 %v738
    %1022 = vmatprep.subr.mxu0 0.0
    %1023 = vmatpush1.msra.mxu0 0.0
    %1024 = vmatprep.subr.mxu0 0.0
    %1025 = vmatpush1.msra.mxu0 0.0
    %1026 = vmatprep.subr.mxu0 0.0
    %1027 = vmatpush1.msra.mxu0 0.0
    %1028 = vmatprep.subr.mxu0 0.0
    %1029 = vmatpush1.msra.mxu0 0.0
    %1030 = vmatprep.subr.mxu0 0.0
    %1031 = vmatpush1.msra.mxu0 0.0
    %1032 = vmatprep.subr.mxu0 0.0
    %1033 = vmatpush1.msra.mxu0 0.0
    %1034 = vmatprep.subr.mxu0 0.0
    %1035 = vmatpush1.msra.mxu0 0.0
    %1036 = vmatprep.subr.mxu0 0.0
    %1037 = vmatpush1.msra.mxu0 0.0
    %1038 = vmatprep.subr.mxu0 0.0
    %1039 = vmatpush1.msra.mxu0 0.0
    %1040 = vmatprep.subr.mxu0 0.0
    %1041 = vmatpush1.msra.mxu0 0.0
    %1042 = vmatprep.subr.mxu0 0.0
    %1043 = vmatpush1.msra.mxu0 0.0
    %1044 = vmatprep.subr.mxu0 0.0
    %1045 = vmatpush1.msra.mxu0 0.0
    %1046 = vmatprep.subr.mxu0 0.0
    %1047 = vmatpush1.msra.mxu0 0.0
    %1048 = vmatprep.subr.mxu0 0.0
    %1049 = vmatpush1.msra.mxu0 0.0
    %1050 = vmatprep.subr.mxu0 0.0
    %1051 = vmatpush1.msra.mxu0 0.0
    %1052 = vmatprep.subr.mxu0 0.0
    %1053 = vmatpush1.msra.mxu0 0.0
    %1054 = vmatprep.subr.mxu0 0.0
    %1055 = vmatpush1.msra.mxu0 0.0
    %1056 = vmatprep.subr.mxu0 0.0
    %1057 = vmatpush1.msra.mxu0 0.0
    %1058 = vmatprep.subr.mxu0 0.0
    %1059 = vmatpush1.msra.mxu0 0.0
    %1060 = vmatprep.subr.mxu0 0.0
    %1061 = vmatpush1.msra.mxu0 0.0
    %1062 = vmatprep.subr.mxu0 0.0
    %1063 = vmatpush1.msra.mxu0 0.0
    %1064 = vmatprep.subr.mxu0 0.0
    %1065 = vmatpush1.msra.mxu0 0.0
    %1066 = vmatprep.subr.mxu0 0.0
    %1067 = vmatpush1.msra.mxu0 0.0
    %1068 = vmatprep.subr.mxu0 0.0
    %1069 = vmatpush1.msra.mxu0 0.0
    %1070 = vmatprep.mubr.f32.mxu0 0.0
    %1071 = vmatmul.mubr.f32.gmra.mrb[0].mxu0 %v983
    %v1072 = vpop.f32.mrb[0].mxu0
    %v1073 = vadd.f32 0.0, %v1072
    %v1074 = vpop.f32.mrb[0].mxu0
    %1075 = vmatprep.mubr.f32.mxu0 0.0
    %1076 = vmatmul.mubr.f32.gmra.mrb[0].mxu0 %v986
    %v1077 = vpop.f32.mrb[0].mxu0
    %v1078 = vadd.f32 0.0, %v1077
    %v1079 = vpop.f32.mrb[0].mxu0
    %1080 = vmatprep.mubr.f32.mxu0 0.0
    %1081 = vmatmul.mubr.f32.gmra.mrb[0].mxu0 %v989
    %v1082 = vpop.f32.mrb[0].mxu0
    %v1083 = vadd.f32 0.0, %v1082
    %v1084 = vpop.f32.mrb[0].mxu0
    %1085 = vmatprep.mubr.f32.mxu0 0.0
    %1086 = vmatmul.mubr.f32.gmra.mrb[0].mxu0 %v992
    %v1087 = vpop.f32.mrb[0].mxu0
    %v1088 = vadd.f32 0.0, %v1087
    %v1089 = vpop.f32.mrb[0].mxu0
    %1090 = vmatprep.mubr.f32.mxu0 0.0
    %1091 = vmatmul.mubr.f32.gmra.mrb[0].mxu0 %v995
    %v1092 = vpop.f32.mrb[0].mxu0
    %v1093 = vadd.f32 0.0, %v1092
    %v1094 = vpop.f32.mrb[0].mxu0
    %1095 = vmatprep.mubr.f32.mxu0 0.0
    %1096 = vmatmul.mubr.f32.gmra.mrb[0].mxu0 %v998
    %v1097 = vpop.f32.mrb[0].mxu0
    %v1098 = vadd.f32 0.0, %v1097
    %v1099 = vpop.f32.mrb[0].mxu0
    %1100 = vmatprep.mubr.f32.mxu0 0.0
    %1101 = vmatmul.mubr.f32.gmra.mrb[0].mxu0 %v1001
    %v1102 = vpop.f32.mrb[0].mxu0
    %v1103 = vadd.f32 0.0, %v1102
    %v1104 = vpop.f32.mrb[0].mxu0
    %1105 = vmatprep.mubr.f32.mxu0 0.0
    %1106 = vmatmul.mubr.f32.gmra.mrb[0].mxu0 %v1004
    %v1107 = vpop.f32.mrb[0].mxu0
    %v1108 = vadd.f32 0.0, %v1107
    %v1109 = vpop.f32.mrb[0].mxu0
    %1110 = vdwg.mxu0
    %1111 = vst.msk [vmem:[#allocation3] sm:$0xff] %vm739, %v1073
    %1112 = vst.msk [vmem:[#allocation3 + $0x8] sm:$0xff] %vm739, %v1078
    %1113 = vst.msk [vmem:[#allocation3 + $0x10] sm:$0xff] %vm739, %v1083
    %1114 = vst.msk [vmem:[#allocation3 + $0x18] sm:$0xff] %vm739, %v1088
    %1115 = vst.msk [vmem:[#allocation3 + $0x20] sm:$0xff] %vm739, %v1093
    %1116 = vst.msk [vmem:[#allocation3 + $0x28] sm:$0xff] %vm739, %v1098
    %1117 = vst.msk [vmem:[#allocation3 + $0x30] sm:$0xff] %vm739, %v1103
    %1118 = vst.msk [vmem:[#allocation3 + $0x38] sm:$0xff] %vm739, %v1108
    %v1119 = vld [vmem:[#allocation2] sm:$0xff]
    %v1120 = vld [vmem:[#allocation2 + $0x18] sm:$0xff]
    %v1121 = vld [vmem:[#allocation2 + $0x30] sm:$0xff]
    %v1122 = vld [vmem:[#allocation2 + $0x48] sm:$0xff]
    %v1123 = vld [vmem:[#allocation2 + $0x60] sm:$0xff]
    %v1124 = vld [vmem:[#allocation2 + $0x78] sm:$0xff]
    %v1125 = vld [vmem:[#allocation2 + $0x90] sm:$0xff]
    %v1126 = vld [vmem:[#allocation2 + $0xa8] sm:$0xff]
    %v1127 = vld [vmem:[#allocation2 + $0x8] sm:$0xff]
    %v1128 = vld [vmem:[#allocation2 + $0x20] sm:$0xff]
    %v1129 = vld [vmem:[#allocation2 + $0x38] sm:$0xff]
    %v1130 = vld [vmem:[#allocation2 + $0x50] sm:$0xff]
    %v1131 = vld [vmem:[#allocation2 + $0x68] sm:$0xff]
    %v1132 = vld [vmem:[#allocation2 + $0x80] sm:$0xff]
    %v1133 = vld [vmem:[#allocation2 + $0x98] sm:$0xff]
    %v1134 = vld [vmem:[#allocation2 + $0xb0] sm:$0xff]
    %v1135 = vld [vmem:[#allocation2 + $0x10] sm:$0xff]
    %v1136 = vld [vmem:[#allocation2 + $0x28] sm:$0xff]
    %v1137 = vld [vmem:[#allocation2 + $0x40] sm:$0xff]
    %v1138 = vld [vmem:[#allocation2 + $0x58] sm:$0xff]
    %v1139 = vld [vmem:[#allocation2 + $0x70] sm:$0xff]
    %v1140 = vld [vmem:[#allocation2 + $0x88] sm:$0xff]
    %v1141 = vld [vmem:[#allocation2 + $0xa0] sm:$0xff]
    %v1142 = vld [vmem:[#allocation2 + $0xb8] sm:$0xff]
    %1151 = vrot.lane.b32.xlu0 %v1119, 96
    %v1152 = vpop.permute.xlu0 %1151
    %1153 = vrot.lane.b32.xlu0 %v1120, 96
    %v1154 = vpop.permute.xlu0 %1153
    %1155 = vrot.lane.b32.xlu0 %v1121, 96
    %v1156 = vpop.permute.xlu0 %1155
    %1157 = vrot.lane.b32.xlu0 %v1122, 96
    %v1158 = vpop.permute.xlu0 %1157
    %1159 = vrot.lane.b32.xlu0 %v1123, 96
    %v1160 = vpop.permute.xlu0 %1159
    %1161 = vrot.lane.b32.xlu0 %v1124, 96
    %v1162 = vpop.permute.xlu0 %1161
    %1163 = vrot.lane.b32.xlu0 %v1125, 96
    %v1164 = vpop.permute.xlu0 %1163
    %1165 = vrot.lane.b32.xlu0 %v1126, 96
    %v1166 = vpop.permute.xlu0 %1165
    %1175 = vrot.lane.b32.xlu0 %v1127, 96
    %v1176 = vpop.permute.xlu0 %1175
    %1177 = vrot.lane.b32.xlu0 %v1128, 96
    %v1178 = vpop.permute.xlu0 %1177
    %1179 = vrot.lane.b32.xlu0 %v1129, 96
    %v1180 = vpop.permute.xlu0 %1179
    %1181 = vrot.lane.b32.xlu0 %v1130, 96
    %v1182 = vpop.permute.xlu0 %1181
    %1183 = vrot.lane.b32.xlu0 %v1131, 96
    %v1184 = vpop.permute.xlu0 %1183
    %1185 = vrot.lane.b32.xlu0 %v1132, 96
    %v1186 = vpop.permute.xlu0 %1185
    %1187 = vrot.lane.b32.xlu0 %v1133, 96
    %v1188 = vpop.permute.xlu0 %1187
    %1189 = vrot.lane.b32.xlu0 %v1134, 96
    %v1190 = vpop.permute.xlu0 %1189
    %v1191 = vsel %vm739, %v1152, 0
    %v1193 = vsel %vm739, %v1154, 0
    %v1195 = vsel %vm739, %v1156, 0
    %v1197 = vsel %vm739, %v1158, 0
    %v1199 = vsel %vm739, %v1160, 0
    %v1201 = vsel %vm739, %v1162, 0
    %v1203 = vsel %vm739, %v1164, 0
    %v1205 = vsel %vm739, %v1166, 0
    %v1207 = vsel %vm739, %v1176, 0
    %v1209 = vsel %vm739, %v1178, 0
    %v1211 = vsel %vm739, %v1180, 0
    %v1213 = vsel %vm739, %v1182, 0
    %v1215 = vsel %vm739, %v1184, 0
    %v1217 = vsel %vm739, %v1186, 0
    %v1219 = vsel %vm739, %v1188, 0
    %v1221 = vsel %vm739, %v1190, 0
    %1223 = vmatprep.subr.mxu0 0.0
    %1224 = vmatpush1.xpose.msra.mxu0 %v1207
    %1225 = vmatprep.subr.mxu0 0.0
    %1226 = vmatpush1.xpose.msra.mxu0 %v1209
    %1227 = vmatprep.subr.mxu0 0.0
    %1228 = vmatpush1.xpose.msra.mxu0 %v1211
    %1229 = vmatprep.subr.mxu0 0.0
    %1230 = vmatpush1.xpose.msra.mxu0 %v1213
    %1231 = vmatprep.subr.mxu0 0.0
    %1232 = vmatpush1.xpose.msra.mxu0 %v1215
    %1233 = vmatprep.subr.mxu0 0.0
    %1234 = vmatpush1.xpose.msra.mxu0 %v1217
    %1235 = vmatprep.subr.mxu0 0.0
    %1236 = vmatpush1.xpose.msra.mxu0 %v1219
    %1237 = vmatprep.subr.mxu0 0.0
    %1238 = vmatpush1.xpose.msra.mxu0 %v1221
    %1239 = vmatprep.subr.mxu0 0.0
    %1240 = vmatpush1.xpose.msra.mxu0 0.0
    %1241 = vmatprep.subr.mxu0 0.0
    %1242 = vmatpush1.xpose.msra.mxu0 0.0
    %1243 = vmatprep.subr.mxu0 0.0
    %1244 = vmatpush1.xpose.msra.mxu0 0.0
    %1245 = vmatprep.subr.mxu0 0.0
    %1246 = vmatpush1.xpose.msra.mxu0 0.0
    %1247 = vmatprep.subr.mxu0 0.0
    %1248 = vmatpush1.xpose.msra.mxu0 0.0
    %1249 = vmatprep.subr.mxu0 0.0
    %1250 = vmatpush1.xpose.msra.mxu0 0.0
    %1251 = vmatprep.subr.mxu0 0.0
    %1252 = vmatpush1.xpose.msra.mxu0 0.0
    %1253 = vmatprep.subr.mxu0 0.0
    %1254 = vmatpush1.xpose.msra.mxu0 0.0
    %1255 = vmatprep.subr.mxu0 0.0
    %1256 = vmatpush1.xpose.msra.mxu0 0.0
    %1257 = vmatprep.subr.mxu0 0.0
    %1258 = vmatpush1.xpose.msra.mxu0 0.0
    %1259 = vmatprep.subr.mxu0 0.0
    %1260 = vmatpush1.xpose.msra.mxu0 0.0
    %1261 = vmatprep.subr.mxu0 0.0
    %1262 = vmatpush1.xpose.msra.mxu0 0.0
    %1263 = vmatprep.subr.mxu0 0.0
    %1264 = vmatpush1.xpose.msra.mxu0 0.0
    %1265 = vmatprep.subr.mxu0 0.0
    %1266 = vmatpush1.xpose.msra.mxu0 0.0
    %1267 = vmatprep.subr.mxu0 0.0
    %1268 = vmatpush1.xpose.msra.mxu0 0.0
    %1269 = vmatprep.subr.mxu0 0.0
    %1270 = vmatpush1.xpose.msra.mxu0 0.0
    %1271 = vmatprep.subr.mxu0 0.0
    %1272 = vmatpush1.xpose.msra.mxu0 0.0
    %1273 = vmatprep.subr.mxu0 0.0
    %1274 = vmatpush1.xpose.msra.mxu0 0.0
    %1275 = vmatprep.subr.mxu0 0.0
    %1276 = vmatpush1.xpose.msra.mxu0 0.0
    %1277 = vmatprep.subr.mxu0 0.0
    %1278 = vmatpush1.xpose.msra.mxu0 0.0
    %1279 = vmatprep.subr.mxu0 0.0
    %1280 = vmatpush1.xpose.msra.mxu0 0.0
    %1281 = vmatprep.subr.mxu0 0.0
    %1282 = vmatpush1.xpose.msra.mxu0 0.0
    %1283 = vmatprep.subr.mxu0 0.0
    %1284 = vmatpush1.xpose.msra.mxu0 0.0
    %1285 = vmatprep.subr.mxu0 0.0
    %1286 = vmatpush1.xpose.msra.mxu0 0.0
    %1287 = vmatprep.mubr.f32.mxu0 0.0
    %1288 = vmatmul.mubr.f32.gmra.mrb[0].mxu0 %v1191
    %v1289 = vpop.f32.mrb[0].mxu0
    %v1290 = vadd.f32 0.0, %v1289
    %v1291 = vpop.f32.mrb[0].mxu0
    %1292 = vmatprep.mubr.f32.mxu0 0.0
    %1293 = vmatmul.mubr.f32.gmra.mrb[0].mxu0 %v1193
    %v1294 = vpop.f32.mrb[0].mxu0
    %v1295 = vadd.f32 0.0, %v1294
    %v1296 = vpop.f32.mrb[0].mxu0
    %1297 = vmatprep.mubr.f32.mxu0 0.0
    %1298 = vmatmul.mubr.f32.gmra.mrb[0].mxu0 %v1195
    %v1299 = vpop.f32.mrb[0].mxu0
    %v1300 = vadd.f32 0.0, %v1299
    %v1301 = vpop.f32.mrb[0].mxu0
    %1302 = vmatprep.mubr.f32.mxu0 0.0
    %1303 = vmatmul.mubr.f32.gmra.mrb[0].mxu0 %v1197
    %v1304 = vpop.f32.mrb[0].mxu0
    %v1305 = vadd.f32 0.0, %v1304
    %v1306 = vpop.f32.mrb[0].mxu0
    %1307 = vmatprep.mubr.f32.mxu0 0.0
    %1308 = vmatmul.mubr.f32.gmra.mrb[0].mxu0 %v1199
    %v1309 = vpop.f32.mrb[0].mxu0
    %v1310 = vadd.f32 0.0, %v1309
    %v1311 = vpop.f32.mrb[0].mxu0
    %1312 = vmatprep.mubr.f32.mxu0 0.0
    %1313 = vmatmul.mubr.f32.gmra.mrb[0].mxu0 %v1201
    %v1314 = vpop.f32.mrb[0].mxu0
    %v1315 = vadd.f32 0.0, %v1314
    %v1316 = vpop.f32.mrb[0].mxu0
    %1317 = vmatprep.mubr.f32.mxu0 0.0
    %1318 = vmatmul.mubr.f32.gmra.mrb[0].mxu0 %v1203
    %v1319 = vpop.f32.mrb[0].mxu0
    %v1320 = vadd.f32 0.0, %v1319
    %v1321 = vpop.f32.mrb[0].mxu0
    %1322 = vmatprep.mubr.f32.mxu0 0.0
    %1323 = vmatmul.mubr.f32.gmra.mrb[0].mxu0 %v1205
    %v1324 = vpop.f32.mrb[0].mxu0
    %v1325 = vadd.f32 0.0, %v1324
    %v1326 = vpop.f32.mrb[0].mxu0
    %1327 = vdwg.mxu0
    %v1328 = vsel %vm893, %v1290, -inf
    %1329 = vmax.xlane.f32.xlu0 %v1328
    %v1330 = vpop.xlane.xlu0 %1329
    %v1331 = vsel %vm893, %v1295, -inf
    %1332 = vmax.xlane.f32.xlu0 %v1331
    %v1333 = vpop.xlane.xlu0 %1332
    %v1334 = vsel %vm893, %v1300, -inf
    %1335 = vmax.xlane.f32.xlu0 %v1334
    %v1336 = vpop.xlane.xlu0 %1335
    %v1337 = vsel %vm893, %v1305, -inf
    %1338 = vmax.xlane.f32.xlu0 %v1337
    %v1339 = vpop.xlane.xlu0 %1338
    %v1340 = vsel %vm893, %v1310, -inf
    %1341 = vmax.xlane.f32.xlu0 %v1340
    %v1342 = vpop.xlane.xlu0 %1341
    %v1343 = vsel %vm893, %v1315, -inf
    %1344 = vmax.xlane.f32.xlu0 %v1343
    %v1345 = vpop.xlane.xlu0 %1344
    %v1346 = vsel %vm893, %v1320, -inf
    %1347 = vmax.xlane.f32.xlu0 %v1346
    %v1348 = vpop.xlane.xlu0 %1347
    %v1349 = vsel %vm893, %v1325, -inf
    %1350 = vmax.xlane.f32.xlu0 %v1349
    %v1351 = vpop.xlane.xlu0 %1350
    %v1352 = vsub.f32 %v1290, %v1330
    %v1353 = vsub.f32 %v1295, %v1333
    %v1354 = vsub.f32 %v1300, %v1336
    %v1355 = vsub.f32 %v1305, %v1339
    %v1356 = vsub.f32 %v1310, %v1342
    %v1357 = vsub.f32 %v1315, %v1345
    %v1358 = vsub.f32 %v1320, %v1348
    %v1359 = vsub.f32 %v1325, %v1351
    %v1360 = vmul.f32 %v1352, 1.442695
    %v1361 = vpow.pop %v1360
    %v1362 = vmul.f32 %v1353, 1.442695
    %v1363 = vpow.pop %v1362
    %v1364 = vmul.f32 %v1354, 1.442695
    %v1365 = vpow.pop %v1364
    %v1366 = vmul.f32 %v1355, 1.442695
    %v1367 = vpow.pop %v1366
    %v1368 = vmul.f32 %v1356, 1.442695
    %v1369 = vpow.pop %v1368
    %v1370 = vmul.f32 %v1357, 1.442695
    %v1371 = vpow.pop %v1370
    %v1372 = vmul.f32 %v1358, 1.442695
    %v1373 = vpow.pop %v1372
    %v1374 = vmul.f32 %v1359, 1.442695
    %v1375 = vpow.pop %v1374
    %v1376 = vsel %vm893, %v1361, 0.0
    %1377 = vadd.xlane.f32.xlu0 %v1376
    %v1378 = vpop.xlane.xlu0 %1377
    %v1379 = vsel %vm893, %v1363, 0.0
    %1380 = vadd.xlane.f32.xlu0 %v1379
    %v1381 = vpop.xlane.xlu0 %1380
    %v1382 = vsel %vm893, %v1365, 0.0
    %1383 = vadd.xlane.f32.xlu0 %v1382
    %v1384 = vpop.xlane.xlu0 %1383
    %v1385 = vsel %vm893, %v1367, 0.0
    %1386 = vadd.xlane.f32.xlu0 %v1385
    %v1387 = vpop.xlane.xlu0 %1386
    %v1388 = vsel %vm893, %v1369, 0.0
    %1389 = vadd.xlane.f32.xlu0 %v1388
    %v1390 = vpop.xlane.xlu0 %1389
    %v1391 = vsel %vm893, %v1371, 0.0
    %1392 = vadd.xlane.f32.xlu0 %v1391
    %v1393 = vpop.xlane.xlu0 %1392
    %v1394 = vsel %vm893, %v1373, 0.0
    %1395 = vadd.xlane.f32.xlu0 %v1394
    %v1396 = vpop.xlane.xlu0 %1395
    %v1397 = vsel %vm893, %v1375, 0.0
    %1398 = vadd.xlane.f32.xlu0 %v1397
    %v1399 = vpop.xlane.xlu0 %1398
    %v1400 = vrcp.pop %v1378
    %v1401 = vrcp.pop %v1381
    %v1402 = vrcp.pop %v1384
    %v1403 = vrcp.pop %v1387
    %v1404 = vrcp.pop %v1390
    %v1405 = vrcp.pop %v1393
    %v1406 = vrcp.pop %v1396
    %v1407 = vrcp.pop %v1399
    %v1408 = vmul.f32 %v1361, %v1400
    %v1409 = vmul.f32 %v1363, %v1401
    %v1410 = vmul.f32 %v1365, %v1402
    %v1411 = vmul.f32 %v1367, %v1403
    %v1412 = vmul.f32 %v1369, %v1404
    %v1413 = vmul.f32 %v1371, %v1405
    %v1414 = vmul.f32 %v1373, %v1406
    %v1415 = vmul.f32 %v1375, %v1407
    %1424 = vrot.lane.b32.xlu0 %v1135, 96
    %v1425 = vpop.permute.xlu0 %1424
    %1426 = vrot.lane.b32.xlu0 %v1136, 96
    %v1427 = vpop.permute.xlu0 %1426
    %1428 = vrot.lane.b32.xlu0 %v1137, 96
    %v1429 = vpop.permute.xlu0 %1428
    %1430 = vrot.lane.b32.xlu0 %v1138, 96
    %v1431 = vpop.permute.xlu0 %1430
    %1432 = vrot.lane.b32.xlu0 %v1139, 96
    %v1433 = vpop.permute.xlu0 %1432
    %1434 = vrot.lane.b32.xlu0 %v1140, 96
    %v1435 = vpop.permute.xlu0 %1434
    %1436 = vrot.lane.b32.xlu0 %v1141, 96
    %v1437 = vpop.permute.xlu0 %1436
    %1438 = vrot.lane.b32.xlu0 %v1142, 96
    %v1439 = vpop.permute.xlu0 %1438
    %v1449 = vsel %vm893, %v1408, 0
    %v1452 = vsel %vm893, %v1409, 0
    %v1455 = vsel %vm893, %v1410, 0
    %v1458 = vsel %vm893, %v1411, 0
    %v1461 = vsel %vm893, %v1412, 0
    %v1464 = vsel %vm893, %v1413, 0
    %v1467 = vsel %vm893, %v1414, 0
    %v1470 = vsel %vm893, %v1415, 0
    %1472 = vmatprep.subr.mxu0 0.0
    %1473 = vmatpush1.msra.mxu0 %v1425
    %1474 = vmatprep.subr.mxu0 0.0
    %1475 = vmatpush1.msra.mxu0 %v1427
    %1476 = vmatprep.subr.mxu0 0.0
    %1477 = vmatpush1.msra.mxu0 %v1429
    %1478 = vmatprep.subr.mxu0 0.0
    %1479 = vmatpush1.msra.mxu0 %v1431
    %1480 = vmatprep.subr.mxu0 0.0
    %1481 = vmatpush1.msra.mxu0 %v1433
    %1482 = vmatprep.subr.mxu0 0.0
    %1483 = vmatpush1.msra.mxu0 %v1435
    %1484 = vmatprep.subr.mxu0 0.0
    %1485 = vmatpush1.msra.mxu0 %v1437
    %1486 = vmatprep.subr.mxu0 0.0
    %1487 = vmatpush1.msra.mxu0 %v1439
    %1488 = vmatprep.subr.mxu0 0.0
    %1489 = vmatpush1.msra.mxu0 0.0
    %1490 = vmatprep.subr.mxu0 0.0
    %1491 = vmatpush1.msra.mxu0 0.0
    %1492 = vmatprep.subr.mxu0 0.0
    %1493 = vmatpush1.msra.mxu0 0.0
    %1494 = vmatprep.subr.mxu0 0.0
    %1495 = vmatpush1.msra.mxu0 0.0
    %1496 = vmatprep.subr.mxu0 0.0
    %1497 = vmatpush1.msra.mxu0 0.0
    %1498 = vmatprep.subr.mxu0 0.0
    %1499 = vmatpush1.msra.mxu0 0.0
    %1500 = vmatprep.subr.mxu0 0.0
    %1501 = vmatpush1.msra.mxu0 0.0
    %1502 = vmatprep.subr.mxu0 0.0
    %1503 = vmatpush1.msra.mxu0 0.0
    %1504 = vmatprep.subr.mxu0 0.0
    %1505 = vmatpush1.msra.mxu0 0.0
    %1506 = vmatprep.subr.mxu0 0.0
    %1507 = vmatpush1.msra.mxu0 0.0
    %1508 = vmatprep.subr.mxu0 0.0
    %1509 = vmatpush1.msra.mxu0 0.0
    %1510 = vmatprep.subr.mxu0 0.0
    %1511 = vmatpush1.msra.mxu0 0.0
    %1512 = vmatprep.subr.mxu0 0.0
    %1513 = vmatpush1.msra.mxu0 0.0
    %1514 = vmatprep.subr.mxu0 0.0
    %1515 = vmatpush1.msra.mxu0 0.0
    %1516 = vmatprep.subr.mxu0 0.0
    %1517 = vmatpush1.msra.mxu0 0.0
    %1518 = vmatprep.subr.mxu0 0.0
    %1519 = vmatpush1.msra.mxu0 0.0
    %1520 = vmatprep.subr.mxu0 0.0
    %1521 = vmatpush1.msra.mxu0 0.0
    %1522 = vmatprep.subr.mxu0 0.0
    %1523 = vmatpush1.msra.mxu0 0.0
    %1524 = vmatprep.subr.mxu0 0.0
    %1525 = vmatpush1.msra.mxu0 0.0
    %1526 = vmatprep.subr.mxu0 0.0
    %1527 = vmatpush1.msra.mxu0 0.0
    %1528 = vmatprep.subr.mxu0 0.0
    %1529 = vmatpush1.msra.mxu0 0.0
    %1530 = vmatprep.subr.mxu0 0.0
    %1531 = vmatpush1.msra.mxu0 0.0
    %1532 = vmatprep.subr.mxu0 0.0
    %1533 = vmatpush1.msra.mxu0 0.0
    %1534 = vmatprep.subr.mxu0 0.0
    %1535 = vmatpush1.msra.mxu0 0.0
    %1536 = vmatprep.mubr.f32.mxu0 0.0
    %1537 = vmatmul.mubr.f32.gmra.mrb[0].mxu0 %v1449
    %v1538 = vpop.f32.mrb[0].mxu0
    %v1539 = vadd.f32 0.0, %v1538
    %v1540 = vpop.f32.mrb[0].mxu0
    %1541 = vmatprep.mubr.f32.mxu0 0.0
    %1542 = vmatmul.mubr.f32.gmra.mrb[0].mxu0 %v1452
    %v1543 = vpop.f32.mrb[0].mxu0
    %v1544 = vadd.f32 0.0, %v1543
    %v1545 = vpop.f32.mrb[0].mxu0
    %1546 = vmatprep.mubr.f32.mxu0 0.0
    %1547 = vmatmul.mubr.f32.gmra.mrb[0].mxu0 %v1455
    %v1548 = vpop.f32.mrb[0].mxu0
    %v1549 = vadd.f32 0.0, %v1548
    %v1550 = vpop.f32.mrb[0].mxu0
    %1551 = vmatprep.mubr.f32.mxu0 0.0
    %1552 = vmatmul.mubr.f32.gmra.mrb[0].mxu0 %v1458
    %v1553 = vpop.f32.mrb[0].mxu0
    %v1554 = vadd.f32 0.0, %v1553
    %v1555 = vpop.f32.mrb[0].mxu0
    %1556 = vmatprep.mubr.f32.mxu0 0.0
    %1557 = vmatmul.mubr.f32.gmra.mrb[0].mxu0 %v1461
    %v1558 = vpop.f32.mrb[0].mxu0
    %v1559 = vadd.f32 0.0, %v1558
    %v1560 = vpop.f32.mrb[0].mxu0
    %1561 = vmatprep.mubr.f32.mxu0 0.0
    %1562 = vmatmul.mubr.f32.gmra.mrb[0].mxu0 %v1464
    %v1563 = vpop.f32.mrb[0].mxu0
    %v1564 = vadd.f32 0.0, %v1563
    %v1565 = vpop.f32.mrb[0].mxu0
    %1566 = vmatprep.mubr.f32.mxu0 0.0
    %1567 = vmatmul.mubr.f32.gmra.mrb[0].mxu0 %v1467
    %v1568 = vpop.f32.mrb[0].mxu0
    %v1569 = vadd.f32 0.0, %v1568
    %v1570 = vpop.f32.mrb[0].mxu0
    %1571 = vmatprep.mubr.f32.mxu0 0.0
    %1572 = vmatmul.mubr.f32.gmra.mrb[0].mxu0 %v1470
    %v1573 = vpop.f32.mrb[0].mxu0
    %v1574 = vadd.f32 0.0, %v1573
    %v1575 = vpop.f32.mrb[0].mxu0
    %1576 = vdwg.mxu0
    %1585 = vrot.lane.b32.xlu0 %v1539, 32
    %v1586 = vpop.permute.xlu0 %1585
    %1587 = vrot.lane.b32.xlu0 %v1544, 32
    %v1588 = vpop.permute.xlu0 %1587
    %1589 = vrot.lane.b32.xlu0 %v1549, 32
    %v1590 = vpop.permute.xlu0 %1589
    %1591 = vrot.lane.b32.xlu0 %v1554, 32
    %v1592 = vpop.permute.xlu0 %1591
    %1593 = vrot.lane.b32.xlu0 %v1559, 32
    %v1594 = vpop.permute.xlu0 %1593
    %1595 = vrot.lane.b32.xlu0 %v1564, 32
    %v1596 = vpop.permute.xlu0 %1595
    %1597 = vrot.lane.b32.xlu0 %v1569, 32
    %v1598 = vpop.permute.xlu0 %1597
    %1599 = vrot.lane.b32.xlu0 %v1574, 32
    %v1600 = vpop.permute.xlu0 %1599
    %vm1609 = vcmask 523520
    %1610 = vst.msk [vmem:[#allocation3] sm:$0xff] %vm1609, %v1586
    %1611 = vst.msk [vmem:[#allocation3 + $0x8] sm:$0xff] %vm1609, %v1588
    %1612 = vst.msk [vmem:[#allocation3 + $0x10] sm:$0xff] %vm1609, %v1590
    %1613 = vst.msk [vmem:[#allocation3 + $0x18] sm:$0xff] %vm1609, %v1592
    %1614 = vst.msk [vmem:[#allocation3 + $0x20] sm:$0xff] %vm1609, %v1594
    %1615 = vst.msk [vmem:[#allocation3 + $0x28] sm:$0xff] %vm1609, %v1596
    %1616 = vst.msk [vmem:[#allocation3 + $0x30] sm:$0xff] %vm1609, %v1598
    %1617 = vst.msk [vmem:[#allocation3 + $0x38] sm:$0xff] %vm1609, %v1600
    %v1618 = vld [vmem:[#allocation2] sm:$0xff]
    %v1619 = vld [vmem:[#allocation2 + $0x18] sm:$0xff]
    %v1620 = vld [vmem:[#allocation2 + $0x30] sm:$0xff]
    %v1621 = vld [vmem:[#allocation2 + $0x48] sm:$0xff]
    %v1622 = vld [vmem:[#allocation2 + $0x60] sm:$0xff]
    %v1623 = vld [vmem:[#allocation2 + $0x78] sm:$0xff]
    %v1624 = vld [vmem:[#allocation2 + $0x90] sm:$0xff]
    %v1625 = vld [vmem:[#allocation2 + $0xa8] sm:$0xff]
    %v1626 = vld [vmem:[#allocation2 + $0x8] sm:$0xff]
    %v1627 = vld [vmem:[#allocation2 + $0x20] sm:$0xff]
    %v1628 = vld [vmem:[#allocation2 + $0x38] sm:$0xff]
    %v1629 = vld [vmem:[#allocation2 + $0x50] sm:$0xff]
    %v1630 = vld [vmem:[#allocation2 + $0x68] sm:$0xff]
    %v1631 = vld [vmem:[#allocation2 + $0x80] sm:$0xff]
    %v1632 = vld [vmem:[#allocation2 + $0x98] sm:$0xff]
    %v1633 = vld [vmem:[#allocation2 + $0xb0] sm:$0xff]
    %v1634 = vld [vmem:[#allocation2 + $0x10] sm:$0xff]
    %v1635 = vld [vmem:[#allocation2 + $0x28] sm:$0xff]
    %v1636 = vld [vmem:[#allocation2 + $0x40] sm:$0xff]
    %v1637 = vld [vmem:[#allocation2 + $0x58] sm:$0xff]
    %v1638 = vld [vmem:[#allocation2 + $0x70] sm:$0xff]
    %v1639 = vld [vmem:[#allocation2 + $0x88] sm:$0xff]
    %v1640 = vld [vmem:[#allocation2 + $0xa0] sm:$0xff]
    %v1641 = vld [vmem:[#allocation2 + $0xb8] sm:$0xff]
    %1650 = vrot.lane.b32.xlu0 %v1618, 64
    %v1651 = vpop.permute.xlu0 %1650
    %1652 = vrot.lane.b32.xlu0 %v1619, 64
    %v1653 = vpop.permute.xlu0 %1652
    %1654 = vrot.lane.b32.xlu0 %v1620, 64
    %v1655 = vpop.permute.xlu0 %1654
    %1656 = vrot.lane.b32.xlu0 %v1621, 64
    %v1657 = vpop.permute.xlu0 %1656
    %1658 = vrot.lane.b32.xlu0 %v1622, 64
    %v1659 = vpop.permute.xlu0 %1658
    %1660 = vrot.lane.b32.xlu0 %v1623, 64
    %v1661 = vpop.permute.xlu0 %1660
    %1662 = vrot.lane.b32.xlu0 %v1624, 64
    %v1663 = vpop.permute.xlu0 %1662
    %1664 = vrot.lane.b32.xlu0 %v1625, 64
    %v1665 = vpop.permute.xlu0 %1664
    %1674 = vrot.lane.b32.xlu0 %v1626, 64
    %v1675 = vpop.permute.xlu0 %1674
    %1676 = vrot.lane.b32.xlu0 %v1627, 64
    %v1677 = vpop.permute.xlu0 %1676
    %1678 = vrot.lane.b32.xlu0 %v1628, 64
    %v1679 = vpop.permute.xlu0 %1678
    %1680 = vrot.lane.b32.xlu0 %v1629, 64
    %v1681 = vpop.permute.xlu0 %1680
    %1682 = vrot.lane.b32.xlu0 %v1630, 64
    %v1683 = vpop.permute.xlu0 %1682
    %1684 = vrot.lane.b32.xlu0 %v1631, 64
    %v1685 = vpop.permute.xlu0 %1684
    %1686 = vrot.lane.b32.xlu0 %v1632, 64
    %v1687 = vpop.permute.xlu0 %1686
    %1688 = vrot.lane.b32.xlu0 %v1633, 64
    %v1689 = vpop.permute.xlu0 %1688
    %v1690 = vsel %vm739, %v1651, 0
    %v1692 = vsel %vm739, %v1653, 0
    %v1694 = vsel %vm739, %v1655, 0
    %v1696 = vsel %vm739, %v1657, 0
    %v1698 = vsel %vm739, %v1659, 0
    %v1700 = vsel %vm739, %v1661, 0
    %v1702 = vsel %vm739, %v1663, 0
    %v1704 = vsel %vm739, %v1665, 0
    %v1706 = vsel %vm739, %v1675, 0
    %v1708 = vsel %vm739, %v1677, 0
    %v1710 = vsel %vm739, %v1679, 0
    %v1712 = vsel %vm739, %v1681, 0
    %v1714 = vsel %vm739, %v1683, 0
    %v1716 = vsel %vm739, %v1685, 0
    %v1718 = vsel %vm739, %v1687, 0
    %v1720 = vsel %vm739, %v1689, 0
    %1722 = vmatprep.subr.mxu0 0.0
    %1723 = vmatpush1.xpose.msra.mxu0 %v1706
    %1724 = vmatprep.subr.mxu0 0.0
    %1725 = vmatpush1.xpose.msra.mxu0 %v1708
    %1726 = vmatprep.subr.mxu0 0.0
    %1727 = vmatpush1.xpose.msra.mxu0 %v1710
    %1728 = vmatprep.subr.mxu0 0.0
    %1729 = vmatpush1.xpose.msra.mxu0 %v1712
    %1730 = vmatprep.subr.mxu0 0.0
    %1731 = vmatpush1.xpose.msra.mxu0 %v1714
    %1732 = vmatprep.subr.mxu0 0.0
    %1733 = vmatpush1.xpose.msra.mxu0 %v1716
    %1734 = vmatprep.subr.mxu0 0.0
    %1735 = vmatpush1.xpose.msra.mxu0 %v1718
    %1736 = vmatprep.subr.mxu0 0.0
    %1737 = vmatpush1.xpose.msra.mxu0 %v1720
    %1738 = vmatprep.subr.mxu0 0.0
    %1739 = vmatpush1.xpose.msra.mxu0 0.0
    %1740 = vmatprep.subr.mxu0 0.0
    %1741 = vmatpush1.xpose.msra.mxu0 0.0
    %1742 = vmatprep.subr.mxu0 0.0
    %1743 = vmatpush1.xpose.msra.mxu0 0.0
    %1744 = vmatprep.subr.mxu0 0.0
    %1745 = vmatpush1.xpose.msra.mxu0 0.0
    %1746 = vmatprep.subr.mxu0 0.0
    %1747 = vmatpush1.xpose.msra.mxu0 0.0
    %1748 = vmatprep.subr.mxu0 0.0
    %1749 = vmatpush1.xpose.msra.mxu0 0.0
    %1750 = vmatprep.subr.mxu0 0.0
    %1751 = vmatpush1.xpose.msra.mxu0 0.0
    %1752 = vmatprep.subr.mxu0 0.0
    %1753 = vmatpush1.xpose.msra.mxu0 0.0
    %1754 = vmatprep.subr.mxu0 0.0
    %1755 = vmatpush1.xpose.msra.mxu0 0.0
    %1756 = vmatprep.subr.mxu0 0.0
    %1757 = vmatpush1.xpose.msra.mxu0 0.0
    %1758 = vmatprep.subr.mxu0 0.0
    %1759 = vmatpush1.xpose.msra.mxu0 0.0
    %1760 = vmatprep.subr.mxu0 0.0
    %1761 = vmatpush1.xpose.msra.mxu0 0.0
    %1762 = vmatprep.subr.mxu0 0.0
    %1763 = vmatpush1.xpose.msra.mxu0 0.0
    %1764 = vmatprep.subr.mxu0 0.0
    %1765 = vmatpush1.xpose.msra.mxu0 0.0
    %1766 = vmatprep.subr.mxu0 0.0
    %1767 = vmatpush1.xpose.msra.mxu0 0.0
    %1768 = vmatprep.subr.mxu0 0.0
    %1769 = vmatpush1.xpose.msra.mxu0 0.0
    %1770 = vmatprep.subr.mxu0 0.0
    %1771 = vmatpush1.xpose.msra.mxu0 0.0
    %1772 = vmatprep.subr.mxu0 0.0
    %1773 = vmatpush1.xpose.msra.mxu0 0.0
    %1774 = vmatprep.subr.mxu0 0.0
    %1775 = vmatpush1.xpose.msra.mxu0 0.0
    %1776 = vmatprep.subr.mxu0 0.0
    %1777 = vmatpush1.xpose.msra.mxu0 0.0
    %1778 = vmatprep.subr.mxu0 0.0
    %1779 = vmatpush1.xpose.msra.mxu0 0.0
    %1780 = vmatprep.subr.mxu0 0.0
    %1781 = vmatpush1.xpose.msra.mxu0 0.0
    %1782 = vmatprep.subr.mxu0 0.0
    %1783 = vmatpush1.xpose.msra.mxu0 0.0
    %1784 = vmatprep.subr.mxu0 0.0
    %1785 = vmatpush1.xpose.msra.mxu0 0.0
    %1786 = vmatprep.mubr.f32.mxu0 0.0
    %1787 = vmatmul.mubr.f32.gmra.mrb[0].mxu0 %v1690
    %v1788 = vpop.f32.mrb[0].mxu0
    %v1789 = vadd.f32 0.0, %v1788
    %v1790 = vpop.f32.mrb[0].mxu0
    %1791 = vmatprep.mubr.f32.mxu0 0.0
    %1792 = vmatmul.mubr.f32.gmra.mrb[0].mxu0 %v1692
    %v1793 = vpop.f32.mrb[0].mxu0
    %v1794 = vadd.f32 0.0, %v1793
    %v1795 = vpop.f32.mrb[0].mxu0
    %1796 = vmatprep.mubr.f32.mxu0 0.0
    %1797 = vmatmul.mubr.f32.gmra.mrb[0].mxu0 %v1694
    %v1798 = vpop.f32.mrb[0].mxu0
    %v1799 = vadd.f32 0.0, %v1798
    %v1800 = vpop.f32.mrb[0].mxu0
    %1801 = vmatprep.mubr.f32.mxu0 0.0
    %1802 = vmatmul.mubr.f32.gmra.mrb[0].mxu0 %v1696
    %v1803 = vpop.f32.mrb[0].mxu0
    %v1804 = vadd.f32 0.0, %v1803
    %v1805 = vpop.f32.mrb[0].mxu0
    %1806 = vmatprep.mubr.f32.mxu0 0.0
    %1807 = vmatmul.mubr.f32.gmra.mrb[0].mxu0 %v1698
    %v1808 = vpop.f32.mrb[0].mxu0
    %v1809 = vadd.f32 0.0, %v1808
    %v1810 = vpop.f32.mrb[0].mxu0
    %1811 = vmatprep.mubr.f32.mxu0 0.0
    %1812 = vmatmul.mubr.f32.gmra.mrb[0].mxu0 %v1700
    %v1813 = vpop.f32.mrb[0].mxu0
    %v1814 = vadd.f32 0.0, %v1813
    %v1815 = vpop.f32.mrb[0].mxu0
    %1816 = vmatprep.mubr.f32.mxu0 0.0
    %1817 = vmatmul.mubr.f32.gmra.mrb[0].mxu0 %v1702
    %v1818 = vpop.f32.mrb[0].mxu0
    %v1819 = vadd.f32 0.0, %v1818
    %v1820 = vpop.f32.mrb[0].mxu0
    %1821 = vmatprep.mubr.f32.mxu0 0.0
    %1822 = vmatmul.mubr.f32.gmra.mrb[0].mxu0 %v1704
    %v1823 = vpop.f32.mrb[0].mxu0
    %v1824 = vadd.f32 0.0, %v1823
    %v1825 = vpop.f32.mrb[0].mxu0
    %1826 = vdwg.mxu0
    %v1827 = vsel %vm893, %v1789, -inf
    %1828 = vmax.xlane.f32.xlu0 %v1827
    %v1829 = vpop.xlane.xlu0 %1828
    %v1830 = vsel %vm893, %v1794, -inf
    %1831 = vmax.xlane.f32.xlu0 %v1830
    %v1832 = vpop.xlane.xlu0 %1831
    %v1833 = vsel %vm893, %v1799, -inf
    %1834 = vmax.xlane.f32.xlu0 %v1833
    %v1835 = vpop.xlane.xlu0 %1834
    %v1836 = vsel %vm893, %v1804, -inf
    %1837 = vmax.xlane.f32.xlu0 %v1836
    %v1838 = vpop.xlane.xlu0 %1837
    %v1839 = vsel %vm893, %v1809, -inf
    %1840 = vmax.xlane.f32.xlu0 %v1839
    %v1841 = vpop.xlane.xlu0 %1840
    %v1842 = vsel %vm893, %v1814, -inf
    %1843 = vmax.xlane.f32.xlu0 %v1842
    %v1844 = vpop.xlane.xlu0 %1843
    %v1845 = vsel %vm893, %v1819, -inf
    %1846 = vmax.xlane.f32.xlu0 %v1845
    %v1847 = vpop.xlane.xlu0 %1846
    %v1848 = vsel %vm893, %v1824, -inf
    %1849 = vmax.xlane.f32.xlu0 %v1848
    %v1850 = vpop.xlane.xlu0 %1849
    %v1851 = vsub.f32 %v1789, %v1829
    %v1852 = vsub.f32 %v1794, %v1832
    %v1853 = vsub.f32 %v1799, %v1835
    %v1854 = vsub.f32 %v1804, %v1838
    %v1855 = vsub.f32 %v1809, %v1841
    %v1856 = vsub.f32 %v1814, %v1844
    %v1857 = vsub.f32 %v1819, %v1847
    %v1858 = vsub.f32 %v1824, %v1850
    %v1859 = vmul.f32 %v1851, 1.442695
    %v1860 = vpow.pop %v1859
    %v1861 = vmul.f32 %v1852, 1.442695
    %v1862 = vpow.pop %v1861
    %v1863 = vmul.f32 %v1853, 1.442695
    %v1864 = vpow.pop %v1863
    %v1865 = vmul.f32 %v1854, 1.442695
    %v1866 = vpow.pop %v1865
    %v1867 = vmul.f32 %v1855, 1.442695
    %v1868 = vpow.pop %v1867
    %v1869 = vmul.f32 %v1856, 1.442695
    %v1870 = vpow.pop %v1869
    %v1871 = vmul.f32 %v1857, 1.442695
    %v1872 = vpow.pop %v1871
    %v1873 = vmul.f32 %v1858, 1.442695
    %v1874 = vpow.pop %v1873
    %v1875 = vsel %vm893, %v1860, 0.0
    %1876 = vadd.xlane.f32.xlu0 %v1875
    %v1877 = vpop.xlane.xlu0 %1876
    %v1878 = vsel %vm893, %v1862, 0.0
    %1879 = vadd.xlane.f32.xlu0 %v1878
    %v1880 = vpop.xlane.xlu0 %1879
    %v1881 = vsel %vm893, %v1864, 0.0
    %1882 = vadd.xlane.f32.xlu0 %v1881
    %v1883 = vpop.xlane.xlu0 %1882
    %v1884 = vsel %vm893, %v1866, 0.0
    %1885 = vadd.xlane.f32.xlu0 %v1884
    %v1886 = vpop.xlane.xlu0 %1885
    %v1887 = vsel %vm893, %v1868, 0.0
    %1888 = vadd.xlane.f32.xlu0 %v1887
    %v1889 = vpop.xlane.xlu0 %1888
    %v1890 = vsel %vm893, %v1870, 0.0
    %1891 = vadd.xlane.f32.xlu0 %v1890
    %v1892 = vpop.xlane.xlu0 %1891
    %v1893 = vsel %vm893, %v1872, 0.0
    %1894 = vadd.xlane.f32.xlu0 %v1893
    %v1895 = vpop.xlane.xlu0 %1894
    %v1896 = vsel %vm893, %v1874, 0.0
    %1897 = vadd.xlane.f32.xlu0 %v1896
    %v1898 = vpop.xlane.xlu0 %1897
    %v1899 = vrcp.pop %v1877
    %v1900 = vrcp.pop %v1880
    %v1901 = vrcp.pop %v1883
    %v1902 = vrcp.pop %v1886
    %v1903 = vrcp.pop %v1889
    %v1904 = vrcp.pop %v1892
    %v1905 = vrcp.pop %v1895
    %v1906 = vrcp.pop %v1898
    %v1907 = vmul.f32 %v1860, %v1899
    %v1908 = vmul.f32 %v1862, %v1900
    %v1909 = vmul.f32 %v1864, %v1901
    %v1910 = vmul.f32 %v1866, %v1902
    %v1911 = vmul.f32 %v1868, %v1903
    %v1912 = vmul.f32 %v1870, %v1904
    %v1913 = vmul.f32 %v1872, %v1905
    %v1914 = vmul.f32 %v1874, %v1906
    %1923 = vrot.lane.b32.xlu0 %v1634, 64
    %v1924 = vpop.permute.xlu0 %1923
    %1925 = vrot.lane.b32.xlu0 %v1635, 64
    %v1926 = vpop.permute.xlu0 %1925
    %1927 = vrot.lane.b32.xlu0 %v1636, 64
    %v1928 = vpop.permute.xlu0 %1927
    %1929 = vrot.lane.b32.xlu0 %v1637, 64
    %v1930 = vpop.permute.xlu0 %1929
    %1931 = vrot.lane.b32.xlu0 %v1638, 64
    %v1932 = vpop.permute.xlu0 %1931
    %1933 = vrot.lane.b32.xlu0 %v1639, 64
    %v1934 = vpop.permute.xlu0 %1933
    %1935 = vrot.lane.b32.xlu0 %v1640, 64
    %v1936 = vpop.permute.xlu0 %1935
    %1937 = vrot.lane.b32.xlu0 %v1641, 64
    %v1938 = vpop.permute.xlu0 %1937
    %v1948 = vsel %vm893, %v1907, 0
    %v1951 = vsel %vm893, %v1908, 0
    %v1954 = vsel %vm893, %v1909, 0
    %v1957 = vsel %vm893, %v1910, 0
    %v1960 = vsel %vm893, %v1911, 0
    %v1963 = vsel %vm893, %v1912, 0
    %v1966 = vsel %vm893, %v1913, 0
    %v1969 = vsel %vm893, %v1914, 0
    %1971 = vmatprep.subr.mxu0 0.0
    %1972 = vmatpush1.msra.mxu0 %v1924
    %1973 = vmatprep.subr.mxu0 0.0
    %1974 = vmatpush1.msra.mxu0 %v1926
    %1975 = vmatprep.subr.mxu0 0.0
    %1976 = vmatpush1.msra.mxu0 %v1928
    %1977 = vmatprep.subr.mxu0 0.0
    %1978 = vmatpush1.msra.mxu0 %v1930
    %1979 = vmatprep.subr.mxu0 0.0
    %1980 = vmatpush1.msra.mxu0 %v1932
    %1981 = vmatprep.subr.mxu0 0.0
    %1982 = vmatpush1.msra.mxu0 %v1934
    %1983 = vmatprep.subr.mxu0 0.0
    %1984 = vmatpush1.msra.mxu0 %v1936
    %1985 = vmatprep.subr.mxu0 0.0
    %1986 = vmatpush1.msra.mxu0 %v1938
    %1987 = vmatprep.subr.mxu0 0.0
    %1988 = vmatpush1.msra.mxu0 0.0
    %1989 = vmatprep.subr.mxu0 0.0
    %1990 = vmatpush1.msra.mxu0 0.0
    %1991 = vmatprep.subr.mxu0 0.0
    %1992 = vmatpush1.msra.mxu0 0.0
    %1993 = vmatprep.subr.mxu0 0.0
    %1994 = vmatpush1.msra.mxu0 0.0
    %1995 = vmatprep.subr.mxu0 0.0
    %1996 = vmatpush1.msra.mxu0 0.0
    %1997 = vmatprep.subr.mxu0 0.0
    %1998 = vmatpush1.msra.mxu0 0.0
    %1999 = vmatprep.subr.mxu0 0.0
    %2000 = vmatpush1.msra.mxu0 0.0
    %2001 = vmatprep.subr.mxu0 0.0
    %2002 = vmatpush1.msra.mxu0 0.0
    %2003 = vmatprep.subr.mxu0 0.0
    %2004 = vmatpush1.msra.mxu0 0.0
    %2005 = vmatprep.subr.mxu0 0.0
    %2006 = vmatpush1.msra.mxu0 0.0
    %2007 = vmatprep.subr.mxu0 0.0
    %2008 = vmatpush1.msra.mxu0 0.0
    %2009 = vmatprep.subr.mxu0 0.0
    %2010 = vmatpush1.msra.mxu0 0.0
    %2011 = vmatprep.subr.mxu0 0.0
    %2012 = vmatpush1.msra.mxu0 0.0
    %2013 = vmatprep.subr.mxu0 0.0
    %2014 = vmatpush1.msra.mxu0 0.0
    %2015 = vmatprep.subr.mxu0 0.0
    %2016 = vmatpush1.msra.mxu0 0.0
    %2017 = vmatprep.subr.mxu0 0.0
    %2018 = vmatpush1.msra.mxu0 0.0
    %2019 = vmatprep.subr.mxu0 0.0
    %2020 = vmatpush1.msra.mxu0 0.0
    %2021 = vmatprep.subr.mxu0 0.0
    %2022 = vmatpush1.msra.mxu0 0.0
    %2023 = vmatprep.subr.mxu0 0.0
    %2024 = vmatpush1.msra.mxu0 0.0
    %2025 = vmatprep.subr.mxu0 0.0
    %2026 = vmatpush1.msra.mxu0 0.0
    %2027 = vmatprep.subr.mxu0 0.0
    %2028 = vmatpush1.msra.mxu0 0.0
    %2029 = vmatprep.subr.mxu0 0.0
    %2030 = vmatpush1.msra.mxu0 0.0
    %2031 = vmatprep.subr.mxu0 0.0
    %2032 = vmatpush1.msra.mxu0 0.0
    %2033 = vmatprep.subr.mxu0 0.0
    %2034 = vmatpush1.msra.mxu0 0.0
    %2035 = vmatprep.mubr.f32.mxu0 0.0
    %2036 = vmatmul.mubr.f32.gmra.mrb[0].mxu0 %v1948
    %v2037 = vpop.f32.mrb[0].mxu0
    %v2038 = vadd.f32 0.0, %v2037
    %v2039 = vpop.f32.mrb[0].mxu0
    %2040 = vmatprep.mubr.f32.mxu0 0.0
    %2041 = vmatmul.mubr.f32.gmra.mrb[0].mxu0 %v1951
    %v2042 = vpop.f32.mrb[0].mxu0
    %v2043 = vadd.f32 0.0, %v2042
    %v2044 = vpop.f32.mrb[0].mxu0
    %2045 = vmatprep.mubr.f32.mxu0 0.0
    %2046 = vmatmul.mubr.f32.gmra.mrb[0].mxu0 %v1954
    %v2047 = vpop.f32.mrb[0].mxu0
    %v2048 = vadd.f32 0.0, %v2047
    %v2049 = vpop.f32.mrb[0].mxu0
    %2050 = vmatprep.mubr.f32.mxu0 0.0
    %2051 = vmatmul.mubr.f32.gmra.mrb[0].mxu0 %v1957
    %v2052 = vpop.f32.mrb[0].mxu0
    %v2053 = vadd.f32 0.0, %v2052
    %v2054 = vpop.f32.mrb[0].mxu0
    %2055 = vmatprep.mubr.f32.mxu0 0.0
    %2056 = vmatmul.mubr.f32.gmra.mrb[0].mxu0 %v1960
    %v2057 = vpop.f32.mrb[0].mxu0
    %v2058 = vadd.f32 0.0, %v2057
    %v2059 = vpop.f32.mrb[0].mxu0
    %2060 = vmatprep.mubr.f32.mxu0 0.0
    %2061 = vmatmul.mubr.f32.gmra.mrb[0].mxu0 %v1963
    %v2062 = vpop.f32.mrb[0].mxu0
    %v2063 = vadd.f32 0.0, %v2062
    %v2064 = vpop.f32.mrb[0].mxu0
    %2065 = vmatprep.mubr.f32.mxu0 0.0
    %2066 = vmatmul.mubr.f32.gmra.mrb[0].mxu0 %v1966
    %v2067 = vpop.f32.mrb[0].mxu0
    %v2068 = vadd.f32 0.0, %v2067
    %v2069 = vpop.f32.mrb[0].mxu0
    %2070 = vmatprep.mubr.f32.mxu0 0.0
    %2071 = vmatmul.mubr.f32.gmra.mrb[0].mxu0 %v1969
    %v2072 = vpop.f32.mrb[0].mxu0
    %v2073 = vadd.f32 0.0, %v2072
    %v2074 = vpop.f32.mrb[0].mxu0
    %2075 = vdwg.mxu0
    %2084 = vrot.lane.b32.xlu0 %v2038, 64
    %v2085 = vpop.permute.xlu0 %2084
    %2086 = vrot.lane.b32.xlu0 %v2043, 64
    %v2087 = vpop.permute.xlu0 %2086
    %2088 = vrot.lane.b32.xlu0 %v2048, 64
    %v2089 = vpop.permute.xlu0 %2088
    %2090 = vrot.lane.b32.xlu0 %v2053, 64
    %v2091 = vpop.permute.xlu0 %2090
    %2092 = vrot.lane.b32.xlu0 %v2058, 64
    %v2093 = vpop.permute.xlu0 %2092
    %2094 = vrot.lane.b32.xlu0 %v2063, 64
    %v2095 = vpop.permute.xlu0 %2094
    %2096 = vrot.lane.b32.xlu0 %v2068, 64
    %v2097 = vpop.permute.xlu0 %2096
    %2098 = vrot.lane.b32.xlu0 %v2073, 64
    %v2099 = vpop.permute.xlu0 %2098
    %vm2108 = vcmask 785920
    %2109 = vst.msk [vmem:[#allocation3] sm:$0xff] %vm2108, %v2085
    %2110 = vst.msk [vmem:[#allocation3 + $0x8] sm:$0xff] %vm2108, %v2087
    %2111 = vst.msk [vmem:[#allocation3 + $0x10] sm:$0xff] %vm2108, %v2089
    %2112 = vst.msk [vmem:[#allocation3 + $0x18] sm:$0xff] %vm2108, %v2091
    %2113 = vst.msk [vmem:[#allocation3 + $0x20] sm:$0xff] %vm2108, %v2093
    %2114 = vst.msk [vmem:[#allocation3 + $0x28] sm:$0xff] %vm2108, %v2095
    %2115 = vst.msk [vmem:[#allocation3 + $0x30] sm:$0xff] %vm2108, %v2097
    %2116 = vst.msk [vmem:[#allocation3 + $0x38] sm:$0xff] %vm2108, %v2099
    %v2117 = vld [vmem:[#allocation2] sm:$0xff]
    %v2118 = vld [vmem:[#allocation2 + $0x18] sm:$0xff]
    %v2119 = vld [vmem:[#allocation2 + $0x30] sm:$0xff]
    %v2120 = vld [vmem:[#allocation2 + $0x48] sm:$0xff]
    %v2121 = vld [vmem:[#allocation2 + $0x60] sm:$0xff]
    %v2122 = vld [vmem:[#allocation2 + $0x78] sm:$0xff]
    %v2123 = vld [vmem:[#allocation2 + $0x90] sm:$0xff]
    %v2124 = vld [vmem:[#allocation2 + $0xa8] sm:$0xff]
    %v2125 = vld [vmem:[#allocation2 + $0x8] sm:$0xff]
    %v2126 = vld [vmem:[#allocation2 + $0x20] sm:$0xff]
    %v2127 = vld [vmem:[#allocation2 + $0x38] sm:$0xff]
    %v2128 = vld [vmem:[#allocation2 + $0x50] sm:$0xff]
    %v2129 = vld [vmem:[#allocation2 + $0x68] sm:$0xff]
    %v2130 = vld [vmem:[#allocation2 + $0x80] sm:$0xff]
    %v2131 = vld [vmem:[#allocation2 + $0x98] sm:$0xff]
    %v2132 = vld [vmem:[#allocation2 + $0xb0] sm:$0xff]
    %v2133 = vld [vmem:[#allocation2 + $0x10] sm:$0xff]
    %v2134 = vld [vmem:[#allocation2 + $0x28] sm:$0xff]
    %v2135 = vld [vmem:[#allocation2 + $0x40] sm:$0xff]
    %v2136 = vld [vmem:[#allocation2 + $0x58] sm:$0xff]
    %v2137 = vld [vmem:[#allocation2 + $0x70] sm:$0xff]
    %v2138 = vld [vmem:[#allocation2 + $0x88] sm:$0xff]
    %v2139 = vld [vmem:[#allocation2 + $0xa0] sm:$0xff]
    %v2140 = vld [vmem:[#allocation2 + $0xb8] sm:$0xff]
    %2149 = vrot.lane.b32.xlu0 %v2117, 32
    %v2150 = vpop.permute.xlu0 %2149
    %2151 = vrot.lane.b32.xlu0 %v2118, 32
    %v2152 = vpop.permute.xlu0 %2151
    %2153 = vrot.lane.b32.xlu0 %v2119, 32
    %v2154 = vpop.permute.xlu0 %2153
    %2155 = vrot.lane.b32.xlu0 %v2120, 32
    %v2156 = vpop.permute.xlu0 %2155
    %2157 = vrot.lane.b32.xlu0 %v2121, 32
    %v2158 = vpop.permute.xlu0 %2157
    %2159 = vrot.lane.b32.xlu0 %v2122, 32
    %v2160 = vpop.permute.xlu0 %2159
    %2161 = vrot.lane.b32.xlu0 %v2123, 32
    %v2162 = vpop.permute.xlu0 %2161
    %2163 = vrot.lane.b32.xlu0 %v2124, 32
    %v2164 = vpop.permute.xlu0 %2163
    %2173 = vrot.lane.b32.xlu0 %v2125, 32
    %v2174 = vpop.permute.xlu0 %2173
    %2175 = vrot.lane.b32.xlu0 %v2126, 32
    %v2176 = vpop.permute.xlu0 %2175
    %2177 = vrot.lane.b32.xlu0 %v2127, 32
    %v2178 = vpop.permute.xlu0 %2177
    %2179 = vrot.lane.b32.xlu0 %v2128, 32
    %v2180 = vpop.permute.xlu0 %2179
    %2181 = vrot.lane.b32.xlu0 %v2129, 32
    %v2182 = vpop.permute.xlu0 %2181
    %2183 = vrot.lane.b32.xlu0 %v2130, 32
    %v2184 = vpop.permute.xlu0 %2183
    %2185 = vrot.lane.b32.xlu0 %v2131, 32
    %v2186 = vpop.permute.xlu0 %2185
    %2187 = vrot.lane.b32.xlu0 %v2132, 32
    %v2188 = vpop.permute.xlu0 %2187
    %v2189 = vsel %vm739, %v2150, 0
    %v2191 = vsel %vm739, %v2152, 0
    %v2193 = vsel %vm739, %v2154, 0
    %v2195 = vsel %vm739, %v2156, 0
    %v2197 = vsel %vm739, %v2158, 0
    %v2199 = vsel %vm739, %v2160, 0
    %v2201 = vsel %vm739, %v2162, 0
    %v2203 = vsel %vm739, %v2164, 0
    %v2205 = vsel %vm739, %v2174, 0
    %v2207 = vsel %vm739, %v2176, 0
    %v2209 = vsel %vm739, %v2178, 0
    %v2211 = vsel %vm739, %v2180, 0
    %v2213 = vsel %vm739, %v2182, 0
    %v2215 = vsel %vm739, %v2184, 0
    %v2217 = vsel %vm739, %v2186, 0
    %v2219 = vsel %vm739, %v2188, 0
    %2221 = vmatprep.subr.mxu0 0.0
    %2222 = vmatpush1.xpose.msra.mxu0 %v2205
    %2223 = vmatprep.subr.mxu0 0.0
    %2224 = vmatpush1.xpose.msra.mxu0 %v2207
    %2225 = vmatprep.subr.mxu0 0.0
    %2226 = vmatpush1.xpose.msra.mxu0 %v2209
    %2227 = vmatprep.subr.mxu0 0.0
    %2228 = vmatpush1.xpose.msra.mxu0 %v2211
    %2229 = vmatprep.subr.mxu0 0.0
    %2230 = vmatpush1.xpose.msra.mxu0 %v2213
    %2231 = vmatprep.subr.mxu0 0.0
    %2232 = vmatpush1.xpose.msra.mxu0 %v2215
    %2233 = vmatprep.subr.mxu0 0.0
    %2234 = vmatpush1.xpose.msra.mxu0 %v2217
    %2235 = vmatprep.subr.mxu0 0.0
    %2236 = vmatpush1.xpose.msra.mxu0 %v2219
    %2237 = vmatprep.subr.mxu0 0.0
    %2238 = vmatpush1.xpose.msra.mxu0 0.0
    %2239 = vmatprep.subr.mxu0 0.0
    %2240 = vmatpush1.xpose.msra.mxu0 0.0
    %2241 = vmatprep.subr.mxu0 0.0
    %2242 = vmatpush1.xpose.msra.mxu0 0.0
    %2243 = vmatprep.subr.mxu0 0.0
    %2244 = vmatpush1.xpose.msra.mxu0 0.0
    %2245 = vmatprep.subr.mxu0 0.0
    %2246 = vmatpush1.xpose.msra.mxu0 0.0
    %2247 = vmatprep.subr.mxu0 0.0
    %2248 = vmatpush1.xpose.msra.mxu0 0.0
    %2249 = vmatprep.subr.mxu0 0.0
    %2250 = vmatpush1.xpose.msra.mxu0 0.0
    %2251 = vmatprep.subr.mxu0 0.0
    %2252 = vmatpush1.xpose.msra.mxu0 0.0
    %2253 = vmatprep.subr.mxu0 0.0
    %2254 = vmatpush1.xpose.msra.mxu0 0.0
    %2255 = vmatprep.subr.mxu0 0.0
    %2256 = vmatpush1.xpose.msra.mxu0 0.0
    %2257 = vmatprep.subr.mxu0 0.0
    %2258 = vmatpush1.xpose.msra.mxu0 0.0
    %2259 = vmatprep.subr.mxu0 0.0
    %2260 = vmatpush1.xpose.msra.mxu0 0.0
    %2261 = vmatprep.subr.mxu0 0.0
    %2262 = vmatpush1.xpose.msra.mxu0 0.0
    %2263 = vmatprep.subr.mxu0 0.0
    %2264 = vmatpush1.xpose.msra.mxu0 0.0
    %2265 = vmatprep.subr.mxu0 0.0
    %2266 = vmatpush1.xpose.msra.mxu0 0.0
    %2267 = vmatprep.subr.mxu0 0.0
    %2268 = vmatpush1.xpose.msra.mxu0 0.0
    %2269 = vmatprep.subr.mxu0 0.0
    %2270 = vmatpush1.xpose.msra.mxu0 0.0
    %2271 = vmatprep.subr.mxu0 0.0
    %2272 = vmatpush1.xpose.msra.mxu0 0.0
    %2273 = vmatprep.subr.mxu0 0.0
    %2274 = vmatpush1.xpose.msra.mxu0 0.0
    %2275 = vmatprep.subr.mxu0 0.0
    %2276 = vmatpush1.xpose.msra.mxu0 0.0
    %2277 = vmatprep.subr.mxu0 0.0
    %2278 = vmatpush1.xpose.msra.mxu0 0.0
    %2279 = vmatprep.subr.mxu0 0.0
    %2280 = vmatpush1.xpose.msra.mxu0 0.0
    %2281 = vmatprep.subr.mxu0 0.0
    %2282 = vmatpush1.xpose.msra.mxu0 0.0
    %2283 = vmatprep.subr.mxu0 0.0
    %2284 = vmatpush1.xpose.msra.mxu0 0.0
    %2285 = vmatprep.mubr.f32.mxu0 0.0
    %2286 = vmatmul.mubr.f32.gmra.mrb[0].mxu0 %v2189
    %v2287 = vpop.f32.mrb[0].mxu0
    %v2288 = vadd.f32 0.0, %v2287
    %v2289 = vpop.f32.mrb[0].mxu0
    %2290 = vmatprep.mubr.f32.mxu0 0.0
    %2291 = vmatmul.mubr.f32.gmra.mrb[0].mxu0 %v2191
    %v2292 = vpop.f32.mrb[0].mxu0
    %v2293 = vadd.f32 0.0, %v2292
    %v2294 = vpop.f32.mrb[0].mxu0
    %2295 = vmatprep.mubr.f32.mxu0 0.0
    %2296 = vmatmul.mubr.f32.gmra.mrb[0].mxu0 %v2193
    %v2297 = vpop.f32.mrb[0].mxu0
    %v2298 = vadd.f32 0.0, %v2297
    %v2299 = vpop.f32.mrb[0].mxu0
    %2300 = vmatprep.mubr.f32.mxu0 0.0
    %2301 = vmatmul.mubr.f32.gmra.mrb[0].mxu0 %v2195
    %v2302 = vpop.f32.mrb[0].mxu0
    %v2303 = vadd.f32 0.0, %v2302
    %v2304 = vpop.f32.mrb[0].mxu0
    %2305 = vmatprep.mubr.f32.mxu0 0.0
    %2306 = vmatmul.mubr.f32.gmra.mrb[0].mxu0 %v2197
    %v2307 = vpop.f32.mrb[0].mxu0
    %v2308 = vadd.f32 0.0, %v2307
    %v2309 = vpop.f32.mrb[0].mxu0
    %2310 = vmatprep.mubr.f32.mxu0 0.0
    %2311 = vmatmul.mubr.f32.gmra.mrb[0].mxu0 %v2199
    %v2312 = vpop.f32.mrb[0].mxu0
    %v2313 = vadd.f32 0.0, %v2312
    %v2314 = vpop.f32.mrb[0].mxu0
    %2315 = vmatprep.mubr.f32.mxu0 0.0
    %2316 = vmatmul.mubr.f32.gmra.mrb[0].mxu0 %v2201
    %v2317 = vpop.f32.mrb[0].mxu0
    %v2318 = vadd.f32 0.0, %v2317
    %v2319 = vpop.f32.mrb[0].mxu0
    %2320 = vmatprep.mubr.f32.mxu0 0.0
    %2321 = vmatmul.mubr.f32.gmra.mrb[0].mxu0 %v2203
    %v2322 = vpop.f32.mrb[0].mxu0
    %v2323 = vadd.f32 0.0, %v2322
    %v2324 = vpop.f32.mrb[0].mxu0
    %2325 = vdwg.mxu0
    %v2326 = vsel %vm893, %v2288, -inf
    %2327 = vmax.xlane.f32.xlu0 %v2326
    %v2328 = vpop.xlane.xlu0 %2327
    %v2329 = vsel %vm893, %v2293, -inf
    %2330 = vmax.xlane.f32.xlu0 %v2329
    %v2331 = vpop.xlane.xlu0 %2330
    %v2332 = vsel %vm893, %v2298, -inf
    %2333 = vmax.xlane.f32.xlu0 %v2332
    %v2334 = vpop.xlane.xlu0 %2333
    %v2335 = vsel %vm893, %v2303, -inf
    %2336 = vmax.xlane.f32.xlu0 %v2335
    %v2337 = vpop.xlane.xlu0 %2336
    %v2338 = vsel %vm893, %v2308, -inf
    %2339 = vmax.xlane.f32.xlu0 %v2338
    %v2340 = vpop.xlane.xlu0 %2339
    %v2341 = vsel %vm893, %v2313, -inf
    %2342 = vmax.xlane.f32.xlu0 %v2341
    %v2343 = vpop.xlane.xlu0 %2342
    %v2344 = vsel %vm893, %v2318, -inf
    %2345 = vmax.xlane.f32.xlu0 %v2344
    %v2346 = vpop.xlane.xlu0 %2345
    %v2347 = vsel %vm893, %v2323, -inf
    %2348 = vmax.xlane.f32.xlu0 %v2347
    %v2349 = vpop.xlane.xlu0 %2348
    %v2350 = vsub.f32 %v2288, %v2328
    %v2351 = vsub.f32 %v2293, %v2331
    %v2352 = vsub.f32 %v2298, %v2334
    %v2353 = vsub.f32 %v2303, %v2337
    %v2354 = vsub.f32 %v2308, %v2340
    %v2355 = vsub.f32 %v2313, %v2343
    %v2356 = vsub.f32 %v2318, %v2346
    %v2357 = vsub.f32 %v2323, %v2349
    %v2358 = vmul.f32 %v2350, 1.442695
    %v2359 = vpow.pop %v2358
    %v2360 = vmul.f32 %v2351, 1.442695
    %v2361 = vpow.pop %v2360
    %v2362 = vmul.f32 %v2352, 1.442695
    %v2363 = vpow.pop %v2362
    %v2364 = vmul.f32 %v2353, 1.442695
    %v2365 = vpow.pop %v2364
    %v2366 = vmul.f32 %v2354, 1.442695
    %v2367 = vpow.pop %v2366
    %v2368 = vmul.f32 %v2355, 1.442695
    %v2369 = vpow.pop %v2368
    %v2370 = vmul.f32 %v2356, 1.442695
    %v2371 = vpow.pop %v2370
    %v2372 = vmul.f32 %v2357, 1.442695
    %v2373 = vpow.pop %v2372
    %v2374 = vsel %vm893, %v2359, 0.0
    %2375 = vadd.xlane.f32.xlu0 %v2374
    %v2376 = vpop.xlane.xlu0 %2375
    %v2377 = vsel %vm893, %v2361, 0.0
    %2378 = vadd.xlane.f32.xlu0 %v2377
    %v2379 = vpop.xlane.xlu0 %2378
    %v2380 = vsel %vm893, %v2363, 0.0
    %2381 = vadd.xlane.f32.xlu0 %v2380
    %v2382 = vpop.xlane.xlu0 %2381
    %v2383 = vsel %vm893, %v2365, 0.0
    %2384 = vadd.xlane.f32.xlu0 %v2383
    %v2385 = vpop.xlane.xlu0 %2384
    %v2386 = vsel %vm893, %v2367, 0.0
    %2387 = vadd.xlane.f32.xlu0 %v2386
    %v2388 = vpop.xlane.xlu0 %2387
    %v2389 = vsel %vm893, %v2369, 0.0
    %2390 = vadd.xlane.f32.xlu0 %v2389
    %v2391 = vpop.xlane.xlu0 %2390
    %v2392 = vsel %vm893, %v2371, 0.0
    %2393 = vadd.xlane.f32.xlu0 %v2392
    %v2394 = vpop.xlane.xlu0 %2393
    %v2395 = vsel %vm893, %v2373, 0.0
    %2396 = vadd.xlane.f32.xlu0 %v2395
    %v2397 = vpop.xlane.xlu0 %2396
    %v2398 = vrcp.pop %v2376
    %v2399 = vrcp.pop %v2379
    %v2400 = vrcp.pop %v2382
    %v2401 = vrcp.pop %v2385
    %v2402 = vrcp.pop %v2388
    %v2403 = vrcp.pop %v2391
    %v2404 = vrcp.pop %v2394
    %v2405 = vrcp.pop %v2397
    %v2406 = vmul.f32 %v2359, %v2398
    %v2407 = vmul.f32 %v2361, %v2399
    %v2408 = vmul.f32 %v2363, %v2400
    %v2409 = vmul.f32 %v2365, %v2401
    %v2410 = vmul.f32 %v2367, %v2402
    %v2411 = vmul.f32 %v2369, %v2403
    %v2412 = vmul.f32 %v2371, %v2404
    %v2413 = vmul.f32 %v2373, %v2405
    %2422 = vrot.lane.b32.xlu0 %v2133, 32
    %v2423 = vpop.permute.xlu0 %2422
    %2424 = vrot.lane.b32.xlu0 %v2134, 32
    %v2425 = vpop.permute.xlu0 %2424
    %2426 = vrot.lane.b32.xlu0 %v2135, 32
    %v2427 = vpop.permute.xlu0 %2426
    %2428 = vrot.lane.b32.xlu0 %v2136, 32
    %v2429 = vpop.permute.xlu0 %2428
    %2430 = vrot.lane.b32.xlu0 %v2137, 32
    %v2431 = vpop.permute.xlu0 %2430
    %2432 = vrot.lane.b32.xlu0 %v2138, 32
    %v2433 = vpop.permute.xlu0 %2432
    %2434 = vrot.lane.b32.xlu0 %v2139, 32
    %v2435 = vpop.permute.xlu0 %2434
    %2436 = vrot.lane.b32.xlu0 %v2140, 32
    %v2437 = vpop.permute.xlu0 %2436
    %v2447 = vsel %vm893, %v2406, 0
    %v2450 = vsel %vm893, %v2407, 0
    %v2453 = vsel %vm893, %v2408, 0
    %v2456 = vsel %vm893, %v2409, 0
    %v2459 = vsel %vm893, %v2410, 0
    %v2462 = vsel %vm893, %v2411, 0
    %v2465 = vsel %vm893, %v2412, 0
    %v2468 = vsel %vm893, %v2413, 0
    %2470 = vmatprep.subr.mxu0 0.0
    %2471 = vmatpush1.msra.mxu0 %v2423
    %2472 = vmatprep.subr.mxu0 0.0
    %2473 = vmatpush1.msra.mxu0 %v2425
    %2474 = vmatprep.subr.mxu0 0.0
    %2475 = vmatpush1.msra.mxu0 %v2427
    %2476 = vmatprep.subr.mxu0 0.0
    %2477 = vmatpush1.msra.mxu0 %v2429
    %2478 = vmatprep.subr.mxu0 0.0
    %2479 = vmatpush1.msra.mxu0 %v2431
    %2480 = vmatprep.subr.mxu0 0.0
    %2481 = vmatpush1.msra.mxu0 %v2433
    %2482 = vmatprep.subr.mxu0 0.0
    %2483 = vmatpush1.msra.mxu0 %v2435
    %2484 = vmatprep.subr.mxu0 0.0
    %2485 = vmatpush1.msra.mxu0 %v2437
    %2486 = vmatprep.subr.mxu0 0.0
    %2487 = vmatpush1.msra.mxu0 0.0
    %2488 = vmatprep.subr.mxu0 0.0
    %2489 = vmatpush1.msra.mxu0 0.0
    %2490 = vmatprep.subr.mxu0 0.0
    %2491 = vmatpush1.msra.mxu0 0.0
    %2492 = vmatprep.subr.mxu0 0.0
    %2493 = vmatpush1.msra.mxu0 0.0
    %2494 = vmatprep.subr.mxu0 0.0
    %2495 = vmatpush1.msra.mxu0 0.0
    %2496 = vmatprep.subr.mxu0 0.0
    %2497 = vmatpush1.msra.mxu0 0.0
    %2498 = vmatprep.subr.mxu0 0.0
    %2499 = vmatpush1.msra.mxu0 0.0
    %2500 = vmatprep.subr.mxu0 0.0
    %2501 = vmatpush1.msra.mxu0 0.0
    %2502 = vmatprep.subr.mxu0 0.0
    %2503 = vmatpush1.msra.mxu0 0.0
    %2504 = vmatprep.subr.mxu0 0.0
    %2505 = vmatpush1.msra.mxu0 0.0
    %2506 = vmatprep.subr.mxu0 0.0
    %2507 = vmatpush1.msra.mxu0 0.0
    %2508 = vmatprep.subr.mxu0 0.0
    %2509 = vmatpush1.msra.mxu0 0.0
    %2510 = vmatprep.subr.mxu0 0.0
    %2511 = vmatpush1.msra.mxu0 0.0
    %2512 = vmatprep.subr.mxu0 0.0
    %2513 = vmatpush1.msra.mxu0 0.0
    %2514 = vmatprep.subr.mxu0 0.0
    %2515 = vmatpush1.msra.mxu0 0.0
    %2516 = vmatprep.subr.mxu0 0.0
    %2517 = vmatpush1.msra.mxu0 0.0
    %2518 = vmatprep.subr.mxu0 0.0
    %2519 = vmatpush1.msra.mxu0 0.0
    %2520 = vmatprep.subr.mxu0 0.0
    %2521 = vmatpush1.msra.mxu0 0.0
    %2522 = vmatprep.subr.mxu0 0.0
    %2523 = vmatpush1.msra.mxu0 0.0
    %2524 = vmatprep.subr.mxu0 0.0
    %2525 = vmatpush1.msra.mxu0 0.0
    %2526 = vmatprep.subr.mxu0 0.0
    %2527 = vmatpush1.msra.mxu0 0.0
    %2528 = vmatprep.subr.mxu0 0.0
    %2529 = vmatpush1.msra.mxu0 0.0
    %2530 = vmatprep.subr.mxu0 0.0
    %2531 = vmatpush1.msra.mxu0 0.0
    %2532 = vmatprep.subr.mxu0 0.0
    %2533 = vmatpush1.msra.mxu0 0.0
    %2534 = vmatprep.mubr.f32.mxu0 0.0
    %2535 = vmatmul.mubr.f32.gmra.mrb[0].mxu0 %v2447
    %v2536 = vpop.f32.mrb[0].mxu0
    %v2537 = vadd.f32 0.0, %v2536
    %v2538 = vpop.f32.mrb[0].mxu0
    %2539 = vmatprep.mubr.f32.mxu0 0.0
    %2540 = vmatmul.mubr.f32.gmra.mrb[0].mxu0 %v2450
    %v2541 = vpop.f32.mrb[0].mxu0
    %v2542 = vadd.f32 0.0, %v2541
    %v2543 = vpop.f32.mrb[0].mxu0
    %2544 = vmatprep.mubr.f32.mxu0 0.0
    %2545 = vmatmul.mubr.f32.gmra.mrb[0].mxu0 %v2453
    %v2546 = vpop.f32.mrb[0].mxu0
    %v2547 = vadd.f32 0.0, %v2546
    %v2548 = vpop.f32.mrb[0].mxu0
    %2549 = vmatprep.mubr.f32.mxu0 0.0
    %2550 = vmatmul.mubr.f32.gmra.mrb[0].mxu0 %v2456
    %v2551 = vpop.f32.mrb[0].mxu0
    %v2552 = vadd.f32 0.0, %v2551
    %v2553 = vpop.f32.mrb[0].mxu0
    %2554 = vmatprep.mubr.f32.mxu0 0.0
    %2555 = vmatmul.mubr.f32.gmra.mrb[0].mxu0 %v2459
    %v2556 = vpop.f32.mrb[0].mxu0
    %v2557 = vadd.f32 0.0, %v2556
    %v2558 = vpop.f32.mrb[0].mxu0
    %2559 = vmatprep.mubr.f32.mxu0 0.0
    %2560 = vmatmul.mubr.f32.gmra.mrb[0].mxu0 %v2462
    %v2561 = vpop.f32.mrb[0].mxu0
    %v2562 = vadd.f32 0.0, %v2561
    %v2563 = vpop.f32.mrb[0].mxu0
    %2564 = vmatprep.mubr.f32.mxu0 0.0
    %2565 = vmatmul.mubr.f32.gmra.mrb[0].mxu0 %v2465
    %v2566 = vpop.f32.mrb[0].mxu0
    %v2567 = vadd.f32 0.0, %v2566
    %v2568 = vpop.f32.mrb[0].mxu0
    %2569 = vmatprep.mubr.f32.mxu0 0.0
    %2570 = vmatmul.mubr.f32.gmra.mrb[0].mxu0 %v2468
    %v2571 = vpop.f32.mrb[0].mxu0
    %v2572 = vadd.f32 0.0, %v2571
    %v2573 = vpop.f32.mrb[0].mxu0
    %2574 = vdwg.mxu0
    %2583 = vrot.lane.b32.xlu0 %v2537, 96
    %v2584 = vpop.permute.xlu0 %2583
    %2585 = vrot.lane.b32.xlu0 %v2542, 96
    %v2586 = vpop.permute.xlu0 %2585
    %2587 = vrot.lane.b32.xlu0 %v2547, 96
    %v2588 = vpop.permute.xlu0 %2587
    %2589 = vrot.lane.b32.xlu0 %v2552, 96
    %v2590 = vpop.permute.xlu0 %2589
    %2591 = vrot.lane.b32.xlu0 %v2557, 96
    %v2592 = vpop.permute.xlu0 %2591
    %2593 = vrot.lane.b32.xlu0 %v2562, 96
    %v2594 = vpop.permute.xlu0 %2593
    %2595 = vrot.lane.b32.xlu0 %v2567, 96
    %v2596 = vpop.permute.xlu0 %2595
    %2597 = vrot.lane.b32.xlu0 %v2572, 96
    %v2598 = vpop.permute.xlu0 %2597
    %vm2607 = vcmask 1048320
    %2608 = vst.msk [vmem:[#allocation3] sm:$0xff] %vm2607, %v2584
    %2609 = vst.msk [vmem:[#allocation3 + $0x8] sm:$0xff] %vm2607, %v2586
    %2610 = vst.msk [vmem:[#allocation3 + $0x10] sm:$0xff] %vm2607, %v2588
    %2611 = vst.msk [vmem:[#allocation3 + $0x18] sm:$0xff] %vm2607, %v2590
    %2612 = vst.msk [vmem:[#allocation3 + $0x20] sm:$0xff] %vm2607, %v2592
    %2613 = vst.msk [vmem:[#allocation3 + $0x28] sm:$0xff] %vm2607, %v2594
    %2614 = vst.msk [vmem:[#allocation3 + $0x30] sm:$0xff] %vm2607, %v2596
    %2615 = vst.msk [vmem:[#allocation3 + $0x38] sm:$0xff] %vm2607, %v2598
    %v2616 = vld [vmem:[#allocation2 + $0xc0] sm:$0xff]
    %v2617 = vld [vmem:[#allocation2 + $0xd8] sm:$0xff]
    %v2618 = vld [vmem:[#allocation2 + $0xf0] sm:$0xff]
    %v2619 = vld [vmem:[#allocation2 + $0x108] sm:$0xff]
    %v2620 = vld [vmem:[#allocation2 + $0x120] sm:$0xff]
    %v2621 = vld [vmem:[#allocation2 + $0x138] sm:$0xff]
    %v2622 = vld [vmem:[#allocation2 + $0x150] sm:$0xff]
    %v2623 = vld [vmem:[#allocation2 + $0x168] sm:$0xff]
    %v2624 = vld [vmem:[#allocation2 + $0xc8] sm:$0xff]
    %v2625 = vld [vmem:[#allocation2 + $0xe0] sm:$0xff]
    %v2626 = vld [vmem:[#allocation2 + $0xf8] sm:$0xff]
    %v2627 = vld [vmem:[#allocation2 + $0x110] sm:$0xff]
    %v2628 = vld [vmem:[#allocation2 + $0x128] sm:$0xff]
    %v2629 = vld [vmem:[#allocation2 + $0x140] sm:$0xff]
    %v2630 = vld [vmem:[#allocation2 + $0x158] sm:$0xff]
    %v2631 = vld [vmem:[#allocation2 + $0x170] sm:$0xff]
    %v2632 = vld [vmem:[#allocation2 + $0xd0] sm:$0xff]
    %v2633 = vld [vmem:[#allocation2 + $0xe8] sm:$0xff]
    %v2634 = vld [vmem:[#allocation2 + $0x100] sm:$0xff]
    %v2635 = vld [vmem:[#allocation2 + $0x118] sm:$0xff]
    %v2636 = vld [vmem:[#allocation2 + $0x130] sm:$0xff]
    %v2637 = vld [vmem:[#allocation2 + $0x148] sm:$0xff]
    %v2638 = vld [vmem:[#allocation2 + $0x160] sm:$0xff]
    %v2639 = vld [vmem:[#allocation2 + $0x178] sm:$0xff]
    %v2641 = vsel %vm739, %v2616, 0
    %v2644 = vsel %vm739, %v2617, 0
    %v2647 = vsel %vm739, %v2618, 0
    %v2650 = vsel %vm739, %v2619, 0
    %v2653 = vsel %vm739, %v2620, 0
    %v2656 = vsel %vm739, %v2621, 0
    %v2659 = vsel %vm739, %v2622, 0
    %v2662 = vsel %vm739, %v2623, 0
    %v2665 = vsel %vm739, %v2624, 0
    %v2668 = vsel %vm739, %v2625, 0
    %v2671 = vsel %vm739, %v2626, 0
    %v2674 = vsel %vm739, %v2627, 0
    %v2677 = vsel %vm739, %v2628, 0
    %v2680 = vsel %vm739, %v2629, 0
    %v2683 = vsel %vm739, %v2630, 0
    %v2686 = vsel %vm739, %v2631, 0
    %2688 = vmatprep.subr.mxu0 0.0
    %2689 = vmatpush1.xpose.msra.mxu0 %v2665
    %2690 = vmatprep.subr.mxu0 0.0
    %2691 = vmatpush1.xpose.msra.mxu0 %v2668
    %2692 = vmatprep.subr.mxu0 0.0
    %2693 = vmatpush1.xpose.msra.mxu0 %v2671
    %2694 = vmatprep.subr.mxu0 0.0
    %2695 = vmatpush1.xpose.msra.mxu0 %v2674
    %2696 = vmatprep.subr.mxu0 0.0
    %2697 = vmatpush1.xpose.msra.mxu0 %v2677
    %2698 = vmatprep.subr.mxu0 0.0
    %2699 = vmatpush1.xpose.msra.mxu0 %v2680
    %2700 = vmatprep.subr.mxu0 0.0
    %2701 = vmatpush1.xpose.msra.mxu0 %v2683
    %2702 = vmatprep.subr.mxu0 0.0
    %2703 = vmatpush1.xpose.msra.mxu0 %v2686
    %2704 = vmatprep.subr.mxu0 0.0
    %2705 = vmatpush1.xpose.msra.mxu0 0.0
    %2706 = vmatprep.subr.mxu0 0.0
    %2707 = vmatpush1.xpose.msra.mxu0 0.0
    %2708 = vmatprep.subr.mxu0 0.0
    %2709 = vmatpush1.xpose.msra.mxu0 0.0
    %2710 = vmatprep.subr.mxu0 0.0
    %2711 = vmatpush1.xpose.msra.mxu0 0.0
    %2712 = vmatprep.subr.mxu0 0.0
    %2713 = vmatpush1.xpose.msra.mxu0 0.0
    %2714 = vmatprep.subr.mxu0 0.0
    %2715 = vmatpush1.xpose.msra.mxu0 0.0
    %2716 = vmatprep.subr.mxu0 0.0
    %2717 = vmatpush1.xpose.msra.mxu0 0.0
    %2718 = vmatprep.subr.mxu0 0.0
    %2719 = vmatpush1.xpose.msra.mxu0 0.0
    %2720 = vmatprep.subr.mxu0 0.0
    %2721 = vmatpush1.xpose.msra.mxu0 0.0
    %2722 = vmatprep.subr.mxu0 0.0
    %2723 = vmatpush1.xpose.msra.mxu0 0.0
    %2724 = vmatprep.subr.mxu0 0.0
    %2725 = vmatpush1.xpose.msra.mxu0 0.0
    %2726 = vmatprep.subr.mxu0 0.0
    %2727 = vmatpush1.xpose.msra.mxu0 0.0
    %2728 = vmatprep.subr.mxu0 0.0
    %2729 = vmatpush1.xpose.msra.mxu0 0.0
    %2730 = vmatprep.subr.mxu0 0.0
    %2731 = vmatpush1.xpose.msra.mxu0 0.0
    %2732 = vmatprep.subr.mxu0 0.0
    %2733 = vmatpush1.xpose.msra.mxu0 0.0
    %2734 = vmatprep.subr.mxu0 0.0
    %2735 = vmatpush1.xpose.msra.mxu0 0.0
    %2736 = vmatprep.subr.mxu0 0.0
    %2737 = vmatpush1.xpose.msra.mxu0 0.0
    %2738 = vmatprep.subr.mxu0 0.0
    %2739 = vmatpush1.xpose.msra.mxu0 0.0
    %2740 = vmatprep.subr.mxu0 0.0
    %2741 = vmatpush1.xpose.msra.mxu0 0.0
    %2742 = vmatprep.subr.mxu0 0.0
    %2743 = vmatpush1.xpose.msra.mxu0 0.0
    %2744 = vmatprep.subr.mxu0 0.0
    %2745 = vmatpush1.xpose.msra.mxu0 0.0
    %2746 = vmatprep.subr.mxu0 0.0
    %2747 = vmatpush1.xpose.msra.mxu0 0.0
    %2748 = vmatprep.subr.mxu0 0.0
    %2749 = vmatpush1.xpose.msra.mxu0 0.0
    %2750 = vmatprep.subr.mxu0 0.0
    %2751 = vmatpush1.xpose.msra.mxu0 0.0
    %2752 = vmatprep.mubr.f32.mxu0 0.0
    %2753 = vmatmul.mubr.f32.gmra.mrb[0].mxu0 %v2641
    %v2754 = vpop.f32.mrb[0].mxu0
    %v2755 = vadd.f32 0.0, %v2754
    %v2756 = vpop.f32.mrb[0].mxu0
    %2757 = vmatprep.mubr.f32.mxu0 0.0
    %2758 = vmatmul.mubr.f32.gmra.mrb[0].mxu0 %v2644
    %v2759 = vpop.f32.mrb[0].mxu0
    %v2760 = vadd.f32 0.0, %v2759
    %v2761 = vpop.f32.mrb[0].mxu0
    %2762 = vmatprep.mubr.f32.mxu0 0.0
    %2763 = vmatmul.mubr.f32.gmra.mrb[0].mxu0 %v2647
    %v2764 = vpop.f32.mrb[0].mxu0
    %v2765 = vadd.f32 0.0, %v2764
    %v2766 = vpop.f32.mrb[0].mxu0
    %2767 = vmatprep.mubr.f32.mxu0 0.0
    %2768 = vmatmul.mubr.f32.gmra.mrb[0].mxu0 %v2650
    %v2769 = vpop.f32.mrb[0].mxu0
    %v2770 = vadd.f32 0.0, %v2769
    %v2771 = vpop.f32.mrb[0].mxu0
    %2772 = vmatprep.mubr.f32.mxu0 0.0
    %2773 = vmatmul.mubr.f32.gmra.mrb[0].mxu0 %v2653
    %v2774 = vpop.f32.mrb[0].mxu0
    %v2775 = vadd.f32 0.0, %v2774
    %v2776 = vpop.f32.mrb[0].mxu0
    %2777 = vmatprep.mubr.f32.mxu0 0.0
    %2778 = vmatmul.mubr.f32.gmra.mrb[0].mxu0 %v2656
    %v2779 = vpop.f32.mrb[0].mxu0
    %v2780 = vadd.f32 0.0, %v2779
    %v2781 = vpop.f32.mrb[0].mxu0
    %2782 = vmatprep.mubr.f32.mxu0 0.0
    %2783 = vmatmul.mubr.f32.gmra.mrb[0].mxu0 %v2659
    %v2784 = vpop.f32.mrb[0].mxu0
    %v2785 = vadd.f32 0.0, %v2784
    %v2786 = vpop.f32.mrb[0].mxu0
    %2787 = vmatprep.mubr.f32.mxu0 0.0
    %2788 = vmatmul.mubr.f32.gmra.mrb[0].mxu0 %v2662
    %v2789 = vpop.f32.mrb[0].mxu0
    %v2790 = vadd.f32 0.0, %v2789
    %v2791 = vpop.f32.mrb[0].mxu0
    %2792 = vdwg.mxu0
    %v2793 = vsel %vm893, %v2755, -inf
    %2794 = vmax.xlane.f32.xlu0 %v2793
    %v2795 = vpop.xlane.xlu0 %2794
    %v2796 = vsel %vm893, %v2760, -inf
    %2797 = vmax.xlane.f32.xlu0 %v2796
    %v2798 = vpop.xlane.xlu0 %2797
    %v2799 = vsel %vm893, %v2765, -inf
    %2800 = vmax.xlane.f32.xlu0 %v2799
    %v2801 = vpop.xlane.xlu0 %2800
    %v2802 = vsel %vm893, %v2770, -inf
    %2803 = vmax.xlane.f32.xlu0 %v2802
    %v2804 = vpop.xlane.xlu0 %2803
    %v2805 = vsel %vm893, %v2775, -inf
    %2806 = vmax.xlane.f32.xlu0 %v2805
    %v2807 = vpop.xlane.xlu0 %2806
    %v2808 = vsel %vm893, %v2780, -inf
    %2809 = vmax.xlane.f32.xlu0 %v2808
    %v2810 = vpop.xlane.xlu0 %2809
    %v2811 = vsel %vm893, %v2785, -inf
    %2812 = vmax.xlane.f32.xlu0 %v2811
    %v2813 = vpop.xlane.xlu0 %2812
    %v2814 = vsel %vm893, %v2790, -inf
    %2815 = vmax.xlane.f32.xlu0 %v2814
    %v2816 = vpop.xlane.xlu0 %2815
    %v2817 = vsub.f32 %v2755, %v2795
    %v2818 = vsub.f32 %v2760, %v2798
    %v2819 = vsub.f32 %v2765, %v2801
    %v2820 = vsub.f32 %v2770, %v2804
    %v2821 = vsub.f32 %v2775, %v2807
    %v2822 = vsub.f32 %v2780, %v2810
    %v2823 = vsub.f32 %v2785, %v2813
    %v2824 = vsub.f32 %v2790, %v2816
    %v2825 = vmul.f32 %v2817, 1.442695
    %v2826 = vpow.pop %v2825
    %v2827 = vmul.f32 %v2818, 1.442695
    %v2828 = vpow.pop %v2827
    %v2829 = vmul.f32 %v2819, 1.442695
    %v2830 = vpow.pop %v2829
    %v2831 = vmul.f32 %v2820, 1.442695
    %v2832 = vpow.pop %v2831
    %v2833 = vmul.f32 %v2821, 1.442695
    %v2834 = vpow.pop %v2833
    %v2835 = vmul.f32 %v2822, 1.442695
    %v2836 = vpow.pop %v2835
    %v2837 = vmul.f32 %v2823, 1.442695
    %v2838 = vpow.pop %v2837
    %v2839 = vmul.f32 %v2824, 1.442695
    %v2840 = vpow.pop %v2839
    %v2841 = vsel %vm893, %v2826, 0.0
    %2842 = vadd.xlane.f32.xlu0 %v2841
    %v2843 = vpop.xlane.xlu0 %2842
    %v2844 = vsel %vm893, %v2828, 0.0
    %2845 = vadd.xlane.f32.xlu0 %v2844
    %v2846 = vpop.xlane.xlu0 %2845
    %v2847 = vsel %vm893, %v2830, 0.0
    %2848 = vadd.xlane.f32.xlu0 %v2847
    %v2849 = vpop.xlane.xlu0 %2848
    %v2850 = vsel %vm893, %v2832, 0.0
    %2851 = vadd.xlane.f32.xlu0 %v2850
    %v2852 = vpop.xlane.xlu0 %2851
    %v2853 = vsel %vm893, %v2834, 0.0
    %2854 = vadd.xlane.f32.xlu0 %v2853
    %v2855 = vpop.xlane.xlu0 %2854
    %v2856 = vsel %vm893, %v2836, 0.0
    %2857 = vadd.xlane.f32.xlu0 %v2856
    %v2858 = vpop.xlane.xlu0 %2857
    %v2859 = vsel %vm893, %v2838, 0.0
    %2860 = vadd.xlane.f32.xlu0 %v2859
    %v2861 = vpop.xlane.xlu0 %2860
    %v2862 = vsel %vm893, %v2840, 0.0
    %2863 = vadd.xlane.f32.xlu0 %v2862
    %v2864 = vpop.xlane.xlu0 %2863
    %v2865 = vrcp.pop %v2843
    %v2866 = vrcp.pop %v2846
    %v2867 = vrcp.pop %v2849
    %v2868 = vrcp.pop %v2852
    %v2869 = vrcp.pop %v2855
    %v2870 = vrcp.pop %v2858
    %v2871 = vrcp.pop %v2861
    %v2872 = vrcp.pop %v2864
    %v2873 = vmul.f32 %v2826, %v2865
    %v2874 = vmul.f32 %v2828, %v2866
    %v2875 = vmul.f32 %v2830, %v2867
    %v2876 = vmul.f32 %v2832, %v2868
    %v2877 = vmul.f32 %v2834, %v2869
    %v2878 = vmul.f32 %v2836, %v2870
    %v2879 = vmul.f32 %v2838, %v2871
    %v2880 = vmul.f32 %v2840, %v2872
    %v2882 = vsel %vm893, %v2873, 0
    %v2885 = vsel %vm893, %v2874, 0
    %v2888 = vsel %vm893, %v2875, 0
    %v2891 = vsel %vm893, %v2876, 0
    %v2894 = vsel %vm893, %v2877, 0
    %v2897 = vsel %vm893, %v2878, 0
    %v2900 = vsel %vm893, %v2879, 0
    %v2903 = vsel %vm893, %v2880, 0
    %2905 = vmatprep.subr.mxu0 0.0
    %2906 = vmatpush1.msra.mxu0 %v2632
    %2907 = vmatprep.subr.mxu0 0.0
    %2908 = vmatpush1.msra.mxu0 %v2633
    %2909 = vmatprep.subr.mxu0 0.0
    %2910 = vmatpush1.msra.mxu0 %v2634
    %2911 = vmatprep.subr.mxu0 0.0
    %2912 = vmatpush1.msra.mxu0 %v2635
    %2913 = vmatprep.subr.mxu0 0.0
    %2914 = vmatpush1.msra.mxu0 %v2636
    %2915 = vmatprep.subr.mxu0 0.0
    %2916 = vmatpush1.msra.mxu0 %v2637
    %2917 = vmatprep.subr.mxu0 0.0
    %2918 = vmatpush1.msra.mxu0 %v2638
    %2919 = vmatprep.subr.mxu0 0.0
    %2920 = vmatpush1.msra.mxu0 %v2639
    %2921 = vmatprep.subr.mxu0 0.0
    %2922 = vmatpush1.msra.mxu0 0.0
    %2923 = vmatprep.subr.mxu0 0.0
    %2924 = vmatpush1.msra.mxu0 0.0
    %2925 = vmatprep.subr.mxu0 0.0
    %2926 = vmatpush1.msra.mxu0 0.0
    %2927 = vmatprep.subr.mxu0 0.0
    %2928 = vmatpush1.msra.mxu0 0.0
    %2929 = vmatprep.subr.mxu0 0.0
    %2930 = vmatpush1.msra.mxu0 0.0
    %2931 = vmatprep.subr.mxu0 0.0
    %2932 = vmatpush1.msra.mxu0 0.0
    %2933 = vmatprep.subr.mxu0 0.0
    %2934 = vmatpush1.msra.mxu0 0.0
    %2935 = vmatprep.subr.mxu0 0.0
    %2936 = vmatpush1.msra.mxu0 0.0
    %2937 = vmatprep.subr.mxu0 0.0
    %2938 = vmatpush1.msra.mxu0 0.0
    %2939 = vmatprep.subr.mxu0 0.0
    %2940 = vmatpush1.msra.mxu0 0.0
    %2941 = vmatprep.subr.mxu0 0.0
    %2942 = vmatpush1.msra.mxu0 0.0
    %2943 = vmatprep.subr.mxu0 0.0
    %2944 = vmatpush1.msra.mxu0 0.0
    %2945 = vmatprep.subr.mxu0 0.0
    %2946 = vmatpush1.msra.mxu0 0.0
    %2947 = vmatprep.subr.mxu0 0.0
    %2948 = vmatpush1.msra.mxu0 0.0
    %2949 = vmatprep.subr.mxu0 0.0
    %2950 = vmatpush1.msra.mxu0 0.0
    %2951 = vmatprep.subr.mxu0 0.0
    %2952 = vmatpush1.msra.mxu0 0.0
    %2953 = vmatprep.subr.mxu0 0.0
    %2954 = vmatpush1.msra.mxu0 0.0
    %2955 = vmatprep.subr.mxu0 0.0
    %2956 = vmatpush1.msra.mxu0 0.0
    %2957 = vmatprep.subr.mxu0 0.0
    %2958 = vmatpush1.msra.mxu0 0.0
    %2959 = vmatprep.subr.mxu0 0.0
    %2960 = vmatpush1.msra.mxu0 0.0
    %2961 = vmatprep.subr.mxu0 0.0
    %2962 = vmatpush1.msra.mxu0 0.0
    %2963 = vmatprep.subr.mxu0 0.0
    %2964 = vmatpush1.msra.mxu0 0.0
    %2965 = vmatprep.subr.mxu0 0.0
    %2966 = vmatpush1.msra.mxu0 0.0
    %2967 = vmatprep.subr.mxu0 0.0
    %2968 = vmatpush1.msra.mxu0 0.0
    %2969 = vmatprep.mubr.f32.mxu0 0.0
    %2970 = vmatmul.mubr.f32.gmra.mrb[0].mxu0 %v2882
    %v2971 = vpop.f32.mrb[0].mxu0
    %v2972 = vadd.f32 0.0, %v2971
    %v2973 = vpop.f32.mrb[0].mxu0
    %2974 = vmatprep.mubr.f32.mxu0 0.0
    %2975 = vmatmul.mubr.f32.gmra.mrb[0].mxu0 %v2885
    %v2976 = vpop.f32.mrb[0].mxu0
    %v2977 = vadd.f32 0.0, %v2976
    %v2978 = vpop.f32.mrb[0].mxu0
    %2979 = vmatprep.mubr.f32.mxu0 0.0
    %2980 = vmatmul.mubr.f32.gmra.mrb[0].mxu0 %v2888
    %v2981 = vpop.f32.mrb[0].mxu0
    %v2982 = vadd.f32 0.0, %v2981
    %v2983 = vpop.f32.mrb[0].mxu0
    %2984 = vmatprep.mubr.f32.mxu0 0.0
    %2985 = vmatmul.mubr.f32.gmra.mrb[0].mxu0 %v2891
    %v2986 = vpop.f32.mrb[0].mxu0
    %v2987 = vadd.f32 0.0, %v2986
    %v2988 = vpop.f32.mrb[0].mxu0
    %2989 = vmatprep.mubr.f32.mxu0 0.0
    %2990 = vmatmul.mubr.f32.gmra.mrb[0].mxu0 %v2894
    %v2991 = vpop.f32.mrb[0].mxu0
    %v2992 = vadd.f32 0.0, %v2991
    %v2993 = vpop.f32.mrb[0].mxu0
    %2994 = vmatprep.mubr.f32.mxu0 0.0
    %2995 = vmatmul.mubr.f32.gmra.mrb[0].mxu0 %v2897
    %v2996 = vpop.f32.mrb[0].mxu0
    %v2997 = vadd.f32 0.0, %v2996
    %v2998 = vpop.f32.mrb[0].mxu0
    %2999 = vmatprep.mubr.f32.mxu0 0.0
    %3000 = vmatmul.mubr.f32.gmra.mrb[0].mxu0 %v2900
    %v3001 = vpop.f32.mrb[0].mxu0
    %v3002 = vadd.f32 0.0, %v3001
    %v3003 = vpop.f32.mrb[0].mxu0
    %3004 = vmatprep.mubr.f32.mxu0 0.0
    %3005 = vmatmul.mubr.f32.gmra.mrb[0].mxu0 %v2903
    %v3006 = vpop.f32.mrb[0].mxu0
    %v3007 = vadd.f32 0.0, %v3006
    %v3008 = vpop.f32.mrb[0].mxu0
    %3009 = vdwg.mxu0
    %3010 = vst.msk [vmem:[#allocation3 + $0x40] sm:$0xff] %vm739, %v2972
    %3011 = vst.msk [vmem:[#allocation3 + $0x48] sm:$0xff] %vm739, %v2977
    %3012 = vst.msk [vmem:[#allocation3 + $0x50] sm:$0xff] %vm739, %v2982
    %3013 = vst.msk [vmem:[#allocation3 + $0x58] sm:$0xff] %vm739, %v2987
    %3014 = vst.msk [vmem:[#allocation3 + $0x60] sm:$0xff] %vm739, %v2992
    %3015 = vst.msk [vmem:[#allocation3 + $0x68] sm:$0xff] %vm739, %v2997
    %3016 = vst.msk [vmem:[#allocation3 + $0x70] sm:$0xff] %vm739, %v3002
    %3017 = vst.msk [vmem:[#allocation3 + $0x78] sm:$0xff] %vm739, %v3007
    %v3018 = vld [vmem:[#allocation2 + $0xc0] sm:$0xff]
    %v3019 = vld [vmem:[#allocation2 + $0xd8] sm:$0xff]
    %v3020 = vld [vmem:[#allocation2 + $0xf0] sm:$0xff]
    %v3021 = vld [vmem:[#allocation2 + $0x108] sm:$0xff]
    %v3022 = vld [vmem:[#allocation2 + $0x120] sm:$0xff]
    %v3023 = vld [vmem:[#allocation2 + $0x138] sm:$0xff]
    %v3024 = vld [vmem:[#allocation2 + $0x150] sm:$0xff]
    %v3025 = vld [vmem:[#allocation2 + $0x168] sm:$0xff]
    %v3026 = vld [vmem:[#allocation2 + $0xc8] sm:$0xff]
    %v3027 = vld [vmem:[#allocation2 + $0xe0] sm:$0xff]
    %v3028 = vld [vmem:[#allocation2 + $0xf8] sm:$0xff]
    %v3029 = vld [vmem:[#allocation2 + $0x110] sm:$0xff]
    %v3030 = vld [vmem:[#allocation2 + $0x128] sm:$0xff]
    %v3031 = vld [vmem:[#allocation2 + $0x140] sm:$0xff]
    %v3032 = vld [vmem:[#allocation2 + $0x158] sm:$0xff]
    %v3033 = vld [vmem:[#allocation2 + $0x170] sm:$0xff]
    %v3034 = vld [vmem:[#allocation2 + $0xd0] sm:$0xff]
    %v3035 = vld [vmem:[#allocation2 + $0xe8] sm:$0xff]
    %v3036 = vld [vmem:[#allocation2 + $0x100] sm:$0xff]
    %v3037 = vld [vmem:[#allocation2 + $0x118] sm:$0xff]
    %v3038 = vld [vmem:[#allocation2 + $0x130] sm:$0xff]
    %v3039 = vld [vmem:[#allocation2 + $0x148] sm:$0xff]
    %v3040 = vld [vmem:[#allocation2 + $0x160] sm:$0xff]
    %v3041 = vld [vmem:[#allocation2 + $0x178] sm:$0xff]
    %3050 = vrot.lane.b32.xlu0 %v3018, 96
    %v3051 = vpop.permute.xlu0 %3050
    %3052 = vrot.lane.b32.xlu0 %v3019, 96
    %v3053 = vpop.permute.xlu0 %3052
    %3054 = vrot.lane.b32.xlu0 %v3020, 96
    %v3055 = vpop.permute.xlu0 %3054
    %3056 = vrot.lane.b32.xlu0 %v3021, 96
    %v3057 = vpop.permute.xlu0 %3056
    %3058 = vrot.lane.b32.xlu0 %v3022, 96
    %v3059 = vpop.permute.xlu0 %3058
    %3060 = vrot.lane.b32.xlu0 %v3023, 96
    %v3061 = vpop.permute.xlu0 %3060
    %3062 = vrot.lane.b32.xlu0 %v3024, 96
    %v3063 = vpop.permute.xlu0 %3062
    %3064 = vrot.lane.b32.xlu0 %v3025, 96
    %v3065 = vpop.permute.xlu0 %3064
    %3074 = vrot.lane.b32.xlu0 %v3026, 96
    %v3075 = vpop.permute.xlu0 %3074
    %3076 = vrot.lane.b32.xlu0 %v3027, 96
    %v3077 = vpop.permute.xlu0 %3076
    %3078 = vrot.lane.b32.xlu0 %v3028, 96
    %v3079 = vpop.permute.xlu0 %3078
    %3080 = vrot.lane.b32.xlu0 %v3029, 96
    %v3081 = vpop.permute.xlu0 %3080
    %3082 = vrot.lane.b32.xlu0 %v3030, 96
    %v3083 = vpop.permute.xlu0 %3082
    %3084 = vrot.lane.b32.xlu0 %v3031, 96
    %v3085 = vpop.permute.xlu0 %3084
    %3086 = vrot.lane.b32.xlu0 %v3032, 96
    %v3087 = vpop.permute.xlu0 %3086
    %3088 = vrot.lane.b32.xlu0 %v3033, 96
    %v3089 = vpop.permute.xlu0 %3088
    %v3090 = vsel %vm739, %v3051, 0
    %v3092 = vsel %vm739, %v3053, 0
    %v3094 = vsel %vm739, %v3055, 0
    %v3096 = vsel %vm739, %v3057, 0
    %v3098 = vsel %vm739, %v3059, 0
    %v3100 = vsel %vm739, %v3061, 0
    %v3102 = vsel %vm739, %v3063, 0
    %v3104 = vsel %vm739, %v3065, 0
    %v3106 = vsel %vm739, %v3075, 0
    %v3108 = vsel %vm739, %v3077, 0
    %v3110 = vsel %vm739, %v3079, 0
    %v3112 = vsel %vm739, %v3081, 0
    %v3114 = vsel %vm739, %v3083, 0
    %v3116 = vsel %vm739, %v3085, 0
    %v3118 = vsel %vm739, %v3087, 0
    %v3120 = vsel %vm739, %v3089, 0
    %3122 = vmatprep.subr.mxu0 0.0
    %3123 = vmatpush1.xpose.msra.mxu0 %v3106
    %3124 = vmatprep.subr.mxu0 0.0
    %3125 = vmatpush1.xpose.msra.mxu0 %v3108
    %3126 = vmatprep.subr.mxu0 0.0
    %3127 = vmatpush1.xpose.msra.mxu0 %v3110
    %3128 = vmatprep.subr.mxu0 0.0
    %3129 = vmatpush1.xpose.msra.mxu0 %v3112
    %3130 = vmatprep.subr.mxu0 0.0
    %3131 = vmatpush1.xpose.msra.mxu0 %v3114
    %3132 = vmatprep.subr.mxu0 0.0
    %3133 = vmatpush1.xpose.msra.mxu0 %v3116
    %3134 = vmatprep.subr.mxu0 0.0
    %3135 = vmatpush1.xpose.msra.mxu0 %v3118
    %3136 = vmatprep.subr.mxu0 0.0
    %3137 = vmatpush1.xpose.msra.mxu0 %v3120
    %3138 = vmatprep.subr.mxu0 0.0
    %3139 = vmatpush1.xpose.msra.mxu0 0.0
    %3140 = vmatprep.subr.mxu0 0.0
    %3141 = vmatpush1.xpose.msra.mxu0 0.0
    %3142 = vmatprep.subr.mxu0 0.0
    %3143 = vmatpush1.xpose.msra.mxu0 0.0
    %3144 = vmatprep.subr.mxu0 0.0
    %3145 = vmatpush1.xpose.msra.mxu0 0.0
    %3146 = vmatprep.subr.mxu0 0.0
    %3147 = vmatpush1.xpose.msra.mxu0 0.0
    %3148 = vmatprep.subr.mxu0 0.0
    %3149 = vmatpush1.xpose.msra.mxu0 0.0
    %3150 = vmatprep.subr.mxu0 0.0
    %3151 = vmatpush1.xpose.msra.mxu0 0.0
    %3152 = vmatprep.subr.mxu0 0.0
    %3153 = vmatpush1.xpose.msra.mxu0 0.0
    %3154 = vmatprep.subr.mxu0 0.0
    %3155 = vmatpush1.xpose.msra.mxu0 0.0
    %3156 = vmatprep.subr.mxu0 0.0
    %3157 = vmatpush1.xpose.msra.mxu0 0.0
    %3158 = vmatprep.subr.mxu0 0.0
    %3159 = vmatpush1.xpose.msra.mxu0 0.0
    %3160 = vmatprep.subr.mxu0 0.0
    %3161 = vmatpush1.xpose.msra.mxu0 0.0
    %3162 = vmatprep.subr.mxu0 0.0
    %3163 = vmatpush1.xpose.msra.mxu0 0.0
    %3164 = vmatprep.subr.mxu0 0.0
    %3165 = vmatpush1.xpose.msra.mxu0 0.0
    %3166 = vmatprep.subr.mxu0 0.0
    %3167 = vmatpush1.xpose.msra.mxu0 0.0
    %3168 = vmatprep.subr.mxu0 0.0
    %3169 = vmatpush1.xpose.msra.mxu0 0.0
    %3170 = vmatprep.subr.mxu0 0.0
    %3171 = vmatpush1.xpose.msra.mxu0 0.0
    %3172 = vmatprep.subr.mxu0 0.0
    %3173 = vmatpush1.xpose.msra.mxu0 0.0
    %3174 = vmatprep.subr.mxu0 0.0
    %3175 = vmatpush1.xpose.msra.mxu0 0.0
    %3176 = vmatprep.subr.mxu0 0.0
    %3177 = vmatpush1.xpose.msra.mxu0 0.0
    %3178 = vmatprep.subr.mxu0 0.0
    %3179 = vmatpush1.xpose.msra.mxu0 0.0
    %3180 = vmatprep.subr.mxu0 0.0
    %3181 = vmatpush1.xpose.msra.mxu0 0.0
    %3182 = vmatprep.subr.mxu0 0.0
    %3183 = vmatpush1.xpose.msra.mxu0 0.0
    %3184 = vmatprep.subr.mxu0 0.0
    %3185 = vmatpush1.xpose.msra.mxu0 0.0
    %3186 = vmatprep.mubr.f32.mxu0 0.0
    %3187 = vmatmul.mubr.f32.gmra.mrb[0].mxu0 %v3090
    %v3188 = vpop.f32.mrb[0].mxu0
    %v3189 = vadd.f32 0.0, %v3188
    %v3190 = vpop.f32.mrb[0].mxu0
    %3191 = vmatprep.mubr.f32.mxu0 0.0
    %3192 = vmatmul.mubr.f32.gmra.mrb[0].mxu0 %v3092
    %v3193 = vpop.f32.mrb[0].mxu0
    %v3194 = vadd.f32 0.0, %v3193
    %v3195 = vpop.f32.mrb[0].mxu0
    %3196 = vmatprep.mubr.f32.mxu0 0.0
    %3197 = vmatmul.mubr.f32.gmra.mrb[0].mxu0 %v3094
    %v3198 = vpop.f32.mrb[0].mxu0
    %v3199 = vadd.f32 0.0, %v3198
    %v3200 = vpop.f32.mrb[0].mxu0
    %3201 = vmatprep.mubr.f32.mxu0 0.0
    %3202 = vmatmul.mubr.f32.gmra.mrb[0].mxu0 %v3096
    %v3203 = vpop.f32.mrb[0].mxu0
    %v3204 = vadd.f32 0.0, %v3203
    %v3205 = vpop.f32.mrb[0].mxu0
    %3206 = vmatprep.mubr.f32.mxu0 0.0
    %3207 = vmatmul.mubr.f32.gmra.mrb[0].mxu0 %v3098
    %v3208 = vpop.f32.mrb[0].mxu0
    %v3209 = vadd.f32 0.0, %v3208
    %v3210 = vpop.f32.mrb[0].mxu0
    %3211 = vmatprep.mubr.f32.mxu0 0.0
    %3212 = vmatmul.mubr.f32.gmra.mrb[0].mxu0 %v3100
    %v3213 = vpop.f32.mrb[0].mxu0
    %v3214 = vadd.f32 0.0, %v3213
    %v3215 = vpop.f32.mrb[0].mxu0
    %3216 = vmatprep.mubr.f32.mxu0 0.0
    %3217 = vmatmul.mubr.f32.gmra.mrb[0].mxu0 %v3102
    %v3218 = vpop.f32.mrb[0].mxu0
    %v3219 = vadd.f32 0.0, %v3218
    %v3220 = vpop.f32.mrb[0].mxu0
    %3221 = vmatprep.mubr.f32.mxu0 0.0
    %3222 = vmatmul.mubr.f32.gmra.mrb[0].mxu0 %v3104
    %v3223 = vpop.f32.mrb[0].mxu0
    %v3224 = vadd.f32 0.0, %v3223
    %v3225 = vpop.f32.mrb[0].mxu0
    %3226 = vdwg.mxu0
    %v3227 = vsel %vm893, %v3189, -inf
    %3228 = vmax.xlane.f32.xlu0 %v3227
    %v3229 = vpop.xlane.xlu0 %3228
    %v3230 = vsel %vm893, %v3194, -inf
    %3231 = vmax.xlane.f32.xlu0 %v3230
    %v3232 = vpop.xlane.xlu0 %3231
    %v3233 = vsel %vm893, %v3199, -inf
    %3234 = vmax.xlane.f32.xlu0 %v3233
    %v3235 = vpop.xlane.xlu0 %3234
    %v3236 = vsel %vm893, %v3204, -inf
    %3237 = vmax.xlane.f32.xlu0 %v3236
    %v3238 = vpop.xlane.xlu0 %3237
    %v3239 = vsel %vm893, %v3209, -inf
    %3240 = vmax.xlane.f32.xlu0 %v3239
    %v3241 = vpop.xlane.xlu0 %3240
    %v3242 = vsel %vm893, %v3214, -inf
    %3243 = vmax.xlane.f32.xlu0 %v3242
    %v3244 = vpop.xlane.xlu0 %3243
    %v3245 = vsel %vm893, %v3219, -inf
    %3246 = vmax.xlane.f32.xlu0 %v3245
    %v3247 = vpop.xlane.xlu0 %3246
    %v3248 = vsel %vm893, %v3224, -inf
    %3249 = vmax.xlane.f32.xlu0 %v3248
    %v3250 = vpop.xlane.xlu0 %3249
    %v3251 = vsub.f32 %v3189, %v3229
    %v3252 = vsub.f32 %v3194, %v3232
    %v3253 = vsub.f32 %v3199, %v3235
    %v3254 = vsub.f32 %v3204, %v3238
    %v3255 = vsub.f32 %v3209, %v3241
    %v3256 = vsub.f32 %v3214, %v3244
    %v3257 = vsub.f32 %v3219, %v3247
    %v3258 = vsub.f32 %v3224, %v3250
    %v3259 = vmul.f32 %v3251, 1.442695
    %v3260 = vpow.pop %v3259
    %v3261 = vmul.f32 %v3252, 1.442695
    %v3262 = vpow.pop %v3261
    %v3263 = vmul.f32 %v3253, 1.442695
    %v3264 = vpow.pop %v3263
    %v3265 = vmul.f32 %v3254, 1.442695
    %v3266 = vpow.pop %v3265
    %v3267 = vmul.f32 %v3255, 1.442695
    %v3268 = vpow.pop %v3267
    %v3269 = vmul.f32 %v3256, 1.442695
    %v3270 = vpow.pop %v3269
    %v3271 = vmul.f32 %v3257, 1.442695
    %v3272 = vpow.pop %v3271
    %v3273 = vmul.f32 %v3258, 1.442695
    %v3274 = vpow.pop %v3273
    %v3275 = vsel %vm893, %v3260, 0.0
    %3276 = vadd.xlane.f32.xlu0 %v3275
    %v3277 = vpop.xlane.xlu0 %3276
    %v3278 = vsel %vm893, %v3262, 0.0
    %3279 = vadd.xlane.f32.xlu0 %v3278
    %v3280 = vpop.xlane.xlu0 %3279
    %v3281 = vsel %vm893, %v3264, 0.0
    %3282 = vadd.xlane.f32.xlu0 %v3281
    %v3283 = vpop.xlane.xlu0 %3282
    %v3284 = vsel %vm893, %v3266, 0.0
    %3285 = vadd.xlane.f32.xlu0 %v3284
    %v3286 = vpop.xlane.xlu0 %3285
    %v3287 = vsel %vm893, %v3268, 0.0
    %3288 = vadd.xlane.f32.xlu0 %v3287
    %v3289 = vpop.xlane.xlu0 %3288
    %v3290 = vsel %vm893, %v3270, 0.0
    %3291 = vadd.xlane.f32.xlu0 %v3290
    %v3292 = vpop.xlane.xlu0 %3291
    %v3293 = vsel %vm893, %v3272, 0.0
    %3294 = vadd.xlane.f32.xlu0 %v3293
    %v3295 = vpop.xlane.xlu0 %3294
    %v3296 = vsel %vm893, %v3274, 0.0
    %3297 = vadd.xlane.f32.xlu0 %v3296
    %v3298 = vpop.xlane.xlu0 %3297
    %v3299 = vrcp.pop %v3277
    %v3300 = vrcp.pop %v3280
    %v3301 = vrcp.pop %v3283
    %v3302 = vrcp.pop %v3286
    %v3303 = vrcp.pop %v3289
    %v3304 = vrcp.pop %v3292
    %v3305 = vrcp.pop %v3295
    %v3306 = vrcp.pop %v3298
    %v3307 = vmul.f32 %v3260, %v3299
    %v3308 = vmul.f32 %v3262, %v3300
    %v3309 = vmul.f32 %v3264, %v3301
    %v3310 = vmul.f32 %v3266, %v3302
    %v3311 = vmul.f32 %v3268, %v3303
    %v3312 = vmul.f32 %v3270, %v3304
    %v3313 = vmul.f32 %v3272, %v3305
    %v3314 = vmul.f32 %v3274, %v3306
    %3323 = vrot.lane.b32.xlu0 %v3034, 96
    %v3324 = vpop.permute.xlu0 %3323
    %3325 = vrot.lane.b32.xlu0 %v3035, 96
    %v3326 = vpop.permute.xlu0 %3325
    %3327 = vrot.lane.b32.xlu0 %v3036, 96
    %v3328 = vpop.permute.xlu0 %3327
    %3329 = vrot.lane.b32.xlu0 %v3037, 96
    %v3330 = vpop.permute.xlu0 %3329
    %3331 = vrot.lane.b32.xlu0 %v3038, 96
    %v3332 = vpop.permute.xlu0 %3331
    %3333 = vrot.lane.b32.xlu0 %v3039, 96
    %v3334 = vpop.permute.xlu0 %3333
    %3335 = vrot.lane.b32.xlu0 %v3040, 96
    %v3336 = vpop.permute.xlu0 %3335
    %3337 = vrot.lane.b32.xlu0 %v3041, 96
    %v3338 = vpop.permute.xlu0 %3337
    %v3348 = vsel %vm893, %v3307, 0
    %v3351 = vsel %vm893, %v3308, 0
    %v3354 = vsel %vm893, %v3309, 0
    %v3357 = vsel %vm893, %v3310, 0
    %v3360 = vsel %vm893, %v3311, 0
    %v3363 = vsel %vm893, %v3312, 0
    %v3366 = vsel %vm893, %v3313, 0
    %v3369 = vsel %vm893, %v3314, 0
    %3371 = vmatprep.subr.mxu0 0.0
    %3372 = vmatpush1.msra.mxu0 %v3324
    %3373 = vmatprep.subr.mxu0 0.0
    %3374 = vmatpush1.msra.mxu0 %v3326
    %3375 = vmatprep.subr.mxu0 0.0
    %3376 = vmatpush1.msra.mxu0 %v3328
    %3377 = vmatprep.subr.mxu0 0.0
    %3378 = vmatpush1.msra.mxu0 %v3330
    %3379 = vmatprep.subr.mxu0 0.0
    %3380 = vmatpush1.msra.mxu0 %v3332
    %3381 = vmatprep.subr.mxu0 0.0
    %3382 = vmatpush1.msra.mxu0 %v3334
    %3383 = vmatprep.subr.mxu0 0.0
    %3384 = vmatpush1.msra.mxu0 %v3336
    %3385 = vmatprep.subr.mxu0 0.0
    %3386 = vmatpush1.msra.mxu0 %v3338
    %3387 = vmatprep.subr.mxu0 0.0
    %3388 = vmatpush1.msra.mxu0 0.0
    %3389 = vmatprep.subr.mxu0 0.0
    %3390 = vmatpush1.msra.mxu0 0.0
    %3391 = vmatprep.subr.mxu0 0.0
    %3392 = vmatpush1.msra.mxu0 0.0
    %3393 = vmatprep.subr.mxu0 0.0
    %3394 = vmatpush1.msra.mxu0 0.0
    %3395 = vmatprep.subr.mxu0 0.0
    %3396 = vmatpush1.msra.mxu0 0.0
    %3397 = vmatprep.subr.mxu0 0.0
    %3398 = vmatpush1.msra.mxu0 0.0
    %3399 = vmatprep.subr.mxu0 0.0
    %3400 = vmatpush1.msra.mxu0 0.0
    %3401 = vmatprep.subr.mxu0 0.0
    %3402 = vmatpush1.msra.mxu0 0.0
    %3403 = vmatprep.subr.mxu0 0.0
    %3404 = vmatpush1.msra.mxu0 0.0
    %3405 = vmatprep.subr.mxu0 0.0
    %3406 = vmatpush1.msra.mxu0 0.0
    %3407 = vmatprep.subr.mxu0 0.0
    %3408 = vmatpush1.msra.mxu0 0.0
    %3409 = vmatprep.subr.mxu0 0.0
    %3410 = vmatpush1.msra.mxu0 0.0
    %3411 = vmatprep.subr.mxu0 0.0
    %3412 = vmatpush1.msra.mxu0 0.0
    %3413 = vmatprep.subr.mxu0 0.0
    %3414 = vmatpush1.msra.mxu0 0.0
    %3415 = vmatprep.subr.mxu0 0.0
    %3416 = vmatpush1.msra.mxu0 0.0
    %3417 = vmatprep.subr.mxu0 0.0
    %3418 = vmatpush1.msra.mxu0 0.0
    %3419 = vmatprep.subr.mxu0 0.0
    %3420 = vmatpush1.msra.mxu0 0.0
    %3421 = vmatprep.subr.mxu0 0.0
    %3422 = vmatpush1.msra.mxu0 0.0
    %3423 = vmatprep.subr.mxu0 0.0
    %3424 = vmatpush1.msra.mxu0 0.0
    %3425 = vmatprep.subr.mxu0 0.0
    %3426 = vmatpush1.msra.mxu0 0.0
    %3427 = vmatprep.subr.mxu0 0.0
    %3428 = vmatpush1.msra.mxu0 0.0
    %3429 = vmatprep.subr.mxu0 0.0
    %3430 = vmatpush1.msra.mxu0 0.0
    %3431 = vmatprep.subr.mxu0 0.0
    %3432 = vmatpush1.msra.mxu0 0.0
    %3433 = vmatprep.subr.mxu0 0.0
    %3434 = vmatpush1.msra.mxu0 0.0
    %3435 = vmatprep.mubr.f32.mxu0 0.0
    %3436 = vmatmul.mubr.f32.gmra.mrb[0].mxu0 %v3348
    %v3437 = vpop.f32.mrb[0].mxu0
    %v3438 = vadd.f32 0.0, %v3437
    %v3439 = vpop.f32.mrb[0].mxu0
    %3440 = vmatprep.mubr.f32.mxu0 0.0
    %3441 = vmatmul.mubr.f32.gmra.mrb[0].mxu0 %v3351
    %v3442 = vpop.f32.mrb[0].mxu0
    %v3443 = vadd.f32 0.0, %v3442
    %v3444 = vpop.f32.mrb[0].mxu0
    %3445 = vmatprep.mubr.f32.mxu0 0.0
    %3446 = vmatmul.mubr.f32.gmra.mrb[0].mxu0 %v3354
    %v3447 = vpop.f32.mrb[0].mxu0
    %v3448 = vadd.f32 0.0, %v3447
    %v3449 = vpop.f32.mrb[0].mxu0
    %3450 = vmatprep.mubr.f32.mxu0 0.0
    %3451 = vmatmul.mubr.f32.gmra.mrb[0].mxu0 %v3357
    %v3452 = vpop.f32.mrb[0].mxu0
    %v3453 = vadd.f32 0.0, %v3452
    %v3454 = vpop.f32.mrb[0].mxu0
    %3455 = vmatprep.mubr.f32.mxu0 0.0
    %3456 = vmatmul.mubr.f32.gmra.mrb[0].mxu0 %v3360
    %v3457 = vpop.f32.mrb[0].mxu0
    %v3458 = vadd.f32 0.0, %v3457
    %v3459 = vpop.f32.mrb[0].mxu0
    %3460 = vmatprep.mubr.f32.mxu0 0.0
    %3461 = vmatmul.mubr.f32.gmra.mrb[0].mxu0 %v3363
    %v3462 = vpop.f32.mrb[0].mxu0
    %v3463 = vadd.f32 0.0, %v3462
    %v3464 = vpop.f32.mrb[0].mxu0
    %3465 = vmatprep.mubr.f32.mxu0 0.0
    %3466 = vmatmul.mubr.f32.gmra.mrb[0].mxu0 %v3366
    %v3467 = vpop.f32.mrb[0].mxu0
    %v3468 = vadd.f32 0.0, %v3467
    %v3469 = vpop.f32.mrb[0].mxu0
    %3470 = vmatprep.mubr.f32.mxu0 0.0
    %3471 = vmatmul.mubr.f32.gmra.mrb[0].mxu0 %v3369
    %v3472 = vpop.f32.mrb[0].mxu0
    %v3473 = vadd.f32 0.0, %v3472
    %v3474 = vpop.f32.mrb[0].mxu0
    %3475 = vdwg.mxu0
    %3484 = vrot.lane.b32.xlu0 %v3438, 32
    %v3485 = vpop.permute.xlu0 %3484
    %3486 = vrot.lane.b32.xlu0 %v3443, 32
    %v3487 = vpop.permute.xlu0 %3486
    %3488 = vrot.lane.b32.xlu0 %v3448, 32
    %v3489 = vpop.permute.xlu0 %3488
    %3490 = vrot.lane.b32.xlu0 %v3453, 32
    %v3491 = vpop.permute.xlu0 %3490
    %3492 = vrot.lane.b32.xlu0 %v3458, 32
    %v3493 = vpop.permute.xlu0 %3492
    %3494 = vrot.lane.b32.xlu0 %v3463, 32
    %v3495 = vpop.permute.xlu0 %3494
    %3496 = vrot.lane.b32.xlu0 %v3468, 32
    %v3497 = vpop.permute.xlu0 %3496
    %3498 = vrot.lane.b32.xlu0 %v3473, 32
    %v3499 = vpop.permute.xlu0 %3498
    %3508 = vst.msk [vmem:[#allocation3 + $0x40] sm:$0xff] %vm1609, %v3485
    %3509 = vst.msk [vmem:[#allocation3 + $0x48] sm:$0xff] %vm1609, %v3487
    %3510 = vst.msk [vmem:[#allocation3 + $0x50] sm:$0xff] %vm1609, %v3489
    %3511 = vst.msk [vmem:[#allocation3 + $0x58] sm:$0xff] %vm1609, %v3491
    %3512 = vst.msk [vmem:[#allocation3 + $0x60] sm:$0xff] %vm1609, %v3493
    %3513 = vst.msk [vmem:[#allocation3 + $0x68] sm:$0xff] %vm1609, %v3495
    %3514 = vst.msk [vmem:[#allocation3 + $0x70] sm:$0xff] %vm1609, %v3497
    %3515 = vst.msk [vmem:[#allocation3 + $0x78] sm:$0xff] %vm1609, %v3499
    %v3516 = vld [vmem:[#allocation2 + $0xc0] sm:$0xff]
    %v3517 = vld [vmem:[#allocation2 + $0xd8] sm:$0xff]
    %v3518 = vld [vmem:[#allocation2 + $0xf0] sm:$0xff]
    %v3519 = vld [vmem:[#allocation2 + $0x108] sm:$0xff]
    %v3520 = vld [vmem:[#allocation2 + $0x120] sm:$0xff]
    %v3521 = vld [vmem:[#allocation2 + $0x138] sm:$0xff]
    %v3522 = vld [vmem:[#allocation2 + $0x150] sm:$0xff]
    %v3523 = vld [vmem:[#allocation2 + $0x168] sm:$0xff]
    %v3524 = vld [vmem:[#allocation2 + $0xc8] sm:$0xff]
    %v3525 = vld [vmem:[#allocation2 + $0xe0] sm:$0xff]
    %v3526 = vld [vmem:[#allocation2 + $0xf8] sm:$0xff]
    %v3527 = vld [vmem:[#allocation2 + $0x110] sm:$0xff]
    %v3528 = vld [vmem:[#allocation2 + $0x128] sm:$0xff]
    %v3529 = vld [vmem:[#allocation2 + $0x140] sm:$0xff]
    %v3530 = vld [vmem:[#allocation2 + $0x158] sm:$0xff]
    %v3531 = vld [vmem:[#allocation2 + $0x170] sm:$0xff]
    %v3532 = vld [vmem:[#allocation2 + $0xd0] sm:$0xff]
    %v3533 = vld [vmem:[#allocation2 + $0xe8] sm:$0xff]
    %v3534 = vld [vmem:[#allocation2 + $0x100] sm:$0xff]
    %v3535 = vld [vmem:[#allocation2 + $0x118] sm:$0xff]
    %v3536 = vld [vmem:[#allocation2 + $0x130] sm:$0xff]
    %v3537 = vld [vmem:[#allocation2 + $0x148] sm:$0xff]
    %v3538 = vld [vmem:[#allocation2 + $0x160] sm:$0xff]
    %v3539 = vld [vmem:[#allocation2 + $0x178] sm:$0xff]
    %3548 = vrot.lane.b32.xlu0 %v3516, 64
    %v3549 = vpop.permute.xlu0 %3548
    %3550 = vrot.lane.b32.xlu0 %v3517, 64
    %v3551 = vpop.permute.xlu0 %3550
    %3552 = vrot.lane.b32.xlu0 %v3518, 64
    %v3553 = vpop.permute.xlu0 %3552
    %3554 = vrot.lane.b32.xlu0 %v3519, 64
    %v3555 = vpop.permute.xlu0 %3554
    %3556 = vrot.lane.b32.xlu0 %v3520, 64
    %v3557 = vpop.permute.xlu0 %3556
    %3558 = vrot.lane.b32.xlu0 %v3521, 64
    %v3559 = vpop.permute.xlu0 %3558
    %3560 = vrot.lane.b32.xlu0 %v3522, 64
    %v3561 = vpop.permute.xlu0 %3560
    %3562 = vrot.lane.b32.xlu0 %v3523, 64
    %v3563 = vpop.permute.xlu0 %3562
    %3572 = vrot.lane.b32.xlu0 %v3524, 64
    %v3573 = vpop.permute.xlu0 %3572
    %3574 = vrot.lane.b32.xlu0 %v3525, 64
    %v3575 = vpop.permute.xlu0 %3574
    %3576 = vrot.lane.b32.xlu0 %v3526, 64
    %v3577 = vpop.permute.xlu0 %3576
    %3578 = vrot.lane.b32.xlu0 %v3527, 64
    %v3579 = vpop.permute.xlu0 %3578
    %3580 = vrot.lane.b32.xlu0 %v3528, 64
    %v3581 = vpop.permute.xlu0 %3580
    %3582 = vrot.lane.b32.xlu0 %v3529, 64
    %v3583 = vpop.permute.xlu0 %3582
    %3584 = vrot.lane.b32.xlu0 %v3530, 64
    %v3585 = vpop.permute.xlu0 %3584
    %3586 = vrot.lane.b32.xlu0 %v3531, 64
    %v3587 = vpop.permute.xlu0 %3586
    %v3588 = vsel %vm739, %v3549, 0
    %v3590 = vsel %vm739, %v3551, 0
    %v3592 = vsel %vm739, %v3553, 0
    %v3594 = vsel %vm739, %v3555, 0
    %v3596 = vsel %vm739, %v3557, 0
    %v3598 = vsel %vm739, %v3559, 0
    %v3600 = vsel %vm739, %v3561, 0
    %v3602 = vsel %vm739, %v3563, 0
    %v3604 = vsel %vm739, %v3573, 0
    %v3606 = vsel %vm739, %v3575, 0
    %v3608 = vsel %vm739, %v3577, 0
    %v3610 = vsel %vm739, %v3579, 0
    %v3612 = vsel %vm739, %v3581, 0
    %v3614 = vsel %vm739, %v3583, 0
    %v3616 = vsel %vm739, %v3585, 0
    %v3618 = vsel %vm739, %v3587, 0
    %3620 = vmatprep.subr.mxu0 0.0
    %3621 = vmatpush1.xpose.msra.mxu0 %v3604
    %3622 = vmatprep.subr.mxu0 0.0
    %3623 = vmatpush1.xpose.msra.mxu0 %v3606
    %3624 = vmatprep.subr.mxu0 0.0
    %3625 = vmatpush1.xpose.msra.mxu0 %v3608
    %3626 = vmatprep.subr.mxu0 0.0
    %3627 = vmatpush1.xpose.msra.mxu0 %v3610
    %3628 = vmatprep.subr.mxu0 0.0
    %3629 = vmatpush1.xpose.msra.mxu0 %v3612
    %3630 = vmatprep.subr.mxu0 0.0
    %3631 = vmatpush1.xpose.msra.mxu0 %v3614
    %3632 = vmatprep.subr.mxu0 0.0
    %3633 = vmatpush1.xpose.msra.mxu0 %v3616
    %3634 = vmatprep.subr.mxu0 0.0
    %3635 = vmatpush1.xpose.msra.mxu0 %v3618
    %3636 = vmatprep.subr.mxu0 0.0
    %3637 = vmatpush1.xpose.msra.mxu0 0.0
    %3638 = vmatprep.subr.mxu0 0.0
    %3639 = vmatpush1.xpose.msra.mxu0 0.0
    %3640 = vmatprep.subr.mxu0 0.0
    %3641 = vmatpush1.xpose.msra.mxu0 0.0
    %3642 = vmatprep.subr.mxu0 0.0
    %3643 = vmatpush1.xpose.msra.mxu0 0.0
    %3644 = vmatprep.subr.mxu0 0.0
    %3645 = vmatpush1.xpose.msra.mxu0 0.0
    %3646 = vmatprep.subr.mxu0 0.0
    %3647 = vmatpush1.xpose.msra.mxu0 0.0
    %3648 = vmatprep.subr.mxu0 0.0
    %3649 = vmatpush1.xpose.msra.mxu0 0.0
    %3650 = vmatprep.subr.mxu0 0.0
    %3651 = vmatpush1.xpose.msra.mxu0 0.0
    %3652 = vmatprep.subr.mxu0 0.0
    %3653 = vmatpush1.xpose.msra.mxu0 0.0
    %3654 = vmatprep.subr.mxu0 0.0
    %3655 = vmatpush1.xpose.msra.mxu0 0.0
    %3656 = vmatprep.subr.mxu0 0.0
    %3657 = vmatpush1.xpose.msra.mxu0 0.0
    %3658 = vmatprep.subr.mxu0 0.0
    %3659 = vmatpush1.xpose.msra.mxu0 0.0
    %3660 = vmatprep.subr.mxu0 0.0
    %3661 = vmatpush1.xpose.msra.mxu0 0.0
    %3662 = vmatprep.subr.mxu0 0.0
    %3663 = vmatpush1.xpose.msra.mxu0 0.0
    %3664 = vmatprep.subr.mxu0 0.0
    %3665 = vmatpush1.xpose.msra.mxu0 0.0
    %3666 = vmatprep.subr.mxu0 0.0
    %3667 = vmatpush1.xpose.msra.mxu0 0.0
    %3668 = vmatprep.subr.mxu0 0.0
    %3669 = vmatpush1.xpose.msra.mxu0 0.0
    %3670 = vmatprep.subr.mxu0 0.0
    %3671 = vmatpush1.xpose.msra.mxu0 0.0
    %3672 = vmatprep.subr.mxu0 0.0
    %3673 = vmatpush1.xpose.msra.mxu0 0.0
    %3674 = vmatprep.subr.mxu0 0.0
    %3675 = vmatpush1.xpose.msra.mxu0 0.0
    %3676 = vmatprep.subr.mxu0 0.0
    %3677 = vmatpush1.xpose.msra.mxu0 0.0
    %3678 = vmatprep.subr.mxu0 0.0
    %3679 = vmatpush1.xpose.msra.mxu0 0.0
    %3680 = vmatprep.subr.mxu0 0.0
    %3681 = vmatpush1.xpose.msra.mxu0 0.0
    %3682 = vmatprep.subr.mxu0 0.0
    %3683 = vmatpush1.xpose.msra.mxu0 0.0
    %3684 = vmatprep.mubr.f32.mxu0 0.0
    %3685 = vmatmul.mubr.f32.gmra.mrb[0].mxu0 %v3588
    %v3686 = vpop.f32.mrb[0].mxu0
    %v3687 = vadd.f32 0.0, %v3686
    %v3688 = vpop.f32.mrb[0].mxu0
    %3689 = vmatprep.mubr.f32.mxu0 0.0
    %3690 = vmatmul.mubr.f32.gmra.mrb[0].mxu0 %v3590
    %v3691 = vpop.f32.mrb[0].mxu0
    %v3692 = vadd.f32 0.0, %v3691
    %v3693 = vpop.f32.mrb[0].mxu0
    %3694 = vmatprep.mubr.f32.mxu0 0.0
    %3695 = vmatmul.mubr.f32.gmra.mrb[0].mxu0 %v3592
    %v3696 = vpop.f32.mrb[0].mxu0
    %v3697 = vadd.f32 0.0, %v3696
    %v3698 = vpop.f32.mrb[0].mxu0
    %3699 = vmatprep.mubr.f32.mxu0 0.0
    %3700 = vmatmul.mubr.f32.gmra.mrb[0].mxu0 %v3594
    %v3701 = vpop.f32.mrb[0].mxu0
    %v3702 = vadd.f32 0.0, %v3701
    %v3703 = vpop.f32.mrb[0].mxu0
    %3704 = vmatprep.mubr.f32.mxu0 0.0
    %3705 = vmatmul.mubr.f32.gmra.mrb[0].mxu0 %v3596
    %v3706 = vpop.f32.mrb[0].mxu0
    %v3707 = vadd.f32 0.0, %v3706
    %v3708 = vpop.f32.mrb[0].mxu0
    %3709 = vmatprep.mubr.f32.mxu0 0.0
    %3710 = vmatmul.mubr.f32.gmra.mrb[0].mxu0 %v3598
    %v3711 = vpop.f32.mrb[0].mxu0
    %v3712 = vadd.f32 0.0, %v3711
    %v3713 = vpop.f32.mrb[0].mxu0
    %3714 = vmatprep.mubr.f32.mxu0 0.0
    %3715 = vmatmul.mubr.f32.gmra.mrb[0].mxu0 %v3600
    %v3716 = vpop.f32.mrb[0].mxu0
    %v3717 = vadd.f32 0.0, %v3716
    %v3718 = vpop.f32.mrb[0].mxu0
    %3719 = vmatprep.mubr.f32.mxu0 0.0
    %3720 = vmatmul.mubr.f32.gmra.mrb[0].mxu0 %v3602
    %v3721 = vpop.f32.mrb[0].mxu0
    %v3722 = vadd.f32 0.0, %v3721
    %v3723 = vpop.f32.mrb[0].mxu0
    %3724 = vdwg.mxu0
    %v3725 = vsel %vm893, %v3687, -inf
    %3726 = vmax.xlane.f32.xlu0 %v3725
    %v3727 = vpop.xlane.xlu0 %3726
    %v3728 = vsel %vm893, %v3692, -inf
    %3729 = vmax.xlane.f32.xlu0 %v3728
    %v3730 = vpop.xlane.xlu0 %3729
    %v3731 = vsel %vm893, %v3697, -inf
    %3732 = vmax.xlane.f32.xlu0 %v3731
    %v3733 = vpop.xlane.xlu0 %3732
    %v3734 = vsel %vm893, %v3702, -inf
    %3735 = vmax.xlane.f32.xlu0 %v3734
    %v3736 = vpop.xlane.xlu0 %3735
    %v3737 = vsel %vm893, %v3707, -inf
    %3738 = vmax.xlane.f32.xlu0 %v3737
    %v3739 = vpop.xlane.xlu0 %3738
    %v3740 = vsel %vm893, %v3712, -inf
    %3741 = vmax.xlane.f32.xlu0 %v3740
    %v3742 = vpop.xlane.xlu0 %3741
    %v3743 = vsel %vm893, %v3717, -inf
    %3744 = vmax.xlane.f32.xlu0 %v3743
    %v3745 = vpop.xlane.xlu0 %3744
    %v3746 = vsel %vm893, %v3722, -inf
    %3747 = vmax.xlane.f32.xlu0 %v3746
    %v3748 = vpop.xlane.xlu0 %3747
    %v3749 = vsub.f32 %v3687, %v3727
    %v3750 = vsub.f32 %v3692, %v3730
    %v3751 = vsub.f32 %v3697, %v3733
    %v3752 = vsub.f32 %v3702, %v3736
    %v3753 = vsub.f32 %v3707, %v3739
    %v3754 = vsub.f32 %v3712, %v3742
    %v3755 = vsub.f32 %v3717, %v3745
    %v3756 = vsub.f32 %v3722, %v3748
    %v3757 = vmul.f32 %v3749, 1.442695
    %v3758 = vpow.pop %v3757
    %v3759 = vmul.f32 %v3750, 1.442695
    %v3760 = vpow.pop %v3759
    %v3761 = vmul.f32 %v3751, 1.442695
    %v3762 = vpow.pop %v3761
    %v3763 = vmul.f32 %v3752, 1.442695
    %v3764 = vpow.pop %v3763
    %v3765 = vmul.f32 %v3753, 1.442695
    %v3766 = vpow.pop %v3765
    %v3767 = vmul.f32 %v3754, 1.442695
    %v3768 = vpow.pop %v3767
    %v3769 = vmul.f32 %v3755, 1.442695
    %v3770 = vpow.pop %v3769
    %v3771 = vmul.f32 %v3756, 1.442695
    %v3772 = vpow.pop %v3771
    %v3773 = vsel %vm893, %v3758, 0.0
    %3774 = vadd.xlane.f32.xlu0 %v3773
    %v3775 = vpop.xlane.xlu0 %3774
    %v3776 = vsel %vm893, %v3760, 0.0
    %3777 = vadd.xlane.f32.xlu0 %v3776
    %v3778 = vpop.xlane.xlu0 %3777
    %v3779 = vsel %vm893, %v3762, 0.0
    %3780 = vadd.xlane.f32.xlu0 %v3779
    %v3781 = vpop.xlane.xlu0 %3780
    %v3782 = vsel %vm893, %v3764, 0.0
    %3783 = vadd.xlane.f32.xlu0 %v3782
    %v3784 = vpop.xlane.xlu0 %3783
    %v3785 = vsel %vm893, %v3766, 0.0
    %3786 = vadd.xlane.f32.xlu0 %v3785
    %v3787 = vpop.xlane.xlu0 %3786
    %v3788 = vsel %vm893, %v3768, 0.0
    %3789 = vadd.xlane.f32.xlu0 %v3788
    %v3790 = vpop.xlane.xlu0 %3789
    %v3791 = vsel %vm893, %v3770, 0.0
    %3792 = vadd.xlane.f32.xlu0 %v3791
    %v3793 = vpop.xlane.xlu0 %3792
    %v3794 = vsel %vm893, %v3772, 0.0
    %3795 = vadd.xlane.f32.xlu0 %v3794
    %v3796 = vpop.xlane.xlu0 %3795
    %v3797 = vrcp.pop %v3775
    %v3798 = vrcp.pop %v3778
    %v3799 = vrcp.pop %v3781
    %v3800 = vrcp.pop %v3784
    %v3801 = vrcp.pop %v3787
    %v3802 = vrcp.pop %v3790
    %v3803 = vrcp.pop %v3793
    %v3804 = vrcp.pop %v3796
    %v3805 = vmul.f32 %v3758, %v3797
    %v3806 = vmul.f32 %v3760, %v3798
    %v3807 = vmul.f32 %v3762, %v3799
    %v3808 = vmul.f32 %v3764, %v3800
    %v3809 = vmul.f32 %v3766, %v3801
    %v3810 = vmul.f32 %v3768, %v3802
    %v3811 = vmul.f32 %v3770, %v3803
    %v3812 = vmul.f32 %v3772, %v3804
    %3821 = vrot.lane.b32.xlu0 %v3532, 64
    %v3822 = vpop.permute.xlu0 %3821
    %3823 = vrot.lane.b32.xlu0 %v3533, 64
    %v3824 = vpop.permute.xlu0 %3823
    %3825 = vrot.lane.b32.xlu0 %v3534, 64
    %v3826 = vpop.permute.xlu0 %3825
    %3827 = vrot.lane.b32.xlu0 %v3535, 64
    %v3828 = vpop.permute.xlu0 %3827
    %3829 = vrot.lane.b32.xlu0 %v3536, 64
    %v3830 = vpop.permute.xlu0 %3829
    %3831 = vrot.lane.b32.xlu0 %v3537, 64
    %v3832 = vpop.permute.xlu0 %3831
    %3833 = vrot.lane.b32.xlu0 %v3538, 64
    %v3834 = vpop.permute.xlu0 %3833
    %3835 = vrot.lane.b32.xlu0 %v3539, 64
    %v3836 = vpop.permute.xlu0 %3835
    %v3846 = vsel %vm893, %v3805, 0
    %v3849 = vsel %vm893, %v3806, 0
    %v3852 = vsel %vm893, %v3807, 0
    %v3855 = vsel %vm893, %v3808, 0
    %v3858 = vsel %vm893, %v3809, 0
    %v3861 = vsel %vm893, %v3810, 0
    %v3864 = vsel %vm893, %v3811, 0
    %v3867 = vsel %vm893, %v3812, 0
    %3869 = vmatprep.subr.mxu0 0.0
    %3870 = vmatpush1.msra.mxu0 %v3822
    %3871 = vmatprep.subr.mxu0 0.0
    %3872 = vmatpush1.msra.mxu0 %v3824
    %3873 = vmatprep.subr.mxu0 0.0
    %3874 = vmatpush1.msra.mxu0 %v3826
    %3875 = vmatprep.subr.mxu0 0.0
    %3876 = vmatpush1.msra.mxu0 %v3828
    %3877 = vmatprep.subr.mxu0 0.0
    %3878 = vmatpush1.msra.mxu0 %v3830
    %3879 = vmatprep.subr.mxu0 0.0
    %3880 = vmatpush1.msra.mxu0 %v3832
    %3881 = vmatprep.subr.mxu0 0.0
    %3882 = vmatpush1.msra.mxu0 %v3834
    %3883 = vmatprep.subr.mxu0 0.0
    %3884 = vmatpush1.msra.mxu0 %v3836
    %3885 = vmatprep.subr.mxu0 0.0
    %3886 = vmatpush1.msra.mxu0 0.0
    %3887 = vmatprep.subr.mxu0 0.0
    %3888 = vmatpush1.msra.mxu0 0.0
    %3889 = vmatprep.subr.mxu0 0.0
    %3890 = vmatpush1.msra.mxu0 0.0
    %3891 = vmatprep.subr.mxu0 0.0
    %3892 = vmatpush1.msra.mxu0 0.0
    %3893 = vmatprep.subr.mxu0 0.0
    %3894 = vmatpush1.msra.mxu0 0.0
    %3895 = vmatprep.subr.mxu0 0.0
    %3896 = vmatpush1.msra.mxu0 0.0
    %3897 = vmatprep.subr.mxu0 0.0
    %3898 = vmatpush1.msra.mxu0 0.0
    %3899 = vmatprep.subr.mxu0 0.0
    %3900 = vmatpush1.msra.mxu0 0.0
    %3901 = vmatprep.subr.mxu0 0.0
    %3902 = vmatpush1.msra.mxu0 0.0
    %3903 = vmatprep.subr.mxu0 0.0
    %3904 = vmatpush1.msra.mxu0 0.0
    %3905 = vmatprep.subr.mxu0 0.0
    %3906 = vmatpush1.msra.mxu0 0.0
    %3907 = vmatprep.subr.mxu0 0.0
    %3908 = vmatpush1.msra.mxu0 0.0
    %3909 = vmatprep.subr.mxu0 0.0
    %3910 = vmatpush1.msra.mxu0 0.0
    %3911 = vmatprep.subr.mxu0 0.0
    %3912 = vmatpush1.msra.mxu0 0.0
    %3913 = vmatprep.subr.mxu0 0.0
    %3914 = vmatpush1.msra.mxu0 0.0
    %3915 = vmatprep.subr.mxu0 0.0
    %3916 = vmatpush1.msra.mxu0 0.0
    %3917 = vmatprep.subr.mxu0 0.0
    %3918 = vmatpush1.msra.mxu0 0.0
    %3919 = vmatprep.subr.mxu0 0.0
    %3920 = vmatpush1.msra.mxu0 0.0
    %3921 = vmatprep.subr.mxu0 0.0
    %3922 = vmatpush1.msra.mxu0 0.0
    %3923 = vmatprep.subr.mxu0 0.0
    %3924 = vmatpush1.msra.mxu0 0.0
    %3925 = vmatprep.subr.mxu0 0.0
    %3926 = vmatpush1.msra.mxu0 0.0
    %3927 = vmatprep.subr.mxu0 0.0
    %3928 = vmatpush1.msra.mxu0 0.0
    %3929 = vmatprep.subr.mxu0 0.0
    %3930 = vmatpush1.msra.mxu0 0.0
    %3931 = vmatprep.subr.mxu0 0.0
    %3932 = vmatpush1.msra.mxu0 0.0
    %3933 = vmatprep.mubr.f32.mxu0 0.0
    %3934 = vmatmul.mubr.f32.gmra.mrb[0].mxu0 %v3846
    %v3935 = vpop.f32.mrb[0].mxu0
    %v3936 = vadd.f32 0.0, %v3935
    %v3937 = vpop.f32.mrb[0].mxu0
    %3938 = vmatprep.mubr.f32.mxu0 0.0
    %3939 = vmatmul.mubr.f32.gmra.mrb[0].mxu0 %v3849
    %v3940 = vpop.f32.mrb[0].mxu0
    %v3941 = vadd.f32 0.0, %v3940
    %v3942 = vpop.f32.mrb[0].mxu0
    %3943 = vmatprep.mubr.f32.mxu0 0.0
    %3944 = vmatmul.mubr.f32.gmra.mrb[0].mxu0 %v3852
    %v3945 = vpop.f32.mrb[0].mxu0
    %v3946 = vadd.f32 0.0, %v3945
    %v3947 = vpop.f32.mrb[0].mxu0
    %3948 = vmatprep.mubr.f32.mxu0 0.0
    %3949 = vmatmul.mubr.f32.gmra.mrb[0].mxu0 %v3855
    %v3950 = vpop.f32.mrb[0].mxu0
    %v3951 = vadd.f32 0.0, %v3950
    %v3952 = vpop.f32.mrb[0].mxu0
    %3953 = vmatprep.mubr.f32.mxu0 0.0
    %3954 = vmatmul.mubr.f32.gmra.mrb[0].mxu0 %v3858
    %v3955 = vpop.f32.mrb[0].mxu0
    %v3956 = vadd.f32 0.0, %v3955
    %v3957 = vpop.f32.mrb[0].mxu0
    %3958 = vmatprep.mubr.f32.mxu0 0.0
    %3959 = vmatmul.mubr.f32.gmra.mrb[0].mxu0 %v3861
    %v3960 = vpop.f32.mrb[0].mxu0
    %v3961 = vadd.f32 0.0, %v3960
    %v3962 = vpop.f32.mrb[0].mxu0
    %3963 = vmatprep.mubr.f32.mxu0 0.0
    %3964 = vmatmul.mubr.f32.gmra.mrb[0].mxu0 %v3864
    %v3965 = vpop.f32.mrb[0].mxu0
    %v3966 = vadd.f32 0.0, %v3965
    %v3967 = vpop.f32.mrb[0].mxu0
    %3968 = vmatprep.mubr.f32.mxu0 0.0
    %3969 = vmatmul.mubr.f32.gmra.mrb[0].mxu0 %v3867
    %v3970 = vpop.f32.mrb[0].mxu0
    %v3971 = vadd.f32 0.0, %v3970
    %v3972 = vpop.f32.mrb[0].mxu0
    %3973 = vdwg.mxu0
    %3982 = vrot.lane.b32.xlu0 %v3936, 64
    %v3983 = vpop.permute.xlu0 %3982
    %3984 = vrot.lane.b32.xlu0 %v3941, 64
    %v3985 = vpop.permute.xlu0 %3984
    %3986 = vrot.lane.b32.xlu0 %v3946, 64
    %v3987 = vpop.permute.xlu0 %3986
    %3988 = vrot.lane.b32.xlu0 %v3951, 64
    %v3989 = vpop.permute.xlu0 %3988
    %3990 = vrot.lane.b32.xlu0 %v3956, 64
    %v3991 = vpop.permute.xlu0 %3990
    %3992 = vrot.lane.b32.xlu0 %v3961, 64
    %v3993 = vpop.permute.xlu0 %3992
    %3994 = vrot.lane.b32.xlu0 %v3966, 64
    %v3995 = vpop.permute.xlu0 %3994
    %3996 = vrot.lane.b32.xlu0 %v3971, 64
    %v3997 = vpop.permute.xlu0 %3996
    %4006 = vst.msk [vmem:[#allocation3 + $0x40] sm:$0xff] %vm2108, %v3983
    %4007 = vst.msk [vmem:[#allocation3 + $0x48] sm:$0xff] %vm2108, %v3985
    %4008 = vst.msk [vmem:[#allocation3 + $0x50] sm:$0xff] %vm2108, %v3987
    %4009 = vst.msk [vmem:[#allocation3 + $0x58] sm:$0xff] %vm2108, %v3989
    %4010 = vst.msk [vmem:[#allocation3 + $0x60] sm:$0xff] %vm2108, %v3991
    %4011 = vst.msk [vmem:[#allocation3 + $0x68] sm:$0xff] %vm2108, %v3993
    %4012 = vst.msk [vmem:[#allocation3 + $0x70] sm:$0xff] %vm2108, %v3995
    %4013 = vst.msk [vmem:[#allocation3 + $0x78] sm:$0xff] %vm2108, %v3997
    %v4014 = vld [vmem:[#allocation2 + $0xc0] sm:$0xff]
    %v4015 = vld [vmem:[#allocation2 + $0xd8] sm:$0xff]
    %v4016 = vld [vmem:[#allocation2 + $0xf0] sm:$0xff]
    %v4017 = vld [vmem:[#allocation2 + $0x108] sm:$0xff]
    %v4018 = vld [vmem:[#allocation2 + $0x120] sm:$0xff]
    %v4019 = vld [vmem:[#allocation2 + $0x138] sm:$0xff]
    %v4020 = vld [vmem:[#allocation2 + $0x150] sm:$0xff]
    %v4021 = vld [vmem:[#allocation2 + $0x168] sm:$0xff]
    %v4022 = vld [vmem:[#allocation2 + $0xc8] sm:$0xff]
    %v4023 = vld [vmem:[#allocation2 + $0xe0] sm:$0xff]
    %v4024 = vld [vmem:[#allocation2 + $0xf8] sm:$0xff]
    %v4025 = vld [vmem:[#allocation2 + $0x110] sm:$0xff]
    %v4026 = vld [vmem:[#allocation2 + $0x128] sm:$0xff]
    %v4027 = vld [vmem:[#allocation2 + $0x140] sm:$0xff]
    %v4028 = vld [vmem:[#allocation2 + $0x158] sm:$0xff]
    %v4029 = vld [vmem:[#allocation2 + $0x170] sm:$0xff]
    %v4030 = vld [vmem:[#allocation2 + $0xd0] sm:$0xff]
    %v4031 = vld [vmem:[#allocation2 + $0xe8] sm:$0xff]
    %v4032 = vld [vmem:[#allocation2 + $0x100] sm:$0xff]
    %v4033 = vld [vmem:[#allocation2 + $0x118] sm:$0xff]
    %v4034 = vld [vmem:[#allocation2 + $0x130] sm:$0xff]
    %v4035 = vld [vmem:[#allocation2 + $0x148] sm:$0xff]
    %v4036 = vld [vmem:[#allocation2 + $0x160] sm:$0xff]
    %v4037 = vld [vmem:[#allocation2 + $0x178] sm:$0xff]
    %4046 = vrot.lane.b32.xlu0 %v4014, 32
    %v4047 = vpop.permute.xlu0 %4046
    %4048 = vrot.lane.b32.xlu0 %v4015, 32
    %v4049 = vpop.permute.xlu0 %4048
    %4050 = vrot.lane.b32.xlu0 %v4016, 32
    %v4051 = vpop.permute.xlu0 %4050
    %4052 = vrot.lane.b32.xlu0 %v4017, 32
    %v4053 = vpop.permute.xlu0 %4052
    %4054 = vrot.lane.b32.xlu0 %v4018, 32
    %v4055 = vpop.permute.xlu0 %4054
    %4056 = vrot.lane.b32.xlu0 %v4019, 32
    %v4057 = vpop.permute.xlu0 %4056
    %4058 = vrot.lane.b32.xlu0 %v4020, 32
    %v4059 = vpop.permute.xlu0 %4058
    %4060 = vrot.lane.b32.xlu0 %v4021, 32
    %v4061 = vpop.permute.xlu0 %4060
    %4070 = vrot.lane.b32.xlu0 %v4022, 32
    %v4071 = vpop.permute.xlu0 %4070
    %4072 = vrot.lane.b32.xlu0 %v4023, 32
    %v4073 = vpop.permute.xlu0 %4072
    %4074 = vrot.lane.b32.xlu0 %v4024, 32
    %v4075 = vpop.permute.xlu0 %4074
    %4076 = vrot.lane.b32.xlu0 %v4025, 32
    %v4077 = vpop.permute.xlu0 %4076
    %4078 = vrot.lane.b32.xlu0 %v4026, 32
    %v4079 = vpop.permute.xlu0 %4078
    %4080 = vrot.lane.b32.xlu0 %v4027, 32
    %v4081 = vpop.permute.xlu0 %4080
    %4082 = vrot.lane.b32.xlu0 %v4028, 32
    %v4083 = vpop.permute.xlu0 %4082
    %4084 = vrot.lane.b32.xlu0 %v4029, 32
    %v4085 = vpop.permute.xlu0 %4084
    %v4086 = vsel %vm739, %v4047, 0
    %v4088 = vsel %vm739, %v4049, 0
    %v4090 = vsel %vm739, %v4051, 0
    %v4092 = vsel %vm739, %v4053, 0
    %v4094 = vsel %vm739, %v4055, 0
    %v4096 = vsel %vm739, %v4057, 0
    %v4098 = vsel %vm739, %v4059, 0
    %v4100 = vsel %vm739, %v4061, 0
    %v4102 = vsel %vm739, %v4071, 0
    %v4104 = vsel %vm739, %v4073, 0
    %v4106 = vsel %vm739, %v4075, 0
    %v4108 = vsel %vm739, %v4077, 0
    %v4110 = vsel %vm739, %v4079, 0
    %v4112 = vsel %vm739, %v4081, 0
    %v4114 = vsel %vm739, %v4083, 0
    %v4116 = vsel %vm739, %v4085, 0
    %4118 = vmatprep.subr.mxu0 0.0
    %4119 = vmatpush1.xpose.msra.mxu0 %v4102
    %4120 = vmatprep.subr.mxu0 0.0
    %4121 = vmatpush1.xpose.msra.mxu0 %v4104
    %4122 = vmatprep.subr.mxu0 0.0
    %4123 = vmatpush1.xpose.msra.mxu0 %v4106
    %4124 = vmatprep.subr.mxu0 0.0
    %4125 = vmatpush1.xpose.msra.mxu0 %v4108
    %4126 = vmatprep.subr.mxu0 0.0
    %4127 = vmatpush1.xpose.msra.mxu0 %v4110
    %4128 = vmatprep.subr.mxu0 0.0
    %4129 = vmatpush1.xpose.msra.mxu0 %v4112
    %4130 = vmatprep.subr.mxu0 0.0
    %4131 = vmatpush1.xpose.msra.mxu0 %v4114
    %4132 = vmatprep.subr.mxu0 0.0
    %4133 = vmatpush1.xpose.msra.mxu0 %v4116
    %4134 = vmatprep.subr.mxu0 0.0
    %4135 = vmatpush1.xpose.msra.mxu0 0.0
    %4136 = vmatprep.subr.mxu0 0.0
    %4137 = vmatpush1.xpose.msra.mxu0 0.0
    %4138 = vmatprep.subr.mxu0 0.0
    %4139 = vmatpush1.xpose.msra.mxu0 0.0
    %4140 = vmatprep.subr.mxu0 0.0
    %4141 = vmatpush1.xpose.msra.mxu0 0.0
    %4142 = vmatprep.subr.mxu0 0.0
    %4143 = vmatpush1.xpose.msra.mxu0 0.0
    %4144 = vmatprep.subr.mxu0 0.0
    %4145 = vmatpush1.xpose.msra.mxu0 0.0
    %4146 = vmatprep.subr.mxu0 0.0
    %4147 = vmatpush1.xpose.msra.mxu0 0.0
    %4148 = vmatprep.subr.mxu0 0.0
    %4149 = vmatpush1.xpose.msra.mxu0 0.0
    %4150 = vmatprep.subr.mxu0 0.0
    %4151 = vmatpush1.xpose.msra.mxu0 0.0
    %4152 = vmatprep.subr.mxu0 0.0
    %4153 = vmatpush1.xpose.msra.mxu0 0.0
    %4154 = vmatprep.subr.mxu0 0.0
    %4155 = vmatpush1.xpose.msra.mxu0 0.0
    %4156 = vmatprep.subr.mxu0 0.0
    %4157 = vmatpush1.xpose.msra.mxu0 0.0
    %4158 = vmatprep.subr.mxu0 0.0
    %4159 = vmatpush1.xpose.msra.mxu0 0.0
    %4160 = vmatprep.subr.mxu0 0.0
    %4161 = vmatpush1.xpose.msra.mxu0 0.0
    %4162 = vmatprep.subr.mxu0 0.0
    %4163 = vmatpush1.xpose.msra.mxu0 0.0
    %4164 = vmatprep.subr.mxu0 0.0
    %4165 = vmatpush1.xpose.msra.mxu0 0.0
    %4166 = vmatprep.subr.mxu0 0.0
    %4167 = vmatpush1.xpose.msra.mxu0 0.0
    %4168 = vmatprep.subr.mxu0 0.0
    %4169 = vmatpush1.xpose.msra.mxu0 0.0
    %4170 = vmatprep.subr.mxu0 0.0
    %4171 = vmatpush1.xpose.msra.mxu0 0.0
    %4172 = vmatprep.subr.mxu0 0.0
    %4173 = vmatpush1.xpose.msra.mxu0 0.0
    %4174 = vmatprep.subr.mxu0 0.0
    %4175 = vmatpush1.xpose.msra.mxu0 0.0
    %4176 = vmatprep.subr.mxu0 0.0
    %4177 = vmatpush1.xpose.msra.mxu0 0.0
    %4178 = vmatprep.subr.mxu0 0.0
    %4179 = vmatpush1.xpose.msra.mxu0 0.0
    %4180 = vmatprep.subr.mxu0 0.0
    %4181 = vmatpush1.xpose.msra.mxu0 0.0
    %4182 = vmatprep.mubr.f32.mxu0 0.0
    %4183 = vmatmul.mubr.f32.gmra.mrb[0].mxu0 %v4086
    %v4184 = vpop.f32.mrb[0].mxu0
    %v4185 = vadd.f32 0.0, %v4184
    %v4186 = vpop.f32.mrb[0].mxu0
    %4187 = vmatprep.mubr.f32.mxu0 0.0
    %4188 = vmatmul.mubr.f32.gmra.mrb[0].mxu0 %v4088
    %v4189 = vpop.f32.mrb[0].mxu0
    %v4190 = vadd.f32 0.0, %v4189
    %v4191 = vpop.f32.mrb[0].mxu0
    %4192 = vmatprep.mubr.f32.mxu0 0.0
    %4193 = vmatmul.mubr.f32.gmra.mrb[0].mxu0 %v4090
    %v4194 = vpop.f32.mrb[0].mxu0
    %v4195 = vadd.f32 0.0, %v4194
    %v4196 = vpop.f32.mrb[0].mxu0
    %4197 = vmatprep.mubr.f32.mxu0 0.0
    %4198 = vmatmul.mubr.f32.gmra.mrb[0].mxu0 %v4092
    %v4199 = vpop.f32.mrb[0].mxu0
    %v4200 = vadd.f32 0.0, %v4199
    %v4201 = vpop.f32.mrb[0].mxu0
    %4202 = vmatprep.mubr.f32.mxu0 0.0
    %4203 = vmatmul.mubr.f32.gmra.mrb[0].mxu0 %v4094
    %v4204 = vpop.f32.mrb[0].mxu0
    %v4205 = vadd.f32 0.0, %v4204
    %v4206 = vpop.f32.mrb[0].mxu0
    %4207 = vmatprep.mubr.f32.mxu0 0.0
    %4208 = vmatmul.mubr.f32.gmra.mrb[0].mxu0 %v4096
    %v4209 = vpop.f32.mrb[0].mxu0
    %v4210 = vadd.f32 0.0, %v4209
    %v4211 = vpop.f32.mrb[0].mxu0
    %4212 = vmatprep.mubr.f32.mxu0 0.0
    %4213 = vmatmul.mubr.f32.gmra.mrb[0].mxu0 %v4098
    %v4214 = vpop.f32.mrb[0].mxu0
    %v4215 = vadd.f32 0.0, %v4214
    %v4216 = vpop.f32.mrb[0].mxu0
    %4217 = vmatprep.mubr.f32.mxu0 0.0
    %4218 = vmatmul.mubr.f32.gmra.mrb[0].mxu0 %v4100
    %v4219 = vpop.f32.mrb[0].mxu0
    %v4220 = vadd.f32 0.0, %v4219
    %v4221 = vpop.f32.mrb[0].mxu0
    %4222 = vdwg.mxu0
    %v4223 = vsel %vm893, %v4185, -inf
    %4224 = vmax.xlane.f32.xlu0 %v4223
    %v4225 = vpop.xlane.xlu0 %4224
    %v4226 = vsel %vm893, %v4190, -inf
    %4227 = vmax.xlane.f32.xlu0 %v4226
    %v4228 = vpop.xlane.xlu0 %4227
    %v4229 = vsel %vm893, %v4195, -inf
    %4230 = vmax.xlane.f32.xlu0 %v4229
    %v4231 = vpop.xlane.xlu0 %4230
    %v4232 = vsel %vm893, %v4200, -inf
    %4233 = vmax.xlane.f32.xlu0 %v4232
    %v4234 = vpop.xlane.xlu0 %4233
    %v4235 = vsel %vm893, %v4205, -inf
    %4236 = vmax.xlane.f32.xlu0 %v4235
    %v4237 = vpop.xlane.xlu0 %4236
    %v4238 = vsel %vm893, %v4210, -inf
    %4239 = vmax.xlane.f32.xlu0 %v4238
    %v4240 = vpop.xlane.xlu0 %4239
    %v4241 = vsel %vm893, %v4215, -inf
    %4242 = vmax.xlane.f32.xlu0 %v4241
    %v4243 = vpop.xlane.xlu0 %4242
    %v4244 = vsel %vm893, %v4220, -inf
    %4245 = vmax.xlane.f32.xlu0 %v4244
    %v4246 = vpop.xlane.xlu0 %4245
    %v4247 = vsub.f32 %v4185, %v4225
    %v4248 = vsub.f32 %v4190, %v4228
    %v4249 = vsub.f32 %v4195, %v4231
    %v4250 = vsub.f32 %v4200, %v4234
    %v4251 = vsub.f32 %v4205, %v4237
    %v4252 = vsub.f32 %v4210, %v4240
    %v4253 = vsub.f32 %v4215, %v4243
    %v4254 = vsub.f32 %v4220, %v4246
    %v4255 = vmul.f32 %v4247, 1.442695
    %v4256 = vpow.pop %v4255
    %v4257 = vmul.f32 %v4248, 1.442695
    %v4258 = vpow.pop %v4257
    %v4259 = vmul.f32 %v4249, 1.442695
    %v4260 = vpow.pop %v4259
    %v4261 = vmul.f32 %v4250, 1.442695
    %v4262 = vpow.pop %v4261
    %v4263 = vmul.f32 %v4251, 1.442695
    %v4264 = vpow.pop %v4263
    %v4265 = vmul.f32 %v4252, 1.442695
    %v4266 = vpow.pop %v4265
    %v4267 = vmul.f32 %v4253, 1.442695
    %v4268 = vpow.pop %v4267
    %v4269 = vmul.f32 %v4254, 1.442695
    %v4270 = vpow.pop %v4269
    %v4271 = vsel %vm893, %v4256, 0.0
    %4272 = vadd.xlane.f32.xlu0 %v4271
    %v4273 = vpop.xlane.xlu0 %4272
    %v4274 = vsel %vm893, %v4258, 0.0
    %4275 = vadd.xlane.f32.xlu0 %v4274
    %v4276 = vpop.xlane.xlu0 %4275
    %v4277 = vsel %vm893, %v4260, 0.0
    %4278 = vadd.xlane.f32.xlu0 %v4277
    %v4279 = vpop.xlane.xlu0 %4278
    %v4280 = vsel %vm893, %v4262, 0.0
    %4281 = vadd.xlane.f32.xlu0 %v4280
    %v4282 = vpop.xlane.xlu0 %4281
    %v4283 = vsel %vm893, %v4264, 0.0
    %4284 = vadd.xlane.f32.xlu0 %v4283
    %v4285 = vpop.xlane.xlu0 %4284
    %v4286 = vsel %vm893, %v4266, 0.0
    %4287 = vadd.xlane.f32.xlu0 %v4286
    %v4288 = vpop.xlane.xlu0 %4287
    %v4289 = vsel %vm893, %v4268, 0.0
    %4290 = vadd.xlane.f32.xlu0 %v4289
    %v4291 = vpop.xlane.xlu0 %4290
    %v4292 = vsel %vm893, %v4270, 0.0
    %4293 = vadd.xlane.f32.xlu0 %v4292
    %v4294 = vpop.xlane.xlu0 %4293
    %v4295 = vrcp.pop %v4273
    %v4296 = vrcp.pop %v4276
    %v4297 = vrcp.pop %v4279
    %v4298 = vrcp.pop %v4282
    %v4299 = vrcp.pop %v4285
    %v4300 = vrcp.pop %v4288
    %v4301 = vrcp.pop %v4291
    %v4302 = vrcp.pop %v4294
    %v4303 = vmul.f32 %v4256, %v4295
    %v4304 = vmul.f32 %v4258, %v4296
    %v4305 = vmul.f32 %v4260, %v4297
    %v4306 = vmul.f32 %v4262, %v4298
    %v4307 = vmul.f32 %v4264, %v4299
    %v4308 = vmul.f32 %v4266, %v4300
    %v4309 = vmul.f32 %v4268, %v4301
    %v4310 = vmul.f32 %v4270, %v4302
    %4319 = vrot.lane.b32.xlu0 %v4030, 32
    %v4320 = vpop.permute.xlu0 %4319
    %4321 = vrot.lane.b32.xlu0 %v4031, 32
    %v4322 = vpop.permute.xlu0 %4321
    %4323 = vrot.lane.b32.xlu0 %v4032, 32
    %v4324 = vpop.permute.xlu0 %4323
    %4325 = vrot.lane.b32.xlu0 %v4033, 32
    %v4326 = vpop.permute.xlu0 %4325
    %4327 = vrot.lane.b32.xlu0 %v4034, 32
    %v4328 = vpop.permute.xlu0 %4327
    %4329 = vrot.lane.b32.xlu0 %v4035, 32
    %v4330 = vpop.permute.xlu0 %4329
    %4331 = vrot.lane.b32.xlu0 %v4036, 32
    %v4332 = vpop.permute.xlu0 %4331
    %4333 = vrot.lane.b32.xlu0 %v4037, 32
    %v4334 = vpop.permute.xlu0 %4333
    %v4344 = vsel %vm893, %v4303, 0
    %v4347 = vsel %vm893, %v4304, 0
    %v4350 = vsel %vm893, %v4305, 0
    %v4353 = vsel %vm893, %v4306, 0
    %v4356 = vsel %vm893, %v4307, 0
    %v4359 = vsel %vm893, %v4308, 0
    %v4362 = vsel %vm893, %v4309, 0
    %v4365 = vsel %vm893, %v4310, 0
    %4367 = vmatprep.subr.mxu0 0.0
    %4368 = vmatpush1.msra.mxu0 %v4320
    %4369 = vmatprep.subr.mxu0 0.0
    %4370 = vmatpush1.msra.mxu0 %v4322
    %4371 = vmatprep.subr.mxu0 0.0
    %4372 = vmatpush1.msra.mxu0 %v4324
    %4373 = vmatprep.subr.mxu0 0.0
    %4374 = vmatpush1.msra.mxu0 %v4326
    %4375 = vmatprep.subr.mxu0 0.0
    %4376 = vmatpush1.msra.mxu0 %v4328
    %4377 = vmatprep.subr.mxu0 0.0
    %4378 = vmatpush1.msra.mxu0 %v4330
    %4379 = vmatprep.subr.mxu0 0.0
    %4380 = vmatpush1.msra.mxu0 %v4332
    %4381 = vmatprep.subr.mxu0 0.0
    %4382 = vmatpush1.msra.mxu0 %v4334
    %4383 = vmatprep.subr.mxu0 0.0
    %4384 = vmatpush1.msra.mxu0 0.0
    %4385 = vmatprep.subr.mxu0 0.0
    %4386 = vmatpush1.msra.mxu0 0.0
    %4387 = vmatprep.subr.mxu0 0.0
    %4388 = vmatpush1.msra.mxu0 0.0
    %4389 = vmatprep.subr.mxu0 0.0
    %4390 = vmatpush1.msra.mxu0 0.0
    %4391 = vmatprep.subr.mxu0 0.0
    %4392 = vmatpush1.msra.mxu0 0.0
    %4393 = vmatprep.subr.mxu0 0.0
    %4394 = vmatpush1.msra.mxu0 0.0
    %4395 = vmatprep.subr.mxu0 0.0
    %4396 = vmatpush1.msra.mxu0 0.0
    %4397 = vmatprep.subr.mxu0 0.0
    %4398 = vmatpush1.msra.mxu0 0.0
    %4399 = vmatprep.subr.mxu0 0.0
    %4400 = vmatpush1.msra.mxu0 0.0
    %4401 = vmatprep.subr.mxu0 0.0
    %4402 = vmatpush1.msra.mxu0 0.0
    %4403 = vmatprep.subr.mxu0 0.0
    %4404 = vmatpush1.msra.mxu0 0.0
    %4405 = vmatprep.subr.mxu0 0.0
    %4406 = vmatpush1.msra.mxu0 0.0
    %4407 = vmatprep.subr.mxu0 0.0
    %4408 = vmatpush1.msra.mxu0 0.0
    %4409 = vmatprep.subr.mxu0 0.0
    %4410 = vmatpush1.msra.mxu0 0.0
    %4411 = vmatprep.subr.mxu0 0.0
    %4412 = vmatpush1.msra.mxu0 0.0
    %4413 = vmatprep.subr.mxu0 0.0
    %4414 = vmatpush1.msra.mxu0 0.0
    %4415 = vmatprep.subr.mxu0 0.0
    %4416 = vmatpush1.msra.mxu0 0.0
    %4417 = vmatprep.subr.mxu0 0.0
    %4418 = vmatpush1.msra.mxu0 0.0
    %4419 = vmatprep.subr.mxu0 0.0
    %4420 = vmatpush1.msra.mxu0 0.0
    %4421 = vmatprep.subr.mxu0 0.0
    %4422 = vmatpush1.msra.mxu0 0.0
    %4423 = vmatprep.subr.mxu0 0.0
    %4424 = vmatpush1.msra.mxu0 0.0
    %4425 = vmatprep.subr.mxu0 0.0
    %4426 = vmatpush1.msra.mxu0 0.0
    %4427 = vmatprep.subr.mxu0 0.0
    %4428 = vmatpush1.msra.mxu0 0.0
    %4429 = vmatprep.subr.mxu0 0.0
    %4430 = vmatpush1.msra.mxu0 0.0
    %4431 = vmatprep.mubr.f32.mxu0 0.0
    %4432 = vmatmul.mubr.f32.gmra.mrb[0].mxu0 %v4344
    %v4433 = vpop.f32.mrb[0].mxu0
    %v4434 = vadd.f32 0.0, %v4433
    %v4435 = vpop.f32.mrb[0].mxu0
    %4436 = vmatprep.mubr.f32.mxu0 0.0
    %4437 = vmatmul.mubr.f32.gmra.mrb[0].mxu0 %v4347
    %v4438 = vpop.f32.mrb[0].mxu0
    %v4439 = vadd.f32 0.0, %v4438
    %v4440 = vpop.f32.mrb[0].mxu0
    %4441 = vmatprep.mubr.f32.mxu0 0.0
    %4442 = vmatmul.mubr.f32.gmra.mrb[0].mxu0 %v4350
    %v4443 = vpop.f32.mrb[0].mxu0
    %v4444 = vadd.f32 0.0, %v4443
    %v4445 = vpop.f32.mrb[0].mxu0
    %4446 = vmatprep.mubr.f32.mxu0 0.0
    %4447 = vmatmul.mubr.f32.gmra.mrb[0].mxu0 %v4353
    %v4448 = vpop.f32.mrb[0].mxu0
    %v4449 = vadd.f32 0.0, %v4448
    %v4450 = vpop.f32.mrb[0].mxu0
    %4451 = vmatprep.mubr.f32.mxu0 0.0
    %4452 = vmatmul.mubr.f32.gmra.mrb[0].mxu0 %v4356
    %v4453 = vpop.f32.mrb[0].mxu0
    %v4454 = vadd.f32 0.0, %v4453
    %v4455 = vpop.f32.mrb[0].mxu0
    %4456 = vmatprep.mubr.f32.mxu0 0.0
    %4457 = vmatmul.mubr.f32.gmra.mrb[0].mxu0 %v4359
    %v4458 = vpop.f32.mrb[0].mxu0
    %v4459 = vadd.f32 0.0, %v4458
    %v4460 = vpop.f32.mrb[0].mxu0
    %4461 = vmatprep.mubr.f32.mxu0 0.0
    %4462 = vmatmul.mubr.f32.gmra.mrb[0].mxu0 %v4362
    %v4463 = vpop.f32.mrb[0].mxu0
    %v4464 = vadd.f32 0.0, %v4463
    %v4465 = vpop.f32.mrb[0].mxu0
    %4466 = vmatprep.mubr.f32.mxu0 0.0
    %4467 = vmatmul.mubr.f32.gmra.mrb[0].mxu0 %v4365
    %v4468 = vpop.f32.mrb[0].mxu0
    %v4469 = vadd.f32 0.0, %v4468
    %v4470 = vpop.f32.mrb[0].mxu0
    %4471 = vdwg.mxu0
    %4480 = vrot.lane.b32.xlu0 %v4434, 96
    %v4481 = vpop.permute.xlu0 %4480
    %4482 = vrot.lane.b32.xlu0 %v4439, 96
    %v4483 = vpop.permute.xlu0 %4482
    %4484 = vrot.lane.b32.xlu0 %v4444, 96
    %v4485 = vpop.permute.xlu0 %4484
    %4486 = vrot.lane.b32.xlu0 %v4449, 96
    %v4487 = vpop.permute.xlu0 %4486
    %4488 = vrot.lane.b32.xlu0 %v4454, 96
    %v4489 = vpop.permute.xlu0 %4488
    %4490 = vrot.lane.b32.xlu0 %v4459, 96
    %v4491 = vpop.permute.xlu0 %4490
    %4492 = vrot.lane.b32.xlu0 %v4464, 96
    %v4493 = vpop.permute.xlu0 %4492
    %4494 = vrot.lane.b32.xlu0 %v4469, 96
    %v4495 = vpop.permute.xlu0 %4494
    %4504 = vst.msk [vmem:[#allocation3 + $0x40] sm:$0xff] %vm2607, %v4481
    %4505 = vst.msk [vmem:[#allocation3 + $0x48] sm:$0xff] %vm2607, %v4483
    %4506 = vst.msk [vmem:[#allocation3 + $0x50] sm:$0xff] %vm2607, %v4485
    %4507 = vst.msk [vmem:[#allocation3 + $0x58] sm:$0xff] %vm2607, %v4487
    %4508 = vst.msk [vmem:[#allocation3 + $0x60] sm:$0xff] %vm2607, %v4489
    %4509 = vst.msk [vmem:[#allocation3 + $0x68] sm:$0xff] %vm2607, %v4491
    %4510 = vst.msk [vmem:[#allocation3 + $0x70] sm:$0xff] %vm2607, %v4493
    %4511 = vst.msk [vmem:[#allocation3 + $0x78] sm:$0xff] %vm2607, %v4495
    %v4512 = vld [vmem:[#allocation3] sm:$0xff]
    %v4513 = vld [vmem:[#allocation3 + $0x8] sm:$0xff]
    %v4514 = vld [vmem:[#allocation3 + $0x10] sm:$0xff]
    %v4515 = vld [vmem:[#allocation3 + $0x18] sm:$0xff]
    %v4516 = vld [vmem:[#allocation3 + $0x20] sm:$0xff]
    %v4517 = vld [vmem:[#allocation3 + $0x28] sm:$0xff]
    %v4518 = vld [vmem:[#allocation3 + $0x30] sm:$0xff]
    %v4519 = vld [vmem:[#allocation3 + $0x38] sm:$0xff]
    %v4520 = vld [vmem:[#allocation3 + $0x40] sm:$0xff]
    %v4521 = vld [vmem:[#allocation3 + $0x48] sm:$0xff]
    %v4522 = vld [vmem:[#allocation3 + $0x50] sm:$0xff]
    %v4523 = vld [vmem:[#allocation3 + $0x58] sm:$0xff]
    %v4524 = vld [vmem:[#allocation3 + $0x60] sm:$0xff]
    %v4525 = vld [vmem:[#allocation3 + $0x68] sm:$0xff]
    %v4526 = vld [vmem:[#allocation3 + $0x70] sm:$0xff]
    %v4527 = vld [vmem:[#allocation3 + $0x78] sm:$0xff]
    %v4528 = vld [vmem:[%s5] sm:$0xff]
    %v4529 = vld [vmem:[%s5 + $0x8] sm:$0xff]
    %v4530 = vld [vmem:[%s5 + $0x10] sm:$0xff]
    %v4531 = vld [vmem:[%s5 + $0x18] sm:$0xff]
    %v4532 = vld [vmem:[%s5 + $0x20] sm:$0xff]
    %v4533 = vld [vmem:[%s5 + $0x28] sm:$0xff]
    %v4534 = vld [vmem:[%s5 + $0x30] sm:$0xff]
    %v4535 = vld [vmem:[%s5 + $0x38] sm:$0xff]
    %v4536 = vld [vmem:[%s5 + $0x40] sm:$0xff]
    %v4537 = vld [vmem:[%s5 + $0x48] sm:$0xff]
    %v4538 = vld [vmem:[%s5 + $0x50] sm:$0xff]
    %v4539 = vld [vmem:[%s5 + $0x58] sm:$0xff]
    %v4540 = vld [vmem:[%s5 + $0x60] sm:$0xff]
    %v4541 = vld [vmem:[%s5 + $0x68] sm:$0xff]
    %v4542 = vld [vmem:[%s5 + $0x70] sm:$0xff]
    %v4543 = vld [vmem:[%s5 + $0x78] sm:$0xff]
    %v4544 = vld [vmem:[%s6] sm:$0x1]
    %v4546 = vlaneseq
    %v4547 = vshrl.u32 %v4546, 7
    %v4548 = vsub.s32 0, %v4547
    %v4549 = vrot.slane %v4544, %v4548
    %4551 = vmatprep.subr.mxu0 0.0
    %4552 = vmatpush1.msra.mxu0 %v4528
    %4553 = vmatprep.subr.mxu0 0.0
    %4554 = vmatpush1.msra.mxu0 %v4529
    %4555 = vmatprep.subr.mxu0 0.0
    %4556 = vmatpush1.msra.mxu0 %v4530
    %4557 = vmatprep.subr.mxu0 0.0
    %4558 = vmatpush1.msra.mxu0 %v4531
    %4559 = vmatprep.subr.mxu0 0.0
    %4560 = vmatpush1.msra.mxu0 %v4532
    %4561 = vmatprep.subr.mxu0 0.0
    %4562 = vmatpush1.msra.mxu0 %v4533
    %4563 = vmatprep.subr.mxu0 0.0
    %4564 = vmatpush1.msra.mxu0 %v4534
    %4565 = vmatprep.subr.mxu0 0.0
    %4566 = vmatpush1.msra.mxu0 %v4535
    %4567 = vmatprep.subr.mxu0 0.0
    %4568 = vmatpush1.msra.mxu0 %v4536
    %4569 = vmatprep.subr.mxu0 0.0
    %4570 = vmatpush1.msra.mxu0 %v4537
    %4571 = vmatprep.subr.mxu0 0.0
    %4572 = vmatpush1.msra.mxu0 %v4538
    %4573 = vmatprep.subr.mxu0 0.0
    %4574 = vmatpush1.msra.mxu0 %v4539
    %4575 = vmatprep.subr.mxu0 0.0
    %4576 = vmatpush1.msra.mxu0 %v4540
    %4577 = vmatprep.subr.mxu0 0.0
    %4578 = vmatpush1.msra.mxu0 %v4541
    %4579 = vmatprep.subr.mxu0 0.0
    %4580 = vmatpush1.msra.mxu0 %v4542
    %4581 = vmatprep.subr.mxu0 0.0
    %4582 = vmatpush1.msra.mxu0 %v4543
    %4583 = vmatprep.subr.mxu0 0.0
    %4584 = vmatpush1.msra.mxu0 0.0
    %4585 = vmatprep.subr.mxu0 0.0
    %4586 = vmatpush1.msra.mxu0 0.0
    %4587 = vmatprep.subr.mxu0 0.0
    %4588 = vmatpush1.msra.mxu0 0.0
    %4589 = vmatprep.subr.mxu0 0.0
    %4590 = vmatpush1.msra.mxu0 0.0
    %4591 = vmatprep.subr.mxu0 0.0
    %4592 = vmatpush1.msra.mxu0 0.0
    %4593 = vmatprep.subr.mxu0 0.0
    %4594 = vmatpush1.msra.mxu0 0.0
    %4595 = vmatprep.subr.mxu0 0.0
    %4596 = vmatpush1.msra.mxu0 0.0
    %4597 = vmatprep.subr.mxu0 0.0
    %4598 = vmatpush1.msra.mxu0 0.0
    %4599 = vmatprep.subr.mxu0 0.0
    %4600 = vmatpush1.msra.mxu0 0.0
    %4601 = vmatprep.subr.mxu0 0.0
    %4602 = vmatpush1.msra.mxu0 0.0
    %4603 = vmatprep.subr.mxu0 0.0
    %4604 = vmatpush1.msra.mxu0 0.0
    %4605 = vmatprep.subr.mxu0 0.0
    %4606 = vmatpush1.msra.mxu0 0.0
    %4607 = vmatprep.subr.mxu0 0.0
    %4608 = vmatpush1.msra.mxu0 0.0
    %4609 = vmatprep.subr.mxu0 0.0
    %4610 = vmatpush1.msra.mxu0 0.0
    %4611 = vmatprep.subr.mxu0 0.0
    %4612 = vmatpush1.msra.mxu0 0.0
    %4613 = vmatprep.subr.mxu0 0.0
    %4614 = vmatpush1.msra.mxu0 0.0
    %4615 = vmatprep.mubr.f32.mxu0 0.0
    %4616 = vmatmul.mubr.f32.gmra.mrb[0].mxu0 %v4512
    %v4617 = vpop.f32.mrb[0].mxu0
    %v4618 = vadd.f32 %v4549, %v4617
    %v4619 = vpop.f32.mrb[0].mxu0
    %4620 = vmatprep.mubr.f32.mxu0 0.0
    %4621 = vmatmul.mubr.f32.gmra.mrb[0].mxu0 %v4513
    %v4622 = vpop.f32.mrb[0].mxu0
    %v4623 = vadd.f32 %v4549, %v4622
    %v4624 = vpop.f32.mrb[0].mxu0
    %4625 = vmatprep.mubr.f32.mxu0 0.0
    %4626 = vmatmul.mubr.f32.gmra.mrb[0].mxu0 %v4514
    %v4627 = vpop.f32.mrb[0].mxu0
    %v4628 = vadd.f32 %v4549, %v4627
    %v4629 = vpop.f32.mrb[0].mxu0
    %4630 = vmatprep.mubr.f32.mxu0 0.0
    %4631 = vmatmul.mubr.f32.gmra.mrb[0].mxu0 %v4515
    %v4632 = vpop.f32.mrb[0].mxu0
    %v4633 = vadd.f32 %v4549, %v4632
    %v4634 = vpop.f32.mrb[0].mxu0
    %4635 = vmatprep.mubr.f32.mxu0 0.0
    %4636 = vmatmul.mubr.f32.gmra.mrb[0].mxu0 %v4516
    %v4637 = vpop.f32.mrb[0].mxu0
    %v4638 = vadd.f32 %v4549, %v4637
    %v4639 = vpop.f32.mrb[0].mxu0
    %4640 = vmatprep.mubr.f32.mxu0 0.0
    %4641 = vmatmul.mubr.f32.gmra.mrb[0].mxu0 %v4517
    %v4642 = vpop.f32.mrb[0].mxu0
    %v4643 = vadd.f32 %v4549, %v4642
    %v4644 = vpop.f32.mrb[0].mxu0
    %4645 = vmatprep.mubr.f32.mxu0 0.0
    %4646 = vmatmul.mubr.f32.gmra.mrb[0].mxu0 %v4518
    %v4647 = vpop.f32.mrb[0].mxu0
    %v4648 = vadd.f32 %v4549, %v4647
    %v4649 = vpop.f32.mrb[0].mxu0
    %4650 = vmatprep.mubr.f32.mxu0 0.0
    %4651 = vmatmul.mubr.f32.gmra.mrb[0].mxu0 %v4519
    %v4652 = vpop.f32.mrb[0].mxu0
    %v4653 = vadd.f32 %v4549, %v4652
    %v4654 = vpop.f32.mrb[0].mxu0
    %4655 = vmatprep.mubr.f32.mxu0 0.0
    %4656 = vmatmul.mubr.f32.gmra.mrb[0].mxu0 %v4520
    %v4657 = vpop.f32.mrb[0].mxu0
    %v4658 = vadd.f32 %v4549, %v4657
    %v4659 = vpop.f32.mrb[0].mxu0
    %4660 = vmatprep.mubr.f32.mxu0 0.0
    %4661 = vmatmul.mubr.f32.gmra.mrb[0].mxu0 %v4521
    %v4662 = vpop.f32.mrb[0].mxu0
    %v4663 = vadd.f32 %v4549, %v4662
    %v4664 = vpop.f32.mrb[0].mxu0
    %4665 = vmatprep.mubr.f32.mxu0 0.0
    %4666 = vmatmul.mubr.f32.gmra.mrb[0].mxu0 %v4522
    %v4667 = vpop.f32.mrb[0].mxu0
    %v4668 = vadd.f32 %v4549, %v4667
    %v4669 = vpop.f32.mrb[0].mxu0
    %4670 = vmatprep.mubr.f32.mxu0 0.0
    %4671 = vmatmul.mubr.f32.gmra.mrb[0].mxu0 %v4523
    %v4672 = vpop.f32.mrb[0].mxu0
    %v4673 = vadd.f32 %v4549, %v4672
    %v4674 = vpop.f32.mrb[0].mxu0
    %4675 = vmatprep.mubr.f32.mxu0 0.0
    %4676 = vmatmul.mubr.f32.gmra.mrb[0].mxu0 %v4524
    %v4677 = vpop.f32.mrb[0].mxu0
    %v4678 = vadd.f32 %v4549, %v4677
    %v4679 = vpop.f32.mrb[0].mxu0
    %4680 = vmatprep.mubr.f32.mxu0 0.0
    %4681 = vmatmul.mubr.f32.gmra.mrb[0].mxu0 %v4525
    %v4682 = vpop.f32.mrb[0].mxu0
    %v4683 = vadd.f32 %v4549, %v4682
    %v4684 = vpop.f32.mrb[0].mxu0
    %4685 = vmatprep.mubr.f32.mxu0 0.0
    %4686 = vmatmul.mubr.f32.gmra.mrb[0].mxu0 %v4526
    %v4687 = vpop.f32.mrb[0].mxu0
    %v4688 = vadd.f32 %v4549, %v4687
    %v4689 = vpop.f32.mrb[0].mxu0
    %4690 = vmatprep.mubr.f32.mxu0 0.0
    %4691 = vmatmul.mubr.f32.gmra.mrb[0].mxu0 %v4527
    %v4692 = vpop.f32.mrb[0].mxu0
    %v4693 = vadd.f32 %v4549, %v4692
    %v4694 = vpop.f32.mrb[0].mxu0
    %4695 = vdwg.mxu0
    %v4696 = vadd.f32 %v57, %v4618
    %v4697 = vadd.f32 %v58, %v4623
    %v4698 = vadd.f32 %v59, %v4628
    %v4699 = vadd.f32 %v60, %v4633
    %v4700 = vadd.f32 %v61, %v4638
    %v4701 = vadd.f32 %v62, %v4643
    %v4702 = vadd.f32 %v63, %v4648
    %v4703 = vadd.f32 %v64, %v4653
    %v4704 = vadd.f32 %v65, %v4658
    %v4705 = vadd.f32 %v66, %v4663
    %v4706 = vadd.f32 %v67, %v4668
    %v4707 = vadd.f32 %v68, %v4673
    %v4708 = vadd.f32 %v69, %v4678
    %v4709 = vadd.f32 %v70, %v4683
    %v4710 = vadd.f32 %v71, %v4688
    %v4711 = vadd.f32 %v72, %v4693
    %v4712 = vld [vmem:[%s7] sm:$0x1]
    %v4713 = vld [vmem:[%s8] sm:$0x1]
    %4714 = vadd.xlane.f32.xlu0 %v4696
    %v4715 = vpop.xlane.xlu0 %4714
    %4716 = vadd.xlane.f32.xlu0 %v4697
    %v4717 = vpop.xlane.xlu0 %4716
    %4718 = vadd.xlane.f32.xlu0 %v4698
    %v4719 = vpop.xlane.xlu0 %4718
    %4720 = vadd.xlane.f32.xlu0 %v4699
    %v4721 = vpop.xlane.xlu0 %4720
    %4722 = vadd.xlane.f32.xlu0 %v4700
    %v4723 = vpop.xlane.xlu0 %4722
    %4724 = vadd.xlane.f32.xlu0 %v4701
    %v4725 = vpop.xlane.xlu0 %4724
    %4726 = vadd.xlane.f32.xlu0 %v4702
    %v4727 = vpop.xlane.xlu0 %4726
    %4728 = vadd.xlane.f32.xlu0 %v4703
    %v4729 = vpop.xlane.xlu0 %4728
    %4730 = vadd.xlane.f32.xlu0 %v4704
    %v4731 = vpop.xlane.xlu0 %4730
    %4732 = vadd.xlane.f32.xlu0 %v4705
    %v4733 = vpop.xlane.xlu0 %4732
    %4734 = vadd.xlane.f32.xlu0 %v4706
    %v4735 = vpop.xlane.xlu0 %4734
    %4736 = vadd.xlane.f32.xlu0 %v4707
    %v4737 = vpop.xlane.xlu0 %4736
    %4738 = vadd.xlane.f32.xlu0 %v4708
    %v4739 = vpop.xlane.xlu0 %4738
    %4740 = vadd.xlane.f32.xlu0 %v4709
    %v4741 = vpop.xlane.xlu0 %4740
    %4742 = vadd.xlane.f32.xlu0 %v4710
    %v4743 = vpop.xlane.xlu0 %4742
    %4744 = vadd.xlane.f32.xlu0 %v4711
    %v4745 = vpop.xlane.xlu0 %4744
    %v4746 = vmul.f32 %v4715, %v107
    %v4747 = vmul.f32 %v4717, %v107
    %v4748 = vmul.f32 %v4719, %v107
    %v4749 = vmul.f32 %v4721, %v107
    %v4750 = vmul.f32 %v4723, %v107
    %v4751 = vmul.f32 %v4725, %v107
    %v4752 = vmul.f32 %v4727, %v107
    %v4753 = vmul.f32 %v4729, %v107
    %v4754 = vmul.f32 %v4731, %v107
    %v4755 = vmul.f32 %v4733, %v107
    %v4756 = vmul.f32 %v4735, %v107
    %v4757 = vmul.f32 %v4737, %v107
    %v4758 = vmul.f32 %v4739, %v107
    %v4759 = vmul.f32 %v4741, %v107
    %v4760 = vmul.f32 %v4743, %v107
    %v4761 = vmul.f32 %v4745, %v107
    %v4762 = vsub.f32 %v4696, %v4746
    %v4763 = vsub.f32 %v4697, %v4747
    %v4764 = vsub.f32 %v4698, %v4748
    %v4765 = vsub.f32 %v4699, %v4749
    %v4766 = vsub.f32 %v4700, %v4750
    %v4767 = vsub.f32 %v4701, %v4751
    %v4768 = vsub.f32 %v4702, %v4752
    %v4769 = vsub.f32 %v4703, %v4753
    %v4770 = vsub.f32 %v4704, %v4754
    %v4771 = vsub.f32 %v4705, %v4755
    %v4772 = vsub.f32 %v4706, %v4756
    %v4773 = vsub.f32 %v4707, %v4757
    %v4774 = vsub.f32 %v4708, %v4758
    %v4775 = vsub.f32 %v4709, %v4759
    %v4776 = vsub.f32 %v4710, %v4760
    %v4777 = vsub.f32 %v4711, %v4761
    %v4778 = vmul.f32 %v4762, %v4762
    %v4779 = vmul.f32 %v4763, %v4763
    %v4780 = vmul.f32 %v4764, %v4764
    %v4781 = vmul.f32 %v4765, %v4765
    %v4782 = vmul.f32 %v4766, %v4766
    %v4783 = vmul.f32 %v4767, %v4767
    %v4784 = vmul.f32 %v4768, %v4768
    %v4785 = vmul.f32 %v4769, %v4769
    %v4786 = vmul.f32 %v4770, %v4770
    %v4787 = vmul.f32 %v4771, %v4771
    %v4788 = vmul.f32 %v4772, %v4772
    %v4789 = vmul.f32 %v4773, %v4773
    %v4790 = vmul.f32 %v4774, %v4774
    %v4791 = vmul.f32 %v4775, %v4775
    %v4792 = vmul.f32 %v4776, %v4776
    %v4793 = vmul.f32 %v4777, %v4777
    %4794 = vadd.xlane.f32.xlu0 %v4778
    %v4795 = vpop.xlane.xlu0 %4794
    %4796 = vadd.xlane.f32.xlu0 %v4779
    %v4797 = vpop.xlane.xlu0 %4796
    %4798 = vadd.xlane.f32.xlu0 %v4780
    %v4799 = vpop.xlane.xlu0 %4798
    %4800 = vadd.xlane.f32.xlu0 %v4781
    %v4801 = vpop.xlane.xlu0 %4800
    %4802 = vadd.xlane.f32.xlu0 %v4782
    %v4803 = vpop.xlane.xlu0 %4802
    %4804 = vadd.xlane.f32.xlu0 %v4783
    %v4805 = vpop.xlane.xlu0 %4804
    %4806 = vadd.xlane.f32.xlu0 %v4784
    %v4807 = vpop.xlane.xlu0 %4806
    %4808 = vadd.xlane.f32.xlu0 %v4785
    %v4809 = vpop.xlane.xlu0 %4808
    %4810 = vadd.xlane.f32.xlu0 %v4786
    %v4811 = vpop.xlane.xlu0 %4810
    %4812 = vadd.xlane.f32.xlu0 %v4787
    %v4813 = vpop.xlane.xlu0 %4812
    %4814 = vadd.xlane.f32.xlu0 %v4788
    %v4815 = vpop.xlane.xlu0 %4814
    %4816 = vadd.xlane.f32.xlu0 %v4789
    %v4817 = vpop.xlane.xlu0 %4816
    %4818 = vadd.xlane.f32.xlu0 %v4790
    %v4819 = vpop.xlane.xlu0 %4818
    %4820 = vadd.xlane.f32.xlu0 %v4791
    %v4821 = vpop.xlane.xlu0 %4820
    %4822 = vadd.xlane.f32.xlu0 %v4792
    %v4823 = vpop.xlane.xlu0 %4822
    %4824 = vadd.xlane.f32.xlu0 %v4793
    %v4825 = vpop.xlane.xlu0 %4824
    %v4826 = vmul.f32 %v4795, %v107
    %v4827 = vmul.f32 %v4797, %v107
    %v4828 = vmul.f32 %v4799, %v107
    %v4829 = vmul.f32 %v4801, %v107
    %v4830 = vmul.f32 %v4803, %v107
    %v4831 = vmul.f32 %v4805, %v107
    %v4832 = vmul.f32 %v4807, %v107
    %v4833 = vmul.f32 %v4809, %v107
    %v4834 = vmul.f32 %v4811, %v107
    %v4835 = vmul.f32 %v4813, %v107
    %v4836 = vmul.f32 %v4815, %v107
    %v4837 = vmul.f32 %v4817, %v107
    %v4838 = vmul.f32 %v4819, %v107
    %v4839 = vmul.f32 %v4821, %v107
    %v4840 = vmul.f32 %v4823, %v107
    %v4841 = vmul.f32 %v4825, %v107
    %v4842 = vadd.f32 %v4826, 1e-06
    %v4843 = vadd.f32 %v4827, 1e-06
    %v4844 = vadd.f32 %v4828, 1e-06
    %v4845 = vadd.f32 %v4829, 1e-06
    %v4846 = vadd.f32 %v4830, 1e-06
    %v4847 = vadd.f32 %v4831, 1e-06
    %v4848 = vadd.f32 %v4832, 1e-06
    %v4849 = vadd.f32 %v4833, 1e-06
    %v4850 = vadd.f32 %v4834, 1e-06
    %v4851 = vadd.f32 %v4835, 1e-06
    %v4852 = vadd.f32 %v4836, 1e-06
    %v4853 = vadd.f32 %v4837, 1e-06
    %v4854 = vadd.f32 %v4838, 1e-06
    %v4855 = vadd.f32 %v4839, 1e-06
    %v4856 = vadd.f32 %v4840, 1e-06
    %v4857 = vadd.f32 %v4841, 1e-06
    %v4858 = vrsqrt.pop %v4842
    %v4859 = vrsqrt.pop %v4843
    %v4860 = vrsqrt.pop %v4844
    %v4861 = vrsqrt.pop %v4845
    %v4862 = vrsqrt.pop %v4846
    %v4863 = vrsqrt.pop %v4847
    %v4864 = vrsqrt.pop %v4848
    %v4865 = vrsqrt.pop %v4849
    %v4866 = vrsqrt.pop %v4850
    %v4867 = vrsqrt.pop %v4851
    %v4868 = vrsqrt.pop %v4852
    %v4869 = vrsqrt.pop %v4853
    %v4870 = vrsqrt.pop %v4854
    %v4871 = vrsqrt.pop %v4855
    %v4872 = vrsqrt.pop %v4856
    %v4873 = vrsqrt.pop %v4857
    %v4874 = vmul.f32 %v4762, %v4858
    %v4875 = vmul.f32 %v4763, %v4859
    %v4876 = vmul.f32 %v4764, %v4860
    %v4877 = vmul.f32 %v4765, %v4861
    %v4878 = vmul.f32 %v4766, %v4862
    %v4879 = vmul.f32 %v4767, %v4863
    %v4880 = vmul.f32 %v4768, %v4864
    %v4881 = vmul.f32 %v4769, %v4865
    %v4882 = vmul.f32 %v4770, %v4866
    %v4883 = vmul.f32 %v4771, %v4867
    %v4884 = vmul.f32 %v4772, %v4868
    %v4885 = vmul.f32 %v4773, %v4869
    %v4886 = vmul.f32 %v4774, %v4870
    %v4887 = vmul.f32 %v4775, %v4871
    %v4888 = vmul.f32 %v4776, %v4872
    %v4889 = vmul.f32 %v4777, %v4873
    %v4891 = vlaneseq
    %v4892 = vshrl.u32 %v4891, 7
    %v4893 = vsub.s32 0, %v4892
    %v4894 = vrot.slane %v4712, %v4893
    %v4896 = vmul.f32 %v4874, %v4894
    %v4897 = vmul.f32 %v4875, %v4894
    %v4898 = vmul.f32 %v4876, %v4894
    %v4899 = vmul.f32 %v4877, %v4894
    %v4900 = vmul.f32 %v4878, %v4894
    %v4901 = vmul.f32 %v4879, %v4894
    %v4902 = vmul.f32 %v4880, %v4894
    %v4903 = vmul.f32 %v4881, %v4894
    %v4904 = vmul.f32 %v4882, %v4894
    %v4905 = vmul.f32 %v4883, %v4894
    %v4906 = vmul.f32 %v4884, %v4894
    %v4907 = vmul.f32 %v4885, %v4894
    %v4908 = vmul.f32 %v4886, %v4894
    %v4909 = vmul.f32 %v4887, %v4894
    %v4910 = vmul.f32 %v4888, %v4894
    %v4911 = vmul.f32 %v4889, %v4894
    %v4913 = vlaneseq
    %v4914 = vshrl.u32 %v4913, 7
    %v4915 = vsub.s32 0, %v4914
    %v4916 = vrot.slane %v4713, %v4915
    %v4918 = vadd.f32 %v4896, %v4916
    %v4919 = vadd.f32 %v4897, %v4916
    %v4920 = vadd.f32 %v4898, %v4916
    %v4921 = vadd.f32 %v4899, %v4916
    %v4922 = vadd.f32 %v4900, %v4916
    %v4923 = vadd.f32 %v4901, %v4916
    %v4924 = vadd.f32 %v4902, %v4916
    %v4925 = vadd.f32 %v4903, %v4916
    %v4926 = vadd.f32 %v4904, %v4916
    %v4927 = vadd.f32 %v4905, %v4916
    %v4928 = vadd.f32 %v4906, %v4916
    %v4929 = vadd.f32 %v4907, %v4916
    %v4930 = vadd.f32 %v4908, %v4916
    %v4931 = vadd.f32 %v4909, %v4916
    %v4932 = vadd.f32 %v4910, %v4916
    %v4933 = vadd.f32 %v4911, %v4916
    %v4934 = vld [vmem:[%s9] sm:$0xff]
    %v4935 = vld [vmem:[%s9 + $0x8] sm:$0xff]
    %v4936 = vld [vmem:[%s9 + $0x10] sm:$0xff]
    %v4937 = vld [vmem:[%s9 + $0x18] sm:$0xff]
    %v4938 = vld [vmem:[%s9 + $0x20] sm:$0xff]
    %v4939 = vld [vmem:[%s9 + $0x28] sm:$0xff]
    %v4940 = vld [vmem:[%s9 + $0x30] sm:$0xff]
    %v4941 = vld [vmem:[%s9 + $0x38] sm:$0xff]
    %v4942 = vld [vmem:[%s9 + $0x40] sm:$0xff]
    %v4943 = vld [vmem:[%s9 + $0x48] sm:$0xff]
    %v4944 = vld [vmem:[%s9 + $0x50] sm:$0xff]
    %v4945 = vld [vmem:[%s9 + $0x58] sm:$0xff]
    %v4946 = vld [vmem:[%s9 + $0x60] sm:$0xff]
    %v4947 = vld [vmem:[%s9 + $0x68] sm:$0xff]
    %v4948 = vld [vmem:[%s9 + $0x70] sm:$0xff]
    %v4949 = vld [vmem:[%s9 + $0x78] sm:$0xff]
    %v4950 = vld [vmem:[%s9 + $0x80] sm:$0xff]
    %v4951 = vld [vmem:[%s9 + $0x88] sm:$0xff]
    %v4952 = vld [vmem:[%s9 + $0x90] sm:$0xff]
    %v4953 = vld [vmem:[%s9 + $0x98] sm:$0xff]
    %v4954 = vld [vmem:[%s9 + $0xa0] sm:$0xff]
    %v4955 = vld [vmem:[%s9 + $0xa8] sm:$0xff]
    %v4956 = vld [vmem:[%s9 + $0xb0] sm:$0xff]
    %v4957 = vld [vmem:[%s9 + $0xb8] sm:$0xff]
    %v4958 = vld [vmem:[%s9 + $0xc0] sm:$0xff]
    %v4959 = vld [vmem:[%s9 + $0xc8] sm:$0xff]
    %v4960 = vld [vmem:[%s9 + $0xd0] sm:$0xff]
    %v4961 = vld [vmem:[%s9 + $0xd8] sm:$0xff]
    %v4962 = vld [vmem:[%s9 + $0xe0] sm:$0xff]
    %v4963 = vld [vmem:[%s9 + $0xe8] sm:$0xff]
    %v4964 = vld [vmem:[%s9 + $0xf0] sm:$0xff]
    %v4965 = vld [vmem:[%s9 + $0xf8] sm:$0xff]
    %v4966 = vld [vmem:[%s10] sm:$0x3]
    %v4968 = vlaneseq
    %v4969 = vshrl.u32 %v4968, 7
    %v4970 = vsub.s32 0, %v4969
    %v4971 = vrot.slane %v4966, %v4970
    %v4972 = vlaneseq
    %v4973 = vshrl.u32 %v4972, 7
    %v4974 = vsub.s32 1, %v4973
    %v4975 = vrot.slane %v4966, %v4974
    %4978 = vmatprep.subr.mxu0 %v4935
    %4979 = vmatpush1.msra.mxu0 %v4934
    %4980 = vmatprep.subr.mxu0 %v4937
    %4981 = vmatpush1.msra.mxu0 %v4936
    %4982 = vmatprep.subr.mxu0 %v4939
    %4983 = vmatpush1.msra.mxu0 %v4938
    %4984 = vmatprep.subr.mxu0 %v4941
    %4985 = vmatpush1.msra.mxu0 %v4940
    %4986 = vmatprep.subr.mxu0 %v4943
    %4987 = vmatpush1.msra.mxu0 %v4942
    %4988 = vmatprep.subr.mxu0 %v4945
    %4989 = vmatpush1.msra.mxu0 %v4944
    %4990 = vmatprep.subr.mxu0 %v4947
    %4991 = vmatpush1.msra.mxu0 %v4946
    %4992 = vmatprep.subr.mxu0 %v4949
    %4993 = vmatpush1.msra.mxu0 %v4948
    %4994 = vmatprep.subr.mxu0 %v4951
    %4995 = vmatpush1.msra.mxu0 %v4950
    %4996 = vmatprep.subr.mxu0 %v4953
    %4997 = vmatpush1.msra.mxu0 %v4952
    %4998 = vmatprep.subr.mxu0 %v4955
    %4999 = vmatpush1.msra.mxu0 %v4954
    %5000 = vmatprep.subr.mxu0 %v4957
    %5001 = vmatpush1.msra.mxu0 %v4956
    %5002 = vmatprep.subr.mxu0 %v4959
    %5003 = vmatpush1.msra.mxu0 %v4958
    %5004 = vmatprep.subr.mxu0 %v4961
    %5005 = vmatpush1.msra.mxu0 %v4960
    %5006 = vmatprep.subr.mxu0 %v4963
    %5007 = vmatpush1.msra.mxu0 %v4962
    %5008 = vmatprep.subr.mxu0 %v4965
    %5009 = vmatpush1.msra.mxu0 %v4964
    %5010 = vmatprep.subr.mxu0 0.0
    %5011 = vmatpush1.msra.mxu0 0.0
    %5012 = vmatprep.subr.mxu0 0.0
    %5013 = vmatpush1.msra.mxu0 0.0
    %5014 = vmatprep.subr.mxu0 0.0
    %5015 = vmatpush1.msra.mxu0 0.0
    %5016 = vmatprep.subr.mxu0 0.0
    %5017 = vmatpush1.msra.mxu0 0.0
    %5018 = vmatprep.subr.mxu0 0.0
    %5019 = vmatpush1.msra.mxu0 0.0
    %5020 = vmatprep.subr.mxu0 0.0
    %5021 = vmatpush1.msra.mxu0 0.0
    %5022 = vmatprep.subr.mxu0 0.0
    %5023 = vmatpush1.msra.mxu0 0.0
    %5024 = vmatprep.subr.mxu0 0.0
    %5025 = vmatpush1.msra.mxu0 0.0
    %5026 = vmatprep.subr.mxu0 0.0
    %5027 = vmatpush1.msra.mxu0 0.0
    %5028 = vmatprep.subr.mxu0 0.0
    %5029 = vmatpush1.msra.mxu0 0.0
    %5030 = vmatprep.subr.mxu0 0.0
    %5031 = vmatpush1.msra.mxu0 0.0
    %5032 = vmatprep.subr.mxu0 0.0
    %5033 = vmatpush1.msra.mxu0 0.0
    %5034 = vmatprep.subr.mxu0 0.0
    %5035 = vmatpush1.msra.mxu0 0.0
    %5036 = vmatprep.subr.mxu0 0.0
    %5037 = vmatpush1.msra.mxu0 0.0
    %5038 = vmatprep.subr.mxu0 0.0
    %5039 = vmatpush1.msra.mxu0 0.0
    %5040 = vmatprep.subr.mxu0 0.0
    %5041 = vmatpush1.msra.mxu0 0.0
    %5042 = vmatprep.mubr.f32.mxu0 0.0
    %5043 = vmatmul.mubr.f32.gmra.mrb[0].mxu0 %v4918
    %v5044 = vpop.f32.mrb[0].mxu0
    %v5045 = vadd.f32 %v4971, %v5044
    %v5046 = vpop.f32.mrb[0].mxu0
    %v5047 = vadd.f32 %v4975, %v5046
    %5048 = vmatprep.mubr.f32.mxu0 0.0
    %5049 = vmatmul.mubr.f32.gmra.mrb[0].mxu0 %v4919
    %v5050 = vpop.f32.mrb[0].mxu0
    %v5051 = vadd.f32 %v4971, %v5050
    %v5052 = vpop.f32.mrb[0].mxu0
    %v5053 = vadd.f32 %v4975, %v5052
    %5054 = vmatprep.mubr.f32.mxu0 0.0
    %5055 = vmatmul.mubr.f32.gmra.mrb[0].mxu0 %v4920
    %v5056 = vpop.f32.mrb[0].mxu0
    %v5057 = vadd.f32 %v4971, %v5056
    %v5058 = vpop.f32.mrb[0].mxu0
    %v5059 = vadd.f32 %v4975, %v5058
    %5060 = vmatprep.mubr.f32.mxu0 0.0
    %5061 = vmatmul.mubr.f32.gmra.mrb[0].mxu0 %v4921
    %v5062 = vpop.f32.mrb[0].mxu0
    %v5063 = vadd.f32 %v4971, %v5062
    %v5064 = vpop.f32.mrb[0].mxu0
    %v5065 = vadd.f32 %v4975, %v5064
    %5066 = vmatprep.mubr.f32.mxu0 0.0
    %5067 = vmatmul.mubr.f32.gmra.mrb[0].mxu0 %v4922
    %v5068 = vpop.f32.mrb[0].mxu0
    %v5069 = vadd.f32 %v4971, %v5068
    %v5070 = vpop.f32.mrb[0].mxu0
    %v5071 = vadd.f32 %v4975, %v5070
    %5072 = vmatprep.mubr.f32.mxu0 0.0
    %5073 = vmatmul.mubr.f32.gmra.mrb[0].mxu0 %v4923
    %v5074 = vpop.f32.mrb[0].mxu0
    %v5075 = vadd.f32 %v4971, %v5074
    %v5076 = vpop.f32.mrb[0].mxu0
    %v5077 = vadd.f32 %v4975, %v5076
    %5078 = vmatprep.mubr.f32.mxu0 0.0
    %5079 = vmatmul.mubr.f32.gmra.mrb[0].mxu0 %v4924
    %v5080 = vpop.f32.mrb[0].mxu0
    %v5081 = vadd.f32 %v4971, %v5080
    %v5082 = vpop.f32.mrb[0].mxu0
    %v5083 = vadd.f32 %v4975, %v5082
    %5084 = vmatprep.mubr.f32.mxu0 0.0
    %5085 = vmatmul.mubr.f32.gmra.mrb[0].mxu0 %v4925
    %v5086 = vpop.f32.mrb[0].mxu0
    %v5087 = vadd.f32 %v4971, %v5086
    %v5088 = vpop.f32.mrb[0].mxu0
    %v5089 = vadd.f32 %v4975, %v5088
    %5090 = vmatprep.mubr.f32.mxu0 0.0
    %5091 = vmatmul.mubr.f32.gmra.mrb[0].mxu0 %v4926
    %v5092 = vpop.f32.mrb[0].mxu0
    %v5093 = vadd.f32 %v4971, %v5092
    %v5094 = vpop.f32.mrb[0].mxu0
    %v5095 = vadd.f32 %v4975, %v5094
    %5096 = vmatprep.mubr.f32.mxu0 0.0
    %5097 = vmatmul.mubr.f32.gmra.mrb[0].mxu0 %v4927
    %v5098 = vpop.f32.mrb[0].mxu0
    %v5099 = vadd.f32 %v4971, %v5098
    %v5100 = vpop.f32.mrb[0].mxu0
    %v5101 = vadd.f32 %v4975, %v5100
    %5102 = vmatprep.mubr.f32.mxu0 0.0
    %5103 = vmatmul.mubr.f32.gmra.mrb[0].mxu0 %v4928
    %v5104 = vpop.f32.mrb[0].mxu0
    %v5105 = vadd.f32 %v4971, %v5104
    %v5106 = vpop.f32.mrb[0].mxu0
    %v5107 = vadd.f32 %v4975, %v5106
    %5108 = vmatprep.mubr.f32.mxu0 0.0
    %5109 = vmatmul.mubr.f32.gmra.mrb[0].mxu0 %v4929
    %v5110 = vpop.f32.mrb[0].mxu0
    %v5111 = vadd.f32 %v4971, %v5110
    %v5112 = vpop.f32.mrb[0].mxu0
    %v5113 = vadd.f32 %v4975, %v5112
    %5114 = vmatprep.mubr.f32.mxu0 0.0
    %5115 = vmatmul.mubr.f32.gmra.mrb[0].mxu0 %v4930
    %v5116 = vpop.f32.mrb[0].mxu0
    %v5117 = vadd.f32 %v4971, %v5116
    %v5118 = vpop.f32.mrb[0].mxu0
    %v5119 = vadd.f32 %v4975, %v5118
    %5120 = vmatprep.mubr.f32.mxu0 0.0
    %5121 = vmatmul.mubr.f32.gmra.mrb[0].mxu0 %v4931
    %v5122 = vpop.f32.mrb[0].mxu0
    %v5123 = vadd.f32 %v4971, %v5122
    %v5124 = vpop.f32.mrb[0].mxu0
    %v5125 = vadd.f32 %v4975, %v5124
    %5126 = vmatprep.mubr.f32.mxu0 0.0
    %5127 = vmatmul.mubr.f32.gmra.mrb[0].mxu0 %v4932
    %v5128 = vpop.f32.mrb[0].mxu0
    %v5129 = vadd.f32 %v4971, %v5128
    %v5130 = vpop.f32.mrb[0].mxu0
    %v5131 = vadd.f32 %v4975, %v5130
    %5132 = vmatprep.mubr.f32.mxu0 0.0
    %5133 = vmatmul.mubr.f32.gmra.mrb[0].mxu0 %v4933
    %v5134 = vpop.f32.mrb[0].mxu0
    %v5135 = vadd.f32 %v4971, %v5134
    %v5136 = vpop.f32.mrb[0].mxu0
    %v5137 = vadd.f32 %v4975, %v5136
    %5138 = vdwg.mxu0
    %v5139 = vmul.f32 %v5045, 0.5
    %v5140 = vmul.f32 %v5047, 0.5
    %v5141 = vmul.f32 %v5051, 0.5
    %v5142 = vmul.f32 %v5053, 0.5
    %v5143 = vmul.f32 %v5057, 0.5
    %v5144 = vmul.f32 %v5059, 0.5
    %v5145 = vmul.f32 %v5063, 0.5
    %v5146 = vmul.f32 %v5065, 0.5
    %v5147 = vmul.f32 %v5069, 0.5
    %v5148 = vmul.f32 %v5071, 0.5
    %v5149 = vmul.f32 %v5075, 0.5
    %v5150 = vmul.f32 %v5077, 0.5
    %v5151 = vmul.f32 %v5081, 0.5
    %v5152 = vmul.f32 %v5083, 0.5
    %v5153 = vmul.f32 %v5087, 0.5
    %v5154 = vmul.f32 %v5089, 0.5
    %v5155 = vmul.f32 %v5093, 0.5
    %v5156 = vmul.f32 %v5095, 0.5
    %v5157 = vmul.f32 %v5099, 0.5
    %v5158 = vmul.f32 %v5101, 0.5
    %v5159 = vmul.f32 %v5105, 0.5
    %v5160 = vmul.f32 %v5107, 0.5
    %v5161 = vmul.f32 %v5111, 0.5
    %v5162 = vmul.f32 %v5113, 0.5
    %v5163 = vmul.f32 %v5117, 0.5
    %v5164 = vmul.f32 %v5119, 0.5
    %v5165 = vmul.f32 %v5123, 0.5
    %v5166 = vmul.f32 %v5125, 0.5
    %v5167 = vmul.f32 %v5129, 0.5
    %v5168 = vmul.f32 %v5131, 0.5
    %v5169 = vmul.f32 %v5135, 0.5
    %v5170 = vmul.f32 %v5137, 0.5
    %v5171 = vmul.f32 %v5045, 0.044715
    %v5172 = vmul.f32 %v5047, 0.044715
    %v5173 = vmul.f32 %v5051, 0.044715
    %v5174 = vmul.f32 %v5053, 0.044715
    %v5175 = vmul.f32 %v5057, 0.044715
    %v5176 = vmul.f32 %v5059, 0.044715
    %v5177 = vmul.f32 %v5063, 0.044715
    %v5178 = vmul.f32 %v5065, 0.044715
    %v5179 = vmul.f32 %v5069, 0.044715
    %v5180 = vmul.f32 %v5071, 0.044715
    %v5181 = vmul.f32 %v5075, 0.044715
    %v5182 = vmul.f32 %v5077, 0.044715
    %v5183 = vmul.f32 %v5081, 0.044715
    %v5184 = vmul.f32 %v5083, 0.044715
    %v5185 = vmul.f32 %v5087, 0.044715
    %v5186 = vmul.f32 %v5089, 0.044715
    %v5187 = vmul.f32 %v5093, 0.044715
    %v5188 = vmul.f32 %v5095, 0.044715
    %v5189 = vmul.f32 %v5099, 0.044715
    %v5190 = vmul.f32 %v5101, 0.044715
    %v5191 = vmul.f32 %v5105, 0.044715
    %v5192 = vmul.f32 %v5107, 0.044715
    %v5193 = vmul.f32 %v5111, 0.044715
    %v5194 = vmul.f32 %v5113, 0.044715
    %v5195 = vmul.f32 %v5117, 0.044715
    %v5196 = vmul.f32 %v5119, 0.044715
    %v5197 = vmul.f32 %v5123, 0.044715
    %v5198 = vmul.f32 %v5125, 0.044715
    %v5199 = vmul.f32 %v5129, 0.044715
    %v5200 = vmul.f32 %v5131, 0.044715
    %v5201 = vmul.f32 %v5135, 0.044715
    %v5202 = vmul.f32 %v5137, 0.044715
    %v5203 = vmul.f32 %v5171, %v5045
    %v5204 = vmul.f32 %v5172, %v5047
    %v5205 = vmul.f32 %v5173, %v5051
    %v5206 = vmul.f32 %v5174, %v5053
    %v5207 = vmul.f32 %v5175, %v5057
    %v5208 = vmul.f32 %v5176, %v5059
    %v5209 = vmul.f32 %v5177, %v5063
    %v5210 = vmul.f32 %v5178, %v5065
    %v5211 = vmul.f32 %v5179, %v5069
    %v5212 = vmul.f32 %v5180, %v5071
    %v5213 = vmul.f32 %v5181, %v5075
    %v5214 = vmul.f32 %v5182, %v5077
    %v5215 = vmul.f32 %v5183, %v5081
    %v5216 = vmul.f32 %v5184, %v5083
    %v5217 = vmul.f32 %v5185, %v5087
    %v5218 = vmul.f32 %v5186, %v5089
    %v5219 = vmul.f32 %v5187, %v5093
    %v5220 = vmul.f32 %v5188, %v5095
    %v5221 = vmul.f32 %v5189, %v5099
    %v5222 = vmul.f32 %v5190, %v5101
    %v5223 = vmul.f32 %v5191, %v5105
    %v5224 = vmul.f32 %v5192, %v5107
    %v5225 = vmul.f32 %v5193, %v5111
    %v5226 = vmul.f32 %v5194, %v5113
    %v5227 = vmul.f32 %v5195, %v5117
    %v5228 = vmul.f32 %v5196, %v5119
    %v5229 = vmul.f32 %v5197, %v5123
    %v5230 = vmul.f32 %v5198, %v5125
    %v5231 = vmul.f32 %v5199, %v5129
    %v5232 = vmul.f32 %v5200, %v5131
    %v5233 = vmul.f32 %v5201, %v5135
    %v5234 = vmul.f32 %v5202, %v5137
    %v5235 = vmul.f32 %v5203, %v5045
    %v5236 = vmul.f32 %v5204, %v5047
    %v5237 = vmul.f32 %v5205, %v5051
    %v5238 = vmul.f32 %v5206, %v5053
    %v5239 = vmul.f32 %v5207, %v5057
    %v5240 = vmul.f32 %v5208, %v5059
    %v5241 = vmul.f32 %v5209, %v5063
    %v5242 = vmul.f32 %v5210, %v5065
    %v5243 = vmul.f32 %v5211, %v5069
    %v5244 = vmul.f32 %v5212, %v5071
    %v5245 = vmul.f32 %v5213, %v5075
    %v5246 = vmul.f32 %v5214, %v5077
    %v5247 = vmul.f32 %v5215, %v5081
    %v5248 = vmul.f32 %v5216, %v5083
    %v5249 = vmul.f32 %v5217, %v5087
    %v5250 = vmul.f32 %v5218, %v5089
    %v5251 = vmul.f32 %v5219, %v5093
    %v5252 = vmul.f32 %v5220, %v5095
    %v5253 = vmul.f32 %v5221, %v5099
    %v5254 = vmul.f32 %v5222, %v5101
    %v5255 = vmul.f32 %v5223, %v5105
    %v5256 = vmul.f32 %v5224, %v5107
    %v5257 = vmul.f32 %v5225, %v5111
    %v5258 = vmul.f32 %v5226, %v5113
    %v5259 = vmul.f32 %v5227, %v5117
    %v5260 = vmul.f32 %v5228, %v5119
    %v5261 = vmul.f32 %v5229, %v5123
    %v5262 = vmul.f32 %v5230, %v5125
    %v5263 = vmul.f32 %v5231, %v5129
    %v5264 = vmul.f32 %v5232, %v5131
    %v5265 = vmul.f32 %v5233, %v5135
    %v5266 = vmul.f32 %v5234, %v5137
    %v5267 = vadd.f32 %v5045, %v5235
    %v5268 = vadd.f32 %v5047, %v5236
    %v5269 = vadd.f32 %v5051, %v5237
    %v5270 = vadd.f32 %v5053, %v5238
    %v5271 = vadd.f32 %v5057, %v5239
    %v5272 = vadd.f32 %v5059, %v5240
    %v5273 = vadd.f32 %v5063, %v5241
    %v5274 = vadd.f32 %v5065, %v5242
    %v5275 = vadd.f32 %v5069, %v5243
    %v5276 = vadd.f32 %v5071, %v5244
    %v5277 = vadd.f32 %v5075, %v5245
    %v5278 = vadd.f32 %v5077, %v5246
    %v5279 = vadd.f32 %v5081, %v5247
    %v5280 = vadd.f32 %v5083, %v5248
    %v5281 = vadd.f32 %v5087, %v5249
    %v5282 = vadd.f32 %v5089, %v5250
    %v5283 = vadd.f32 %v5093, %v5251
    %v5284 = vadd.f32 %v5095, %v5252
    %v5285 = vadd.f32 %v5099, %v5253
    %v5286 = vadd.f32 %v5101, %v5254
    %v5287 = vadd.f32 %v5105, %v5255
    %v5288 = vadd.f32 %v5107, %v5256
    %v5289 = vadd.f32 %v5111, %v5257
    %v5290 = vadd.f32 %v5113, %v5258
    %v5291 = vadd.f32 %v5117, %v5259
    %v5292 = vadd.f32 %v5119, %v5260
    %v5293 = vadd.f32 %v5123, %v5261
    %v5294 = vadd.f32 %v5125, %v5262
    %v5295 = vadd.f32 %v5129, %v5263
    %v5296 = vadd.f32 %v5131, %v5264
    %v5297 = vadd.f32 %v5135, %v5265
    %v5298 = vadd.f32 %v5137, %v5266
    %v5299 = vmul.f32 %v5267, 0.7978846
    %v5300 = vmul.f32 %v5268, 0.7978846
    %v5301 = vmul.f32 %v5269, 0.7978846
    %v5302 = vmul.f32 %v5270, 0.7978846
    %v5303 = vmul.f32 %v5271, 0.7978846
    %v5304 = vmul.f32 %v5272, 0.7978846
    %v5305 = vmul.f32 %v5273, 0.7978846
    %v5306 = vmul.f32 %v5274, 0.7978846
    %v5307 = vmul.f32 %v5275, 0.7978846
    %v5308 = vmul.f32 %v5276, 0.7978846
    %v5309 = vmul.f32 %v5277, 0.7978846
    %v5310 = vmul.f32 %v5278, 0.7978846
    %v5311 = vmul.f32 %v5279, 0.7978846
    %v5312 = vmul.f32 %v5280, 0.7978846
    %v5313 = vmul.f32 %v5281, 0.7978846
    %v5314 = vmul.f32 %v5282, 0.7978846
    %v5315 = vmul.f32 %v5283, 0.7978846
    %v5316 = vmul.f32 %v5284, 0.7978846
    %v5317 = vmul.f32 %v5285, 0.7978846
    %v5318 = vmul.f32 %v5286, 0.7978846
    %v5319 = vmul.f32 %v5287, 0.7978846
    %v5320 = vmul.f32 %v5288, 0.7978846
    %v5321 = vmul.f32 %v5289, 0.7978846
    %v5322 = vmul.f32 %v5290, 0.7978846
    %v5323 = vmul.f32 %v5291, 0.7978846
    %v5324 = vmul.f32 %v5292, 0.7978846
    %v5325 = vmul.f32 %v5293, 0.7978846
    %v5326 = vmul.f32 %v5294, 0.7978846
    %v5327 = vmul.f32 %v5295, 0.7978846
    %v5328 = vmul.f32 %v5296, 0.7978846
    %v5329 = vmul.f32 %v5297, 0.7978846
    %v5330 = vmul.f32 %v5298, 0.7978846
    %v5331 = vtanh.pop %v5299
    %v5332 = vtanh.pop %v5300
    %v5333 = vtanh.pop %v5301
    %v5334 = vtanh.pop %v5302
    %v5335 = vtanh.pop %v5303
    %v5336 = vtanh.pop %v5304
    %v5337 = vtanh.pop %v5305
    %v5338 = vtanh.pop %v5306
    %v5339 = vtanh.pop %v5307
    %v5340 = vtanh.pop %v5308
    %v5341 = vtanh.pop %v5309
    %v5342 = vtanh.pop %v5310
    %v5343 = vtanh.pop %v5311
    %v5344 = vtanh.pop %v5312
    %v5345 = vtanh.pop %v5313
    %v5346 = vtanh.pop %v5314
    %v5347 = vtanh.pop %v5315
    %v5348 = vtanh.pop %v5316
    %v5349 = vtanh.pop %v5317
    %v5350 = vtanh.pop %v5318
    %v5351 = vtanh.pop %v5319
    %v5352 = vtanh.pop %v5320
    %v5353 = vtanh.pop %v5321
    %v5354 = vtanh.pop %v5322
    %v5355 = vtanh.pop %v5323
    %v5356 = vtanh.pop %v5324
    %v5357 = vtanh.pop %v5325
    %v5358 = vtanh.pop %v5326
    %v5359 = vtanh.pop %v5327
    %v5360 = vtanh.pop %v5328
    %v5361 = vtanh.pop %v5329
    %v5362 = vtanh.pop %v5330
    %v5363 = vadd.f32 %v5331, 1.0
    %v5364 = vadd.f32 %v5332, 1.0
    %v5365 = vadd.f32 %v5333, 1.0
    %v5366 = vadd.f32 %v5334, 1.0
    %v5367 = vadd.f32 %v5335, 1.0
    %v5368 = vadd.f32 %v5336, 1.0
    %v5369 = vadd.f32 %v5337, 1.0
    %v5370 = vadd.f32 %v5338, 1.0
    %v5371 = vadd.f32 %v5339, 1.0
    %v5372 = vadd.f32 %v5340, 1.0
    %v5373 = vadd.f32 %v5341, 1.0
    %v5374 = vadd.f32 %v5342, 1.0
    %v5375 = vadd.f32 %v5343, 1.0
    %v5376 = vadd.f32 %v5344, 1.0
    %v5377 = vadd.f32 %v5345, 1.0
    %v5378 = vadd.f32 %v5346, 1.0
    %v5379 = vadd.f32 %v5347, 1.0
    %v5380 = vadd.f32 %v5348, 1.0
    %v5381 = vadd.f32 %v5349, 1.0
    %v5382 = vadd.f32 %v5350, 1.0
    %v5383 = vadd.f32 %v5351, 1.0
    %v5384 = vadd.f32 %v5352, 1.0
    %v5385 = vadd.f32 %v5353, 1.0
    %v5386 = vadd.f32 %v5354, 1.0
    %v5387 = vadd.f32 %v5355, 1.0
    %v5388 = vadd.f32 %v5356, 1.0
    %v5389 = vadd.f32 %v5357, 1.0
    %v5390 = vadd.f32 %v5358, 1.0
    %v5391 = vadd.f32 %v5359, 1.0
    %v5392 = vadd.f32 %v5360, 1.0
    %v5393 = vadd.f32 %v5361, 1.0
    %v5394 = vadd.f32 %v5362, 1.0
    %v5395 = vmul.f32 %v5139, %v5363
    %v5396 = vmul.f32 %v5140, %v5364
    %v5397 = vmul.f32 %v5141, %v5365
    %v5398 = vmul.f32 %v5142, %v5366
    %v5399 = vmul.f32 %v5143, %v5367
    %v5400 = vmul.f32 %v5144, %v5368
    %v5401 = vmul.f32 %v5145, %v5369
    %v5402 = vmul.f32 %v5146, %v5370
    %v5403 = vmul.f32 %v5147, %v5371
    %v5404 = vmul.f32 %v5148, %v5372
    %v5405 = vmul.f32 %v5149, %v5373
    %v5406 = vmul.f32 %v5150, %v5374
    %v5407 = vmul.f32 %v5151, %v5375
    %v5408 = vmul.f32 %v5152, %v5376
    %v5409 = vmul.f32 %v5153, %v5377
    %v5410 = vmul.f32 %v5154, %v5378
    %v5411 = vmul.f32 %v5155, %v5379
    %v5412 = vmul.f32 %v5156, %v5380
    %v5413 = vmul.f32 %v5157, %v5381
    %v5414 = vmul.f32 %v5158, %v5382
    %v5415 = vmul.f32 %v5159, %v5383
    %v5416 = vmul.f32 %v5160, %v5384
    %v5417 = vmul.f32 %v5161, %v5385
    %v5418 = vmul.f32 %v5162, %v5386
    %v5419 = vmul.f32 %v5163, %v5387
    %v5420 = vmul.f32 %v5164, %v5388
    %v5421 = vmul.f32 %v5165, %v5389
    %v5422 = vmul.f32 %v5166, %v5390
    %v5423 = vmul.f32 %v5167, %v5391
    %v5424 = vmul.f32 %v5168, %v5392
    %v5425 = vmul.f32 %v5169, %v5393
    %v5426 = vmul.f32 %v5170, %v5394
    %v5427 = vld [vmem:[%s11] sm:$0xff]
    %v5428 = vld [vmem:[%s11 + $0x8] sm:$0xff]
    %v5429 = vld [vmem:[%s11 + $0x10] sm:$0xff]
    %v5430 = vld [vmem:[%s11 + $0x18] sm:$0xff]
    %v5431 = vld [vmem:[%s11 + $0x20] sm:$0xff]
    %v5432 = vld [vmem:[%s11 + $0x28] sm:$0xff]
    %v5433 = vld [vmem:[%s11 + $0x30] sm:$0xff]
    %v5434 = vld [vmem:[%s11 + $0x38] sm:$0xff]
    %v5435 = vld [vmem:[%s11 + $0x40] sm:$0xff]
    %v5436 = vld [vmem:[%s11 + $0x48] sm:$0xff]
    %v5437 = vld [vmem:[%s11 + $0x50] sm:$0xff]
    %v5438 = vld [vmem:[%s11 + $0x58] sm:$0xff]
    %v5439 = vld [vmem:[%s11 + $0x60] sm:$0xff]
    %v5440 = vld [vmem:[%s11 + $0x68] sm:$0xff]
    %v5441 = vld [vmem:[%s11 + $0x70] sm:$0xff]
    %v5442 = vld [vmem:[%s11 + $0x78] sm:$0xff]
    %v5443 = vld [vmem:[%s11 + $0x80] sm:$0xff]
    %v5444 = vld [vmem:[%s11 + $0x88] sm:$0xff]
    %v5445 = vld [vmem:[%s11 + $0x90] sm:$0xff]
    %v5446 = vld [vmem:[%s11 + $0x98] sm:$0xff]
    %v5447 = vld [vmem:[%s11 + $0xa0] sm:$0xff]
    %v5448 = vld [vmem:[%s11 + $0xa8] sm:$0xff]
    %v5449 = vld [vmem:[%s11 + $0xb0] sm:$0xff]
    %v5450 = vld [vmem:[%s11 + $0xb8] sm:$0xff]
    %v5451 = vld [vmem:[%s11 + $0xc0] sm:$0xff]
    %v5452 = vld [vmem:[%s11 + $0xc8] sm:$0xff]
    %v5453 = vld [vmem:[%s11 + $0xd0] sm:$0xff]
    %v5454 = vld [vmem:[%s11 + $0xd8] sm:$0xff]
    %v5455 = vld [vmem:[%s11 + $0xe0] sm:$0xff]
    %v5456 = vld [vmem:[%s11 + $0xe8] sm:$0xff]
    %v5457 = vld [vmem:[%s11 + $0xf0] sm:$0xff]
    %v5458 = vld [vmem:[%s11 + $0xf8] sm:$0xff]
    %v5459 = vld [vmem:[#allocation4] sm:$0x1]
    %v5461 = vlaneseq
    %v5462 = vshrl.u32 %v5461, 7
    %v5463 = vsub.s32 0, %v5462
    %v5464 = vrot.slane %v5459, %v5463
    %5466 = vmatprep.subr.mxu0 0.0
    %5467 = vmatpush1.msra.mxu0 %v5427
    %5468 = vmatprep.subr.mxu0 0.0
    %5469 = vmatpush1.msra.mxu0 %v5428
    %5470 = vmatprep.subr.mxu0 0.0
    %5471 = vmatpush1.msra.mxu0 %v5429
    %5472 = vmatprep.subr.mxu0 0.0
    %5473 = vmatpush1.msra.mxu0 %v5430
    %5474 = vmatprep.subr.mxu0 0.0
    %5475 = vmatpush1.msra.mxu0 %v5431
    %5476 = vmatprep.subr.mxu0 0.0
    %5477 = vmatpush1.msra.mxu0 %v5432
    %5478 = vmatprep.subr.mxu0 0.0
    %5479 = vmatpush1.msra.mxu0 %v5433
    %5480 = vmatprep.subr.mxu0 0.0
    %5481 = vmatpush1.msra.mxu0 %v5434
    %5482 = vmatprep.subr.mxu0 0.0
    %5483 = vmatpush1.msra.mxu0 %v5435
    %5484 = vmatprep.subr.mxu0 0.0
    %5485 = vmatpush1.msra.mxu0 %v5436
    %5486 = vmatprep.subr.mxu0 0.0
    %5487 = vmatpush1.msra.mxu0 %v5437
    %5488 = vmatprep.subr.mxu0 0.0
    %5489 = vmatpush1.msra.mxu0 %v5438
    %5490 = vmatprep.subr.mxu0 0.0
    %5491 = vmatpush1.msra.mxu0 %v5439
    %5492 = vmatprep.subr.mxu0 0.0
    %5493 = vmatpush1.msra.mxu0 %v5440
    %5494 = vmatprep.subr.mxu0 0.0
    %5495 = vmatpush1.msra.mxu0 %v5441
    %5496 = vmatprep.subr.mxu0 0.0
    %5497 = vmatpush1.msra.mxu0 %v5442
    %5498 = vmatprep.subr.mxu0 0.0
    %5499 = vmatpush1.msra.mxu0 %v5443
    %5500 = vmatprep.subr.mxu0 0.0
    %5501 = vmatpush1.msra.mxu0 %v5444
    %5502 = vmatprep.subr.mxu0 0.0
    %5503 = vmatpush1.msra.mxu0 %v5445
    %5504 = vmatprep.subr.mxu0 0.0
    %5505 = vmatpush1.msra.mxu0 %v5446
    %5506 = vmatprep.subr.mxu0 0.0
    %5507 = vmatpush1.msra.mxu0 %v5447
    %5508 = vmatprep.subr.mxu0 0.0
    %5509 = vmatpush1.msra.mxu0 %v5448
    %5510 = vmatprep.subr.mxu0 0.0
    %5511 = vmatpush1.msra.mxu0 %v5449
    %5512 = vmatprep.subr.mxu0 0.0
    %5513 = vmatpush1.msra.mxu0 %v5450
    %5514 = vmatprep.subr.mxu0 0.0
    %5515 = vmatpush1.msra.mxu0 %v5451
    %5516 = vmatprep.subr.mxu0 0.0
    %5517 = vmatpush1.msra.mxu0 %v5452
    %5518 = vmatprep.subr.mxu0 0.0
    %5519 = vmatpush1.msra.mxu0 %v5453
    %5520 = vmatprep.subr.mxu0 0.0
    %5521 = vmatpush1.msra.mxu0 %v5454
    %5522 = vmatprep.subr.mxu0 0.0
    %5523 = vmatpush1.msra.mxu0 %v5455
    %5524 = vmatprep.subr.mxu0 0.0
    %5525 = vmatpush1.msra.mxu0 %v5456
    %5526 = vmatprep.subr.mxu0 0.0
    %5527 = vmatpush1.msra.mxu0 %v5457
    %5528 = vmatprep.subr.mxu0 0.0
    %5529 = vmatpush1.msra.mxu0 %v5458
    %5530 = vmatprep.mubr.f32.mxu0 %v5396
    %5531 = vmatmul.mubr.f32.gmra.mrb[0].mxu0 %v5395
    %v5532 = vpop.f32.mrb[0].mxu0
    %v5533 = vadd.f32 %v5464, %v5532
    %v5534 = vpop.f32.mrb[0].mxu0
    %5535 = vmatprep.mubr.f32.mxu0 %v5398
    %5536 = vmatmul.mubr.f32.gmra.mrb[0].mxu0 %v5397
    %v5537 = vpop.f32.mrb[0].mxu0
    %v5538 = vadd.f32 %v5464, %v5537
    %v5539 = vpop.f32.mrb[0].mxu0
    %5540 = vmatprep.mubr.f32.mxu0 %v5400
    %5541 = vmatmul.mubr.f32.gmra.mrb[0].mxu0 %v5399
    %v5542 = vpop.f32.mrb[0].mxu0
    %v5543 = vadd.f32 %v5464, %v5542
    %v5544 = vpop.f32.mrb[0].mxu0
    %5545 = vmatprep.mubr.f32.mxu0 %v5402
    %5546 = vmatmul.mubr.f32.gmra.mrb[0].mxu0 %v5401
    %v5547 = vpop.f32.mrb[0].mxu0
    %v5548 = vadd.f32 %v5464, %v5547
    %v5549 = vpop.f32.mrb[0].mxu0
    %5550 = vmatprep.mubr.f32.mxu0 %v5404
    %5551 = vmatmul.mubr.f32.gmra.mrb[0].mxu0 %v5403
    %v5552 = vpop.f32.mrb[0].mxu0
    %v5553 = vadd.f32 %v5464, %v5552
    %v5554 = vpop.f32.mrb[0].mxu0
    %5555 = vmatprep.mubr.f32.mxu0 %v5406
    %5556 = vmatmul.mubr.f32.gmra.mrb[0].mxu0 %v5405
    %v5557 = vpop.f32.mrb[0].mxu0
    %v5558 = vadd.f32 %v5464, %v5557
    %v5559 = vpop.f32.mrb[0].mxu0
    %5560 = vmatprep.mubr.f32.mxu0 %v5408
    %5561 = vmatmul.mubr.f32.gmra.mrb[0].mxu0 %v5407
    %v5562 = vpop.f32.mrb[0].mxu0
    %v5563 = vadd.f32 %v5464, %v5562
    %v5564 = vpop.f32.mrb[0].mxu0
    %5565 = vmatprep.mubr.f32.mxu0 %v5410
    %5566 = vmatmul.mubr.f32.gmra.mrb[0].mxu0 %v5409
    %v5567 = vpop.f32.mrb[0].mxu0
    %v5568 = vadd.f32 %v5464, %v5567
    %v5569 = vpop.f32.mrb[0].mxu0
    %5570 = vmatprep.mubr.f32.mxu0 %v5412
    %5571 = vmatmul.mubr.f32.gmra.mrb[0].mxu0 %v5411
    %v5572 = vpop.f32.mrb[0].mxu0
    %v5573 = vadd.f32 %v5464, %v5572
    %v5574 = vpop.f32.mrb[0].mxu0
    %5575 = vmatprep.mubr.f32.mxu0 %v5414
    %5576 = vmatmul.mubr.f32.gmra.mrb[0].mxu0 %v5413
    %v5577 = vpop.f32.mrb[0].mxu0
    %v5578 = vadd.f32 %v5464, %v5577
    %v5579 = vpop.f32.mrb[0].mxu0
    %5580 = vmatprep.mubr.f32.mxu0 %v5416
    %5581 = vmatmul.mubr.f32.gmra.mrb[0].mxu0 %v5415
    %v5582 = vpop.f32.mrb[0].mxu0
    %v5583 = vadd.f32 %v5464, %v5582
    %v5584 = vpop.f32.mrb[0].mxu0
    %5585 = vmatprep.mubr.f32.mxu0 %v5418
    %5586 = vmatmul.mubr.f32.gmra.mrb[0].mxu0 %v5417
    %v5587 = vpop.f32.mrb[0].mxu0
    %v5588 = vadd.f32 %v5464, %v5587
    %v5589 = vpop.f32.mrb[0].mxu0
    %5590 = vmatprep.mubr.f32.mxu0 %v5420
    %5591 = vmatmul.mubr.f32.gmra.mrb[0].mxu0 %v5419
    %v5592 = vpop.f32.mrb[0].mxu0
    %v5593 = vadd.f32 %v5464, %v5592
    %v5594 = vpop.f32.mrb[0].mxu0
    %5595 = vmatprep.mubr.f32.mxu0 %v5422
    %5596 = vmatmul.mubr.f32.gmra.mrb[0].mxu0 %v5421
    %v5597 = vpop.f32.mrb[0].mxu0
    %v5598 = vadd.f32 %v5464, %v5597
    %v5599 = vpop.f32.mrb[0].mxu0
    %5600 = vmatprep.mubr.f32.mxu0 %v5424
    %5601 = vmatmul.mubr.f32.gmra.mrb[0].mxu0 %v5423
    %v5602 = vpop.f32.mrb[0].mxu0
    %v5603 = vadd.f32 %v5464, %v5602
    %v5604 = vpop.f32.mrb[0].mxu0
    %5605 = vmatprep.mubr.f32.mxu0 %v5426
    %5606 = vmatmul.mubr.f32.gmra.mrb[0].mxu0 %v5425
    %v5607 = vpop.f32.mrb[0].mxu0
    %v5608 = vadd.f32 %v5464, %v5607
    %v5609 = vpop.f32.mrb[0].mxu0
    %5610 = vdwg.mxu0
    %v5611 = vadd.f32 %v4696, %v5533
    %v5612 = vadd.f32 %v4697, %v5538
    %v5613 = vadd.f32 %v4698, %v5543
    %v5614 = vadd.f32 %v4699, %v5548
    %v5615 = vadd.f32 %v4700, %v5553
    %v5616 = vadd.f32 %v4701, %v5558
    %v5617 = vadd.f32 %v4702, %v5563
    %v5618 = vadd.f32 %v4703, %v5568
    %v5619 = vadd.f32 %v4704, %v5573
    %v5620 = vadd.f32 %v4705, %v5578
    %v5621 = vadd.f32 %v4706, %v5583
    %v5622 = vadd.f32 %v4707, %v5588
    %v5623 = vadd.f32 %v4708, %v5593
    %v5624 = vadd.f32 %v4709, %v5598
    %v5625 = vadd.f32 %v4710, %v5603
    %v5626 = vadd.f32 %v4711, %v5608
    %5627 = vst [vmem:[#allocation7] sm:$0xff] %v5611
    %5628 = vst [vmem:[#allocation7 + $0x8] sm:$0xff] %v5612
    %5629 = vst [vmem:[#allocation7 + $0x10] sm:$0xff] %v5613
    %5630 = vst [vmem:[#allocation7 + $0x18] sm:$0xff] %v5614
    %5631 = vst [vmem:[#allocation7 + $0x20] sm:$0xff] %v5615
    %5632 = vst [vmem:[#allocation7 + $0x28] sm:$0xff] %v5616
    %5633 = vst [vmem:[#allocation7 + $0x30] sm:$0xff] %v5617
    %5634 = vst [vmem:[#allocation7 + $0x38] sm:$0xff] %v5618
    %5635 = vst [vmem:[#allocation7 + $0x40] sm:$0xff] %v5619
    %5636 = vst [vmem:[#allocation7 + $0x48] sm:$0xff] %v5620
    %5637 = vst [vmem:[#allocation7 + $0x50] sm:$0xff] %v5621
    %5638 = vst [vmem:[#allocation7 + $0x58] sm:$0xff] %v5622
    %5639 = vst [vmem:[#allocation7 + $0x60] sm:$0xff] %v5623
    %5640 = vst [vmem:[#allocation7 + $0x68] sm:$0xff] %v5624
    %5641 = vst [vmem:[#allocation7 + $0x70] sm:$0xff] %v5625
    %5642 = vst [vmem:[#allocation7 + $0x78] sm:$0xff] %v5626
    // Predicated region
    $region58: #{block_forward.1} parent=1 // pred_check
      _
    $region59: #{block_forward.1} parent=1 // pred_check_branch
      %5644 = sbr.rel (0) target = $region61
    $region60: #{block_forward.1} parent=1 // pred_region
      %s5646 = ssub.s32 2048, 2048
      %5647 = vsyncadd [#allocation6], %s5646
      %s5648 = sshll.u32 [#allocation7], 4
      %s5649 = int_to_ptr.vmem [resolvable:$true] %s5648
      %5654 = dma.vmem_to_hbm [thread:$0]  %s5649, 2048, %s13, [#allocation6], 128, 128, 8
    $region61: #{block_forward.1} parent=1 // pred_fallthru
      _
    // Predicated region
    $region62: #{block_forward.1} parent=1 // pred_check
      _
    $region63: #{block_forward.1} parent=1 // pred_check_branch
      %5656 = sbr.rel (0) target = $region65
    $region64: #{block_forward.1} parent=1 // pred_region
      %5657 = dma.done [#allocation6], 2048
    $region65: #{block_forward.1} parent=1 // pred_fallthru
      _
    %5658 = vsyncpa [#allocation5], 1
    %5659 = vsyncpa [#allocation6], 1

</llo_original>
